<compile_context>
chip_gen: v7x
topology: tpu7x:2x2x1
jax: 0.10.0
libtpu: 0.0.40
codegen_flags: <defaults>
</compile_context>

<pallas_src>
import functools

import jax
import jax.numpy as jnp
from jax import lax
from jax.experimental import pallas as pl
from jax.experimental.pallas import tpu as pltpu

EMB_DIM = 100       # embedding_dim (module default)
HIDDEN = 128        # CNN "hidden size" (fixed in module)
C_PAD = 128         # lane-padded per-tower feature width
Z_PAD = 2 * C_PAD   # lane-padded width of Z ("slab" layout: z_d | z_p)


def _rup(x, m):
    return ((x + m - 1) // m) * m


def _pad2(x, rows, cols):
    r, c = x.shape
    return jnp.pad(x, ((0, rows - r), (0, cols - c)))


# ----------------------------------------------------------------------------
# Fused kernel: CIE(diag) + CIE(proc) + concat + proj gather + attention + h.
# One grid point per sample; weights/tables are VMEM-resident across the grid.
# ----------------------------------------------------------------------------
def _fused_kernel(cd_ref, cp_ref, md_ref, cntd_ref, cntp_ref, tm_ref,
                  emb_d_ref, emb_p_ref, proj_ref,
                  w1_ref, b1_ref, w2_ref, b2_ref, w3_ref, b3_ref,
                  wl_ref, bl_ref,
                  a_ref, h_ref, *, T_pad, L_d_max, L_p_max, M_pad):
    b = pl.program_id(0)
    n_t = tm_ref[b, 0]          # true visit count for this sample (runtime)
    n_m = tm_ref[b, 1]          # true medicine count for this sample (runtime)

    # --- per-visit embedding gather + mean (direct SMEM-indexed row loads) ----
    def gathered_mean(codes_ref, cnt_ref, emb_ref, l_max):
        rows = []
        for t in range(T_pad):                       # static unroll (LLO visibility)
            cnt = cnt_ref[b, t]
            acc = jnp.zeros((1, emb_ref.shape[1]), jnp.float32)
            for l in range(l_max):                   # static unroll, runtime mask
                idx = codes_ref[b, t * l_max + l]    # 0-padded -> always in-bounds
                valid = (l < cnt).astype(jnp.float32)
                acc = acc + valid * emb_ref[pl.ds(idx, 1), :]
            inv = 1.0 / jnp.maximum(cnt, 1).astype(jnp.float32)
            rows.append(acc * inv)
        return jnp.concatenate(rows, axis=0)         # (T_pad, C_PAD) f32

    # --- ClinincalInformationExtraction tower (Conv1d k=1 stack == matmuls) ---
    # bf16 operands / f32 accumulation on the MXU; MaxPool1d(k=1) is identity.
    def tower(e, slab):
        x = jnp.tanh(jnp.dot(e.astype(jnp.bfloat16), w1_ref[slab],
                             preferred_element_type=jnp.float32) + b1_ref[slab])
        x = jnp.tanh(jnp.dot(x.astype(jnp.bfloat16), w2_ref[slab],
                             preferred_element_type=jnp.float32) + b2_ref[slab])
        x = jnp.tanh(jnp.dot(x.astype(jnp.bfloat16), w3_ref[slab],
                             preferred_element_type=jnp.float32) + b3_ref[slab])
        y = jnp.dot(x.astype(jnp.bfloat16), wl_ref[slab],
                    preferred_element_type=jnp.float32) + bl_ref[slab]
        return jax.nn.sigmoid(y)                     # (T_pad, C_PAD) f32

    z_d = tower(gathered_mean(cd_ref, cntd_ref, emb_d_ref, L_d_max), 0)
    z_p = tower(gathered_mean(cp_ref, cntp_ref, emb_p_ref, L_p_max), 1)
    Z = jnp.concatenate([z_d, z_p], axis=1)          # (T_pad, Z_PAD) slab layout

    # --- projection-matrix gather gW_g (direct row loads; padded rows zeroed) -
    g_rows = []
    for m in range(M_pad):
        idx = md_ref[b, m]
        valid = (m < n_m).astype(jnp.float32)
        g_rows.append(valid * proj_ref[pl.ds(idx, 1), :])
    G = jnp.concatenate(g_rows, axis=0)              # (M_pad, Z_PAD) f32, exact

    # --- a = log_softmax(Z @ gW_g.T, dim=1) over the true medicine columns ----
    logits = lax.dot_general(Z.astype(jnp.bfloat16), G.astype(jnp.bfloat16),
                             (((1,), (1,)), ((), ())),
                             preferred_element_type=jnp.float32)  # (T_pad, M_pad)
    col = lax.broadcasted_iota(jnp.int32, (T_pad, M_pad), 1)
    row = lax.broadcasted_iota(jnp.int32, (T_pad, M_pad), 0)
    logits = jnp.where(col < n_m, logits, -1e30)     # mask padded medicine cols
    mx = jnp.max(logits, axis=1, keepdims=True)
    s = logits - mx
    a = s - jnp.log(jnp.sum(jnp.exp(s), axis=1, keepdims=True))
    a_ref[0] = a

    # --- h = a.T @ Z + gW_g ; mask padded visit rows AND padded medicine cols -
    a_valid = jnp.where((row < n_t) & (col < n_m), a, 0.0)
    h = lax.dot_general(a_valid.astype(jnp.bfloat16), Z.astype(jnp.bfloat16),
                        (((0,), (0,)), ((), ())),
                        preferred_element_type=jnp.float32) + G
    h_ref[0] = h


# ----------------------------------------------------------------------------
# Parameters: natural (PyTorch-like) shapes, then a one-time pad / stack /
# bf16-cast step into lane-aligned, VMEM-resident kernel operands.
# ----------------------------------------------------------------------------
def init_params(key, vocab_diagnosis, vocab_procedure, vocab_medicine):
    def cie(k, vocab):
        ks = jax.random.split(k, 9)
        s = 0.05
        return {
            "emb": jax.random.normal(ks[0], (vocab, EMB_DIM), jnp.float32),
            "w1": s * jax.random.normal(ks[1], (EMB_DIM, HIDDEN), jnp.float32),
            "b1": s * jax.random.normal(ks[2], (1, HIDDEN), jnp.float32),
            "w2": s * jax.random.normal(ks[3], (HIDDEN, HIDDEN), jnp.float32),
            "b2": s * jax.random.normal(ks[4], (1, HIDDEN), jnp.float32),
            "w3": s * jax.random.normal(ks[5], (HIDDEN, HIDDEN), jnp.float32),
            "b3": s * jax.random.normal(ks[6], (1, HIDDEN), jnp.float32),
            "wl": s * jax.random.normal(ks[7], (HIDDEN, EMB_DIM), jnp.float32),
            "bl": s * jax.random.normal(ks[8], (1, EMB_DIM), jnp.float32),
        }
    k1, k2, k3 = jax.random.split(key, 3)
    return {
        "cie_d": cie(k1, vocab_diagnosis),
        "cie_p": cie(k2, vocab_procedure),
        "proj": 0.1 * jax.random.normal(k3, (vocab_medicine, 2 * EMB_DIM),
                                        jnp.float32),
    }


def prepare_params(params):
    d, p = params["cie_d"], params["cie_p"]
    vd, vp = d["emb"].shape[0], p["emb"].shape[0]
    vm = params["proj"].shape[0]
    Vd = _rup(max(vd, 8), 8)
    Vp = _rup(max(vp, 8), 8)
    Vm = _rup(max(vm, 8), 8)

    def stack2(name, rows, cols, dtype):
        return jnp.stack([_pad2(d[name], rows, cols),
                          _pad2(p[name], rows, cols)]).astype(dtype)

    # projection rows in "slab" layout matching Z = [z_d | z_p]; zero lanes
    # [100,128) / [228,256) keep Z's don't-care lanes out of the logits/h math.
    proj = params["proj"]
    proj_slab = jnp.zeros((Vm, Z_PAD), jnp.float32)
    proj_slab = proj_slab.at[:vm, :EMB_DIM].set(proj[:, :EMB_DIM])
    proj_slab = proj_slab.at[:vm, C_PAD:C_PAD + EMB_DIM].set(proj[:, EMB_DIM:])

    return {
        "emb_d": _pad2(d["emb"], Vd, C_PAD),        # exact f32 gather path
        "emb_p": _pad2(p["emb"], Vp, C_PAD),
        "proj": proj_slab,
        "W1": stack2("w1", C_PAD, HIDDEN, jnp.bfloat16),
        "B1": stack2("b1", 1, HIDDEN, jnp.float32),
        "W2": stack2("w2", HIDDEN, HIDDEN, jnp.bfloat16),
        "B2": stack2("b2", 1, HIDDEN, jnp.float32),
        "W3": stack2("w3", HIDDEN, HIDDEN, jnp.bfloat16),
        "B3": stack2("b3", 1, HIDDEN, jnp.float32),
        "WL": stack2("wl", HIDDEN, C_PAD, jnp.bfloat16),
        "BL": stack2("bl", 1, C_PAD, jnp.float32),
    }


def _resident_spec(x):
    n = x.ndim
    return pl.BlockSpec(x.shape, lambda *args: (0,) * n)   # DMA once, stay resident


# ----------------------------------------------------------------------------
# Batched forward pass (jit this).
# ----------------------------------------------------------------------------
def health_status_update_batch(prep, codes_d, codes_p, meds,
                               n_codes_d, n_codes_p, n_visits, n_meds):
    """codes_d:(B,T_max,L_d_max) codes_p:(B,T_max,L_p_max) meds:(B,M_max) int32,
    0-padded with VALID ids; n_codes_*:(B,T_max), n_visits/n_meds:(B,) true counts.
    Returns a:(B,T_max,M_max), h:(B,M_max,2*EMB_DIM); entries beyond the true
    per-sample counts are padding garbage and must be ignored by the caller."""
    B, T_max, L_d_max = codes_d.shape
    _, _, L_p_max = codes_p.shape
    _, M_max = meds.shape

    T_pad = _rup(max(T_max, 8), 8)
    M_pad = _rup(max(M_max, 8), 8)

    def flat_codes(c, l_max):
        c = jnp.pad(c.astype(jnp.int32), ((0, 0), (0, T_pad - T_max), (0, 0)))
        return c.reshape(B, T_pad * l_max)            # 2D SMEM-friendly layout

    cd = flat_codes(codes_d, L_d_max)
    cp = flat_codes(codes_p, L_p_max)
    md = jnp.pad(meds.astype(jnp.int32), ((0, 0), (0, M_pad - M_max)))
    cntd = jnp.pad(n_codes_d.astype(jnp.int32), ((0, 0), (0, T_pad - T_max)))
    cntp = jnp.pad(n_codes_p.astype(jnp.int32), ((0, 0), (0, T_pad - T_max)))
    tm = jnp.stack([n_visits.astype(jnp.int32), n_meds.astype(jnp.int32)], axis=1)

    kernel = functools.partial(_fused_kernel, T_pad=T_pad, L_d_max=L_d_max,
                               L_p_max=L_p_max, M_pad=M_pad)

    weight_keys = ("emb_d", "emb_p", "proj", "W1", "B1", "W2", "B2",
                   "W3", "B3", "WL", "BL")
    grid_spec = pltpu.PrefetchScalarGridSpec(
        num_scalar_prefetch=6,                         # cd, cp, md, cntd, cntp, tm
        grid=(B,),
        in_specs=[_resident_spec(prep[k]) for k in weight_keys],
        out_specs=(pl.BlockSpec((1, T_pad, M_pad), lambda i, *_: (i, 0, 0)),
                   pl.BlockSpec((1, M_pad, Z_PAD), lambda i, *_: (i, 0, 0))))

    a_pad, h_pad = pl.pallas_call(
        kernel,
        out_shape=(jax.ShapeDtypeStruct((B, T_pad, M_pad), jnp.float32),
                   jax.ShapeDtypeStruct((B, M_pad, Z_PAD), jnp.float32)),
        grid_spec=grid_spec,
        compiler_params=pltpu.CompilerParams(
            dimension_semantics=("parallel",)),        # v7x: samples split over TCs
    )(cd, cp, md, cntd, cntp, tm, *[prep[k] for k in weight_keys])

    a = a_pad[:, :T_max, :M_max]
    h = jnp.concatenate([h_pad[:, :M_max, :EMB_DIM],
                         h_pad[:, :M_max, C_PAD:C_PAD + EMB_DIM]], axis=2)
    return a, h


def health_status_update(prep, codes_diagnosis, codes_procedure,
                         predicted_medicines):
    """Single-sample convenience wrapper (same semantics as the PyTorch forward)."""
    T, L_d = codes_diagnosis.shape
    _, L_p = codes_procedure.shape
    M = predicted_medicines.shape[0]
    a, h = health_status_update_batch(
        prep, codes_diagnosis[None], codes_procedure[None],
        predicted_medicines[None],
        jnp.full((1, T), L_d, jnp.int32), jnp.full((1, T), L_p, jnp.int32),
        jnp.array([T], jnp.int32), jnp.array([M], jnp.int32))
    return a[0], h[0]


# ----------------------------------------------------------------------------
# Pure-JAX ragged reference (same math as the PyTorch module, one sample).
# ----------------------------------------------------------------------------
def _reference_forward(params, visit_codes_d, visit_codes_p, meds):
    def cie(p, visits):
        e = jnp.stack([p["emb"][jnp.asarray(v)].mean(axis=0) for v in visits])
        x = jnp.tanh(e @ p["w1"] + p["b1"])
        x = jnp.tanh(x @ p["w2"] + p["b2"])
        x = jnp.tanh(x @ p["w3"] + p["b3"])
        return jax.nn.sigmoid(x @ p["wl"] + p["bl"])
    Z = jnp.concatenate([cie(params["cie_d"], visit_codes_d),
                         cie(params["cie_p"], visit_codes_p)], axis=1)
    G = params["proj"][jnp.asarray(meds)]
    a = jax.nn.log_softmax(Z @ G.T, axis=1)
    h = a.T @ Z + G
    return a, h


if __name__ == "__main__":
    key = jax.random.PRNGKey(0)
    kp, kd, kpp, km = jax.random.split(key, 4)

    vocab_diagnosis, vocab_procedure, vocab_medicine = 50, 40, 30
    params = init_params(kp, vocab_diagnosis, vocab_procedure, vocab_medicine)
    prep = prepare_params(params)

    # Small ragged batch: per-sample visit / medicine counts, per-visit code counts.
    B, T_max, L_d_max, L_p_max, M_max = 3, 5, 4, 3, 6
    n_visits = [4, 2, 5]
    n_meds = [4, 2, 6]
    n_codes_d = [[3, 1, 4, 2, 0], [2, 3, 0, 0, 0], [1, 2, 3, 3, 2]]
    n_codes_p = [[2, 1, 3, 1, 0], [1, 2, 0, 0, 0], [2, 1, 2, 1, 1]]

    codes_d = jax.random.randint(kd, (B, T_max, L_d_max), 0, vocab_diagnosis,
                                 jnp.int32)
    codes_p = jax.random.randint(kpp, (B, T_max, L_p_max), 0, vocab_procedure,
                                 jnp.int32)
    meds = jax.random.randint(km, (B, M_max), 0, vocab_medicine, jnp.int32)

    fwd = jax.jit(health_status_update_batch)
    a, h = fwd(prep, codes_d, codes_p, meds,
               jnp.asarray(n_codes_d, jnp.int32), jnp.asarray(n_codes_p, jnp.int32),
               jnp.asarray(n_visits, jnp.int32), jnp.asarray(n_meds, jnp.int32))
    jax.block_until_ready((a, h))

    assert a.shape == (B, T_max, M_max) and a.dtype == jnp.float32
    assert h.shape == (B, M_max, 2 * EMB_DIM) and h.dtype == jnp.float32

    # Per-sample check against the pure-JAX ragged reference (bf16 MXU tolerance).
    for b in range(B):
        Tb, Mb = n_visits[b], n_meds[b]
        cdl = [codes_d[b, t, :n_codes_d[b][t]] for t in range(Tb)]
        cpl = [codes_p[b, t, :n_codes_p[b][t]] for t in range(Tb)]
        a_r, h_r = _reference_forward(params, cdl, cpl, meds[b, :Mb])
        a_b, h_b = a[b, :Tb, :Mb], h[b, :Mb, :]
        # log_softmax rows must exponentiate to probability distributions
        assert bool(jnp.allclose(jnp.exp(a_b).sum(axis=1), 1.0, atol=1e-3))
        assert bool(jnp.max(jnp.abs(a_b - a_r)) < 5e-2)
        assert bool(jnp.max(jnp.abs(h_b - h_r)) < 2e-1)

    print("KERNEL_OK")
</pallas_src>

<mosaic_0001>
module attributes {stable_mosaic.version = 11 : i64} {
  func.func @_fused_kernel(%arg0: i32, %arg1: memref<3x32xi32, #tpu.memory_space<smem>>, %arg2: memref<3x24xi32, #tpu.memory_space<smem>>, %arg3: memref<3x8xi32, #tpu.memory_space<smem>>, %arg4: memref<3x8xi32, #tpu.memory_space<smem>>, %arg5: memref<3x8xi32, #tpu.memory_space<smem>>, %arg6: memref<3x2xi32, #tpu.memory_space<smem>>, %arg7: memref<56x128xf32, #tpu.memory_space<vmem>>, %arg8: memref<40x128xf32, #tpu.memory_space<vmem>>, %arg9: memref<32x256xf32, #tpu.memory_space<vmem>>, %arg10: memref<2x128x128xbf16, #tpu.memory_space<vmem>>, %arg11: memref<2x1x128xf32, #tpu.memory_space<vmem>>, %arg12: memref<2x128x128xbf16, #tpu.memory_space<vmem>>, %arg13: memref<2x1x128xf32, #tpu.memory_space<vmem>>, %arg14: memref<2x128x128xbf16, #tpu.memory_space<vmem>>, %arg15: memref<2x1x128xf32, #tpu.memory_space<vmem>>, %arg16: memref<2x128x128xbf16, #tpu.memory_space<vmem>>, %arg17: memref<2x1x128xf32, #tpu.memory_space<vmem>>, %arg18: memref<1x8x8xf32, #tpu.memory_space<vmem>>, %arg19: memref<1x8x256xf32, #tpu.memory_space<vmem>>) attributes {dimension_semantics = [#tpu.dimension_semantics<parallel>], iteration_bounds = array<i64: 3>, scalar_prefetch = 6 : i64, scratch_operands = 0 : i64, tpu.core_type = #tpu.core_type<tc>, window_params = [{pipeline_mode = #tpu.pipeline_mode<synchronous>, transform_indices = @transform_0, window_bounds = array<i64: 56, 128>}, {pipeline_mode = #tpu.pipeline_mode<synchronous>, transform_indices = @transform_1, window_bounds = array<i64: 40, 128>}, {pipeline_mode = #tpu.pipeline_mode<synchronous>, transform_indices = @transform_2, window_bounds = array<i64: 32, 256>}, {pipeline_mode = #tpu.pipeline_mode<synchronous>, transform_indices = @transform_3, window_bounds = array<i64: 2, 128, 128>}, {pipeline_mode = #tpu.pipeline_mode<synchronous>, transform_indices = @transform_4, window_bounds = array<i64: 2, 1, 128>}, {pipeline_mode = #tpu.pipeline_mode<synchronous>, transform_indices = @transform_5, window_bounds = array<i64: 2, 128, 128>}, {pipeline_mode = #tpu.pipeline_mode<synchronous>, transform_indices = @transform_6, window_bounds = array<i64: 2, 1, 128>}, {pipeline_mode = #tpu.pipeline_mode<synchronous>, transform_indices = @transform_7, window_bounds = array<i64: 2, 128, 128>}, {pipeline_mode = #tpu.pipeline_mode<synchronous>, transform_indices = @transform_8, window_bounds = array<i64: 2, 1, 128>}, {pipeline_mode = #tpu.pipeline_mode<synchronous>, transform_indices = @transform_9, window_bounds = array<i64: 2, 128, 128>}, {pipeline_mode = #tpu.pipeline_mode<synchronous>, transform_indices = @transform_10, window_bounds = array<i64: 2, 1, 128>}, {transform_indices = @transform_11, window_bounds = array<i64: 1, 8, 8>}, {transform_indices = @transform_12, window_bounds = array<i64: 1, 8, 256>}]} {
    %0 = arith.index_cast %arg0 : i32 to index
    %c0 = arith.constant 0 : index
    %1 = memref.load %arg6[%0, %c0] : memref<3x2xi32, #tpu.memory_space<smem>>
    %2 = arith.index_cast %arg0 : i32 to index
    %c1 = arith.constant 1 : index
    %3 = memref.load %arg6[%2, %c1] : memref<3x2xi32, #tpu.memory_space<smem>>
    %4 = arith.index_cast %arg0 : i32 to index
    %c0_0 = arith.constant 0 : index
    %5 = memref.load %arg4[%4, %c0_0] : memref<3x8xi32, #tpu.memory_space<smem>>
    %cst = arith.constant 0.000000e+00 : f32
    %6 = vector.broadcast %cst : f32 to vector<1x128xf32>
    %7 = arith.index_cast %arg0 : i32 to index
    %c0_1 = arith.constant 0 : index
    %8 = memref.load %arg1[%7, %c0_1] : memref<3x32xi32, #tpu.memory_space<smem>>
    %c0_i32 = arith.constant 0 : i32
    %9 = arith.cmpi sgt, %5, %c0_i32 : i32
    %10 = arith.extui %9 : i1 to i32
    %11 = arith.sitofp %10 : i32 to f32
    %12 = arith.index_cast %8 : i32 to index
    %c0_2 = arith.constant 0 : index
    %13 = vector.load %arg7[%12, %c0_2] : memref<56x128xf32, #tpu.memory_space<vmem>>, vector<1x128xf32>
    %14 = vector.broadcast %11 : f32 to vector<1x128xf32>
    %15 = arith.mulf %14, %13 : vector<1x128xf32>
    %16 = arith.addf %6, %15 : vector<1x128xf32>
    %17 = arith.index_cast %arg0 : i32 to index
    %c1_3 = arith.constant 1 : index
    %18 = memref.load %arg1[%17, %c1_3] : memref<3x32xi32, #tpu.memory_space<smem>>
    %c1_i32 = arith.constant 1 : i32
    %19 = arith.cmpi sgt, %5, %c1_i32 : i32
    %20 = arith.extui %19 : i1 to i32
    %21 = arith.sitofp %20 : i32 to f32
    %22 = arith.index_cast %18 : i32 to index
    %c0_4 = arith.constant 0 : index
    %23 = vector.load %arg7[%22, %c0_4] : memref<56x128xf32, #tpu.memory_space<vmem>>, vector<1x128xf32>
    %24 = vector.broadcast %21 : f32 to vector<1x128xf32>
    %25 = arith.mulf %24, %23 : vector<1x128xf32>
    %26 = arith.addf %16, %25 : vector<1x128xf32>
    %27 = arith.index_cast %arg0 : i32 to index
    %c2 = arith.constant 2 : index
    %28 = memref.load %arg1[%27, %c2] : memref<3x32xi32, #tpu.memory_space<smem>>
    %c2_i32 = arith.constant 2 : i32
    %29 = arith.cmpi sgt, %5, %c2_i32 : i32
    %30 = arith.extui %29 : i1 to i32
    %31 = arith.sitofp %30 : i32 to f32
    %32 = arith.index_cast %28 : i32 to index
    %c0_5 = arith.constant 0 : index
    %33 = vector.load %arg7[%32, %c0_5] : memref<56x128xf32, #tpu.memory_space<vmem>>, vector<1x128xf32>
    %34 = vector.broadcast %31 : f32 to vector<1x128xf32>
    %35 = arith.mulf %34, %33 : vector<1x128xf32>
    %36 = arith.addf %26, %35 : vector<1x128xf32>
    %37 = arith.index_cast %arg0 : i32 to index
    %c3 = arith.constant 3 : index
    %38 = memref.load %arg1[%37, %c3] : memref<3x32xi32, #tpu.memory_space<smem>>
    %c3_i32 = arith.constant 3 : i32
    %39 = arith.cmpi sgt, %5, %c3_i32 : i32
    %40 = arith.extui %39 : i1 to i32
    %41 = arith.sitofp %40 : i32 to f32
    %42 = arith.index_cast %38 : i32 to index
    %c0_6 = arith.constant 0 : index
    %43 = vector.load %arg7[%42, %c0_6] : memref<56x128xf32, #tpu.memory_space<vmem>>, vector<1x128xf32>
    %44 = vector.broadcast %41 : f32 to vector<1x128xf32>
    %45 = arith.mulf %44, %43 : vector<1x128xf32>
    %46 = arith.addf %36, %45 : vector<1x128xf32>
    %c1_i32_7 = arith.constant 1 : i32
    %47 = arith.maxsi %5, %c1_i32_7 : i32
    %48 = arith.sitofp %47 : i32 to f32
    %cst_8 = arith.constant 1.000000e+00 : f32
    %49 = arith.divf %cst_8, %48 : f32
    %50 = vector.broadcast %49 : f32 to vector<1x128xf32>
    %51 = arith.mulf %46, %50 : vector<1x128xf32>
    %52 = arith.index_cast %arg0 : i32 to index
    %c1_9 = arith.constant 1 : index
    %53 = memref.load %arg4[%52, %c1_9] : memref<3x8xi32, #tpu.memory_space<smem>>
    %cst_10 = arith.constant 0.000000e+00 : f32
    %54 = vector.broadcast %cst_10 : f32 to vector<1x128xf32>
    %55 = arith.index_cast %arg0 : i32 to index
    %c4 = arith.constant 4 : index
    %56 = memref.load %arg1[%55, %c4] : memref<3x32xi32, #tpu.memory_space<smem>>
    %c0_i32_11 = arith.constant 0 : i32
    %57 = arith.cmpi sgt, %53, %c0_i32_11 : i32
    %58 = arith.extui %57 : i1 to i32
    %59 = arith.sitofp %58 : i32 to f32
    %60 = arith.index_cast %56 : i32 to index
    %c0_12 = arith.constant 0 : index
    %61 = vector.load %arg7[%60, %c0_12] : memref<56x128xf32, #tpu.memory_space<vmem>>, vector<1x128xf32>
    %62 = vector.broadcast %59 : f32 to vector<1x128xf32>
    %63 = arith.mulf %62, %61 : vector<1x128xf32>
    %64 = arith.addf %54, %63 : vector<1x128xf32>
    %65 = arith.index_cast %arg0 : i32 to index
    %c5 = arith.constant 5 : index
    %66 = memref.load %arg1[%65, %c5] : memref<3x32xi32, #tpu.memory_space<smem>>
    %c1_i32_13 = arith.constant 1 : i32
    %67 = arith.cmpi sgt, %53, %c1_i32_13 : i32
    %68 = arith.extui %67 : i1 to i32
    %69 = arith.sitofp %68 : i32 to f32
    %70 = arith.index_cast %66 : i32 to index
    %c0_14 = arith.constant 0 : index
    %71 = vector.load %arg7[%70, %c0_14] : memref<56x128xf32, #tpu.memory_space<vmem>>, vector<1x128xf32>
    %72 = vector.broadcast %69 : f32 to vector<1x128xf32>
    %73 = arith.mulf %72, %71 : vector<1x128xf32>
    %74 = arith.addf %64, %73 : vector<1x128xf32>
    %75 = arith.index_cast %arg0 : i32 to index
    %c6 = arith.constant 6 : index
    %76 = memref.load %arg1[%75, %c6] : memref<3x32xi32, #tpu.memory_space<smem>>
    %c2_i32_15 = arith.constant 2 : i32
    %77 = arith.cmpi sgt, %53, %c2_i32_15 : i32
    %78 = arith.extui %77 : i1 to i32
    %79 = arith.sitofp %78 : i32 to f32
    %80 = arith.index_cast %76 : i32 to index
    %c0_16 = arith.constant 0 : index
    %81 = vector.load %arg7[%80, %c0_16] : memref<56x128xf32, #tpu.memory_space<vmem>>, vector<1x128xf32>
    %82 = vector.broadcast %79 : f32 to vector<1x128xf32>
    %83 = arith.mulf %82, %81 : vector<1x128xf32>
    %84 = arith.addf %74, %83 : vector<1x128xf32>
    %85 = arith.index_cast %arg0 : i32 to index
    %c7 = arith.constant 7 : index
    %86 = memref.load %arg1[%85, %c7] : memref<3x32xi32, #tpu.memory_space<smem>>
    %c3_i32_17 = arith.constant 3 : i32
    %87 = arith.cmpi sgt, %53, %c3_i32_17 : i32
    %88 = arith.extui %87 : i1 to i32
    %89 = arith.sitofp %88 : i32 to f32
    %90 = arith.index_cast %86 : i32 to index
    %c0_18 = arith.constant 0 : index
    %91 = vector.load %arg7[%90, %c0_18] : memref<56x128xf32, #tpu.memory_space<vmem>>, vector<1x128xf32>
    %92 = vector.broadcast %89 : f32 to vector<1x128xf32>
    %93 = arith.mulf %92, %91 : vector<1x128xf32>
    %94 = arith.addf %84, %93 : vector<1x128xf32>
    %c1_i32_19 = arith.constant 1 : i32
    %95 = arith.maxsi %53, %c1_i32_19 : i32
    %96 = arith.sitofp %95 : i32 to f32
    %cst_20 = arith.constant 1.000000e+00 : f32
    %97 = arith.divf %cst_20, %96 : f32
    %98 = vector.broadcast %97 : f32 to vector<1x128xf32>
    %99 = arith.mulf %94, %98 : vector<1x128xf32>
    %100 = arith.index_cast %arg0 : i32 to index
    %c2_21 = arith.constant 2 : index
    %101 = memref.load %arg4[%100, %c2_21] : memref<3x8xi32, #tpu.memory_space<smem>>
    %cst_22 = arith.constant 0.000000e+00 : f32
    %102 = vector.broadcast %cst_22 : f32 to vector<1x128xf32>
    %103 = arith.index_cast %arg0 : i32 to index
    %c8 = arith.constant 8 : index
    %104 = memref.load %arg1[%103, %c8] : memref<3x32xi32, #tpu.memory_space<smem>>
    %c0_i32_23 = arith.constant 0 : i32
    %105 = arith.cmpi sgt, %101, %c0_i32_23 : i32
    %106 = arith.extui %105 : i1 to i32
    %107 = arith.sitofp %106 : i32 to f32
    %108 = arith.index_cast %104 : i32 to index
    %c0_24 = arith.constant 0 : index
    %109 = vector.load %arg7[%108, %c0_24] : memref<56x128xf32, #tpu.memory_space<vmem>>, vector<1x128xf32>
    %110 = vector.broadcast %107 : f32 to vector<1x128xf32>
    %111 = arith.mulf %110, %109 : vector<1x128xf32>
    %112 = arith.addf %102, %111 : vector<1x128xf32>
    %113 = arith.index_cast %arg0 : i32 to index
    %c9 = arith.constant 9 : index
    %114 = memref.load %arg1[%113, %c9] : memref<3x32xi32, #tpu.memory_space<smem>>
    %c1_i32_25 = arith.constant 1 : i32
    %115 = arith.cmpi sgt, %101, %c1_i32_25 : i32
    %116 = arith.extui %115 : i1 to i32
    %117 = arith.sitofp %116 : i32 to f32
    %118 = arith.index_cast %114 : i32 to index
    %c0_26 = arith.constant 0 : index
    %119 = vector.load %arg7[%118, %c0_26] : memref<56x128xf32, #tpu.memory_space<vmem>>, vector<1x128xf32>
    %120 = vector.broadcast %117 : f32 to vector<1x128xf32>
    %121 = arith.mulf %120, %119 : vector<1x128xf32>
    %122 = arith.addf %112, %121 : vector<1x128xf32>
    %123 = arith.index_cast %arg0 : i32 to index
    %c10 = arith.constant 10 : index
    %124 = memref.load %arg1[%123, %c10] : memref<3x32xi32, #tpu.memory_space<smem>>
    %c2_i32_27 = arith.constant 2 : i32
    %125 = arith.cmpi sgt, %101, %c2_i32_27 : i32
    %126 = arith.extui %125 : i1 to i32
    %127 = arith.sitofp %126 : i32 to f32
    %128 = arith.index_cast %124 : i32 to index
    %c0_28 = arith.constant 0 : index
    %129 = vector.load %arg7[%128, %c0_28] : memref<56x128xf32, #tpu.memory_space<vmem>>, vector<1x128xf32>
    %130 = vector.broadcast %127 : f32 to vector<1x128xf32>
    %131 = arith.mulf %130, %129 : vector<1x128xf32>
    %132 = arith.addf %122, %131 : vector<1x128xf32>
    %133 = arith.index_cast %arg0 : i32 to index
    %c11 = arith.constant 11 : index
    %134 = memref.load %arg1[%133, %c11] : memref<3x32xi32, #tpu.memory_space<smem>>
    %c3_i32_29 = arith.constant 3 : i32
    %135 = arith.cmpi sgt, %101, %c3_i32_29 : i32
    %136 = arith.extui %135 : i1 to i32
    %137 = arith.sitofp %136 : i32 to f32
    %138 = arith.index_cast %134 : i32 to index
    %c0_30 = arith.constant 0 : index
    %139 = vector.load %arg7[%138, %c0_30] : memref<56x128xf32, #tpu.memory_space<vmem>>, vector<1x128xf32>
    %140 = vector.broadcast %137 : f32 to vector<1x128xf32>
    %141 = arith.mulf %140, %139 : vector<1x128xf32>
    %142 = arith.addf %132, %141 : vector<1x128xf32>
    %c1_i32_31 = arith.constant 1 : i32
    %143 = arith.maxsi %101, %c1_i32_31 : i32
    %144 = arith.sitofp %143 : i32 to f32
    %cst_32 = arith.constant 1.000000e+00 : f32
    %145 = arith.divf %cst_32, %144 : f32
    %146 = vector.broadcast %145 : f32 to vector<1x128xf32>
    %147 = arith.mulf %142, %146 : vector<1x128xf32>
    %148 = arith.index_cast %arg0 : i32 to index
    %c3_33 = arith.constant 3 : index
    %149 = memref.load %arg4[%148, %c3_33] : memref<3x8xi32, #tpu.memory_space<smem>>
    %cst_34 = arith.constant 0.000000e+00 : f32
    %150 = vector.broadcast %cst_34 : f32 to vector<1x128xf32>
    %151 = arith.index_cast %arg0 : i32 to index
    %c12 = arith.constant 12 : index
    %152 = memref.load %arg1[%151, %c12] : memref<3x32xi32, #tpu.memory_space<smem>>
    %c0_i32_35 = arith.constant 0 : i32
    %153 = arith.cmpi sgt, %149, %c0_i32_35 : i32
    %154 = arith.extui %153 : i1 to i32
    %155 = arith.sitofp %154 : i32 to f32
    %156 = arith.index_cast %152 : i32 to index
    %c0_36 = arith.constant 0 : index
    %157 = vector.load %arg7[%156, %c0_36] : memref<56x128xf32, #tpu.memory_space<vmem>>, vector<1x128xf32>
    %158 = vector.broadcast %155 : f32 to vector<1x128xf32>
    %159 = arith.mulf %158, %157 : vector<1x128xf32>
    %160 = arith.addf %150, %159 : vector<1x128xf32>
    %161 = arith.index_cast %arg0 : i32 to index
    %c13 = arith.constant 13 : index
    %162 = memref.load %arg1[%161, %c13] : memref<3x32xi32, #tpu.memory_space<smem>>
    %c1_i32_37 = arith.constant 1 : i32
    %163 = arith.cmpi sgt, %149, %c1_i32_37 : i32
    %164 = arith.extui %163 : i1 to i32
    %165 = arith.sitofp %164 : i32 to f32
    %166 = arith.index_cast %162 : i32 to index
    %c0_38 = arith.constant 0 : index
    %167 = vector.load %arg7[%166, %c0_38] : memref<56x128xf32, #tpu.memory_space<vmem>>, vector<1x128xf32>
    %168 = vector.broadcast %165 : f32 to vector<1x128xf32>
    %169 = arith.mulf %168, %167 : vector<1x128xf32>
    %170 = arith.addf %160, %169 : vector<1x128xf32>
    %171 = arith.index_cast %arg0 : i32 to index
    %c14 = arith.constant 14 : index
    %172 = memref.load %arg1[%171, %c14] : memref<3x32xi32, #tpu.memory_space<smem>>
    %c2_i32_39 = arith.constant 2 : i32
    %173 = arith.cmpi sgt, %149, %c2_i32_39 : i32
    %174 = arith.extui %173 : i1 to i32
    %175 = arith.sitofp %174 : i32 to f32
    %176 = arith.index_cast %172 : i32 to index
    %c0_40 = arith.constant 0 : index
    %177 = vector.load %arg7[%176, %c0_40] : memref<56x128xf32, #tpu.memory_space<vmem>>, vector<1x128xf32>
    %178 = vector.broadcast %175 : f32 to vector<1x128xf32>
    %179 = arith.mulf %178, %177 : vector<1x128xf32>
    %180 = arith.addf %170, %179 : vector<1x128xf32>
    %181 = arith.index_cast %arg0 : i32 to index
    %c15 = arith.constant 15 : index
    %182 = memref.load %arg1[%181, %c15] : memref<3x32xi32, #tpu.memory_space<smem>>
    %c3_i32_41 = arith.constant 3 : i32
    %183 = arith.cmpi sgt, %149, %c3_i32_41 : i32
    %184 = arith.extui %183 : i1 to i32
    %185 = arith.sitofp %184 : i32 to f32
    %186 = arith.index_cast %182 : i32 to index
    %c0_42 = arith.constant 0 : index
    %187 = vector.load %arg7[%186, %c0_42] : memref<56x128xf32, #tpu.memory_space<vmem>>, vector<1x128xf32>
    %188 = vector.broadcast %185 : f32 to vector<1x128xf32>
    %189 = arith.mulf %188, %187 : vector<1x128xf32>
    %190 = arith.addf %180, %189 : vector<1x128xf32>
    %c1_i32_43 = arith.constant 1 : i32
    %191 = arith.maxsi %149, %c1_i32_43 : i32
    %192 = arith.sitofp %191 : i32 to f32
    %cst_44 = arith.constant 1.000000e+00 : f32
    %193 = arith.divf %cst_44, %192 : f32
    %194 = vector.broadcast %193 : f32 to vector<1x128xf32>
    %195 = arith.mulf %190, %194 : vector<1x128xf32>
    %196 = arith.index_cast %arg0 : i32 to index
    %c4_45 = arith.constant 4 : index
    %197 = memref.load %arg4[%196, %c4_45] : memref<3x8xi32, #tpu.memory_space<smem>>
    %cst_46 = arith.constant 0.000000e+00 : f32
    %198 = vector.broadcast %cst_46 : f32 to vector<1x128xf32>
    %199 = arith.index_cast %arg0 : i32 to index
    %c16 = arith.constant 16 : index
    %200 = memref.load %arg1[%199, %c16] : memref<3x32xi32, #tpu.memory_space<smem>>
    %c0_i32_47 = arith.constant 0 : i32
    %201 = arith.cmpi sgt, %197, %c0_i32_47 : i32
    %202 = arith.extui %201 : i1 to i32
    %203 = arith.sitofp %202 : i32 to f32
    %204 = arith.index_cast %200 : i32 to index
    %c0_48 = arith.constant 0 : index
    %205 = vector.load %arg7[%204, %c0_48] : memref<56x128xf32, #tpu.memory_space<vmem>>, vector<1x128xf32>
    %206 = vector.broadcast %203 : f32 to vector<1x128xf32>
    %207 = arith.mulf %206, %205 : vector<1x128xf32>
    %208 = arith.addf %198, %207 : vector<1x128xf32>
    %209 = arith.index_cast %arg0 : i32 to index
    %c17 = arith.constant 17 : index
    %210 = memref.load %arg1[%209, %c17] : memref<3x32xi32, #tpu.memory_space<smem>>
    %c1_i32_49 = arith.constant 1 : i32
    %211 = arith.cmpi sgt, %197, %c1_i32_49 : i32
    %212 = arith.extui %211 : i1 to i32
    %213 = arith.sitofp %212 : i32 to f32
    %214 = arith.index_cast %210 : i32 to index
    %c0_50 = arith.constant 0 : index
    %215 = vector.load %arg7[%214, %c0_50] : memref<56x128xf32, #tpu.memory_space<vmem>>, vector<1x128xf32>
    %216 = vector.broadcast %213 : f32 to vector<1x128xf32>
    %217 = arith.mulf %216, %215 : vector<1x128xf32>
    %218 = arith.addf %208, %217 : vector<1x128xf32>
    %219 = arith.index_cast %arg0 : i32 to index
    %c18 = arith.constant 18 : index
    %220 = memref.load %arg1[%219, %c18] : memref<3x32xi32, #tpu.memory_space<smem>>
    %c2_i32_51 = arith.constant 2 : i32
    %221 = arith.cmpi sgt, %197, %c2_i32_51 : i32
    %222 = arith.extui %221 : i1 to i32
    %223 = arith.sitofp %222 : i32 to f32
    %224 = arith.index_cast %220 : i32 to index
    %c0_52 = arith.constant 0 : index
    %225 = vector.load %arg7[%224, %c0_52] : memref<56x128xf32, #tpu.memory_space<vmem>>, vector<1x128xf32>
    %226 = vector.broadcast %223 : f32 to vector<1x128xf32>
    %227 = arith.mulf %226, %225 : vector<1x128xf32>
    %228 = arith.addf %218, %227 : vector<1x128xf32>
    %229 = arith.index_cast %arg0 : i32 to index
    %c19 = arith.constant 19 : index
    %230 = memref.load %arg1[%229, %c19] : memref<3x32xi32, #tpu.memory_space<smem>>
    %c3_i32_53 = arith.constant 3 : i32
    %231 = arith.cmpi sgt, %197, %c3_i32_53 : i32
    %232 = arith.extui %231 : i1 to i32
    %233 = arith.sitofp %232 : i32 to f32
    %234 = arith.index_cast %230 : i32 to index
    %c0_54 = arith.constant 0 : index
    %235 = vector.load %arg7[%234, %c0_54] : memref<56x128xf32, #tpu.memory_space<vmem>>, vector<1x128xf32>
    %236 = vector.broadcast %233 : f32 to vector<1x128xf32>
    %237 = arith.mulf %236, %235 : vector<1x128xf32>
    %238 = arith.addf %228, %237 : vector<1x128xf32>
    %c1_i32_55 = arith.constant 1 : i32
    %239 = arith.maxsi %197, %c1_i32_55 : i32
    %240 = arith.sitofp %239 : i32 to f32
    %cst_56 = arith.constant 1.000000e+00 : f32
    %241 = arith.divf %cst_56, %240 : f32
    %242 = vector.broadcast %241 : f32 to vector<1x128xf32>
    %243 = arith.mulf %238, %242 : vector<1x128xf32>
    %244 = arith.index_cast %arg0 : i32 to index
    %c5_57 = arith.constant 5 : index
    %245 = memref.load %arg4[%244, %c5_57] : memref<3x8xi32, #tpu.memory_space<smem>>
    %cst_58 = arith.constant 0.000000e+00 : f32
    %246 = vector.broadcast %cst_58 : f32 to vector<1x128xf32>
    %247 = arith.index_cast %arg0 : i32 to index
    %c20 = arith.constant 20 : index
    %248 = memref.load %arg1[%247, %c20] : memref<3x32xi32, #tpu.memory_space<smem>>
    %c0_i32_59 = arith.constant 0 : i32
    %249 = arith.cmpi sgt, %245, %c0_i32_59 : i32
    %250 = arith.extui %249 : i1 to i32
    %251 = arith.sitofp %250 : i32 to f32
    %252 = arith.index_cast %248 : i32 to index
    %c0_60 = arith.constant 0 : index
    %253 = vector.load %arg7[%252, %c0_60] : memref<56x128xf32, #tpu.memory_space<vmem>>, vector<1x128xf32>
    %254 = vector.broadcast %251 : f32 to vector<1x128xf32>
    %255 = arith.mulf %254, %253 : vector<1x128xf32>
    %256 = arith.addf %246, %255 : vector<1x128xf32>
    %257 = arith.index_cast %arg0 : i32 to index
    %c21 = arith.constant 21 : index
    %258 = memref.load %arg1[%257, %c21] : memref<3x32xi32, #tpu.memory_space<smem>>
    %c1_i32_61 = arith.constant 1 : i32
    %259 = arith.cmpi sgt, %245, %c1_i32_61 : i32
    %260 = arith.extui %259 : i1 to i32
    %261 = arith.sitofp %260 : i32 to f32
    %262 = arith.index_cast %258 : i32 to index
    %c0_62 = arith.constant 0 : index
    %263 = vector.load %arg7[%262, %c0_62] : memref<56x128xf32, #tpu.memory_space<vmem>>, vector<1x128xf32>
    %264 = vector.broadcast %261 : f32 to vector<1x128xf32>
    %265 = arith.mulf %264, %263 : vector<1x128xf32>
    %266 = arith.addf %256, %265 : vector<1x128xf32>
    %267 = arith.index_cast %arg0 : i32 to index
    %c22 = arith.constant 22 : index
    %268 = memref.load %arg1[%267, %c22] : memref<3x32xi32, #tpu.memory_space<smem>>
    %c2_i32_63 = arith.constant 2 : i32
    %269 = arith.cmpi sgt, %245, %c2_i32_63 : i32
    %270 = arith.extui %269 : i1 to i32
    %271 = arith.sitofp %270 : i32 to f32
    %272 = arith.index_cast %268 : i32 to index
    %c0_64 = arith.constant 0 : index
    %273 = vector.load %arg7[%272, %c0_64] : memref<56x128xf32, #tpu.memory_space<vmem>>, vector<1x128xf32>
    %274 = vector.broadcast %271 : f32 to vector<1x128xf32>
    %275 = arith.mulf %274, %273 : vector<1x128xf32>
    %276 = arith.addf %266, %275 : vector<1x128xf32>
    %277 = arith.index_cast %arg0 : i32 to index
    %c23 = arith.constant 23 : index
    %278 = memref.load %arg1[%277, %c23] : memref<3x32xi32, #tpu.memory_space<smem>>
    %c3_i32_65 = arith.constant 3 : i32
    %279 = arith.cmpi sgt, %245, %c3_i32_65 : i32
    %280 = arith.extui %279 : i1 to i32
    %281 = arith.sitofp %280 : i32 to f32
    %282 = arith.index_cast %278 : i32 to index
    %c0_66 = arith.constant 0 : index
    %283 = vector.load %arg7[%282, %c0_66] : memref<56x128xf32, #tpu.memory_space<vmem>>, vector<1x128xf32>
    %284 = vector.broadcast %281 : f32 to vector<1x128xf32>
    %285 = arith.mulf %284, %283 : vector<1x128xf32>
    %286 = arith.addf %276, %285 : vector<1x128xf32>
    %c1_i32_67 = arith.constant 1 : i32
    %287 = arith.maxsi %245, %c1_i32_67 : i32
    %288 = arith.sitofp %287 : i32 to f32
    %cst_68 = arith.constant 1.000000e+00 : f32
    %289 = arith.divf %cst_68, %288 : f32
    %290 = vector.broadcast %289 : f32 to vector<1x128xf32>
    %291 = arith.mulf %286, %290 : vector<1x128xf32>
    %292 = arith.index_cast %arg0 : i32 to index
    %c6_69 = arith.constant 6 : index
    %293 = memref.load %arg4[%292, %c6_69] : memref<3x8xi32, #tpu.memory_space<smem>>
    %cst_70 = arith.constant 0.000000e+00 : f32
    %294 = vector.broadcast %cst_70 : f32 to vector<1x128xf32>
    %295 = arith.index_cast %arg0 : i32 to index
    %c24 = arith.constant 24 : index
    %296 = memref.load %arg1[%295, %c24] : memref<3x32xi32, #tpu.memory_space<smem>>
    %c0_i32_71 = arith.constant 0 : i32
    %297 = arith.cmpi sgt, %293, %c0_i32_71 : i32
    %298 = arith.extui %297 : i1 to i32
    %299 = arith.sitofp %298 : i32 to f32
    %300 = arith.index_cast %296 : i32 to index
    %c0_72 = arith.constant 0 : index
    %301 = vector.load %arg7[%300, %c0_72] : memref<56x128xf32, #tpu.memory_space<vmem>>, vector<1x128xf32>
    %302 = vector.broadcast %299 : f32 to vector<1x128xf32>
    %303 = arith.mulf %302, %301 : vector<1x128xf32>
    %304 = arith.addf %294, %303 : vector<1x128xf32>
    %305 = arith.index_cast %arg0 : i32 to index
    %c25 = arith.constant 25 : index
    %306 = memref.load %arg1[%305, %c25] : memref<3x32xi32, #tpu.memory_space<smem>>
    %c1_i32_73 = arith.constant 1 : i32
    %307 = arith.cmpi sgt, %293, %c1_i32_73 : i32
    %308 = arith.extui %307 : i1 to i32
    %309 = arith.sitofp %308 : i32 to f32
    %310 = arith.index_cast %306 : i32 to index
    %c0_74 = arith.constant 0 : index
    %311 = vector.load %arg7[%310, %c0_74] : memref<56x128xf32, #tpu.memory_space<vmem>>, vector<1x128xf32>
    %312 = vector.broadcast %309 : f32 to vector<1x128xf32>
    %313 = arith.mulf %312, %311 : vector<1x128xf32>
    %314 = arith.addf %304, %313 : vector<1x128xf32>
    %315 = arith.index_cast %arg0 : i32 to index
    %c26 = arith.constant 26 : index
    %316 = memref.load %arg1[%315, %c26] : memref<3x32xi32, #tpu.memory_space<smem>>
    %c2_i32_75 = arith.constant 2 : i32
    %317 = arith.cmpi sgt, %293, %c2_i32_75 : i32
    %318 = arith.extui %317 : i1 to i32
    %319 = arith.sitofp %318 : i32 to f32
    %320 = arith.index_cast %316 : i32 to index
    %c0_76 = arith.constant 0 : index
    %321 = vector.load %arg7[%320, %c0_76] : memref<56x128xf32, #tpu.memory_space<vmem>>, vector<1x128xf32>
    %322 = vector.broadcast %319 : f32 to vector<1x128xf32>
    %323 = arith.mulf %322, %321 : vector<1x128xf32>
    %324 = arith.addf %314, %323 : vector<1x128xf32>
    %325 = arith.index_cast %arg0 : i32 to index
    %c27 = arith.constant 27 : index
    %326 = memref.load %arg1[%325, %c27] : memref<3x32xi32, #tpu.memory_space<smem>>
    %c3_i32_77 = arith.constant 3 : i32
    %327 = arith.cmpi sgt, %293, %c3_i32_77 : i32
    %328 = arith.extui %327 : i1 to i32
    %329 = arith.sitofp %328 : i32 to f32
    %330 = arith.index_cast %326 : i32 to index
    %c0_78 = arith.constant 0 : index
    %331 = vector.load %arg7[%330, %c0_78] : memref<56x128xf32, #tpu.memory_space<vmem>>, vector<1x128xf32>
    %332 = vector.broadcast %329 : f32 to vector<1x128xf32>
    %333 = arith.mulf %332, %331 : vector<1x128xf32>
    %334 = arith.addf %324, %333 : vector<1x128xf32>
    %c1_i32_79 = arith.constant 1 : i32
    %335 = arith.maxsi %293, %c1_i32_79 : i32
    %336 = arith.sitofp %335 : i32 to f32
    %cst_80 = arith.constant 1.000000e+00 : f32
    %337 = arith.divf %cst_80, %336 : f32
    %338 = vector.broadcast %337 : f32 to vector<1x128xf32>
    %339 = arith.mulf %334, %338 : vector<1x128xf32>
    %340 = arith.index_cast %arg0 : i32 to index
    %c7_81 = arith.constant 7 : index
    %341 = memref.load %arg4[%340, %c7_81] : memref<3x8xi32, #tpu.memory_space<smem>>
    %cst_82 = arith.constant 0.000000e+00 : f32
    %342 = vector.broadcast %cst_82 : f32 to vector<1x128xf32>
    %343 = arith.index_cast %arg0 : i32 to index
    %c28 = arith.constant 28 : index
    %344 = memref.load %arg1[%343, %c28] : memref<3x32xi32, #tpu.memory_space<smem>>
    %c0_i32_83 = arith.constant 0 : i32
    %345 = arith.cmpi sgt, %341, %c0_i32_83 : i32
    %346 = arith.extui %345 : i1 to i32
    %347 = arith.sitofp %346 : i32 to f32
    %348 = arith.index_cast %344 : i32 to index
    %c0_84 = arith.constant 0 : index
    %349 = vector.load %arg7[%348, %c0_84] : memref<56x128xf32, #tpu.memory_space<vmem>>, vector<1x128xf32>
    %350 = vector.broadcast %347 : f32 to vector<1x128xf32>
    %351 = arith.mulf %350, %349 : vector<1x128xf32>
    %352 = arith.addf %342, %351 : vector<1x128xf32>
    %353 = arith.index_cast %arg0 : i32 to index
    %c29 = arith.constant 29 : index
    %354 = memref.load %arg1[%353, %c29] : memref<3x32xi32, #tpu.memory_space<smem>>
    %c1_i32_85 = arith.constant 1 : i32
    %355 = arith.cmpi sgt, %341, %c1_i32_85 : i32
    %356 = arith.extui %355 : i1 to i32
    %357 = arith.sitofp %356 : i32 to f32
    %358 = arith.index_cast %354 : i32 to index
    %c0_86 = arith.constant 0 : index
    %359 = vector.load %arg7[%358, %c0_86] : memref<56x128xf32, #tpu.memory_space<vmem>>, vector<1x128xf32>
    %360 = vector.broadcast %357 : f32 to vector<1x128xf32>
    %361 = arith.mulf %360, %359 : vector<1x128xf32>
    %362 = arith.addf %352, %361 : vector<1x128xf32>
    %363 = arith.index_cast %arg0 : i32 to index
    %c30 = arith.constant 30 : index
    %364 = memref.load %arg1[%363, %c30] : memref<3x32xi32, #tpu.memory_space<smem>>
    %c2_i32_87 = arith.constant 2 : i32
    %365 = arith.cmpi sgt, %341, %c2_i32_87 : i32
    %366 = arith.extui %365 : i1 to i32
    %367 = arith.sitofp %366 : i32 to f32
    %368 = arith.index_cast %364 : i32 to index
    %c0_88 = arith.constant 0 : index
    %369 = vector.load %arg7[%368, %c0_88] : memref<56x128xf32, #tpu.memory_space<vmem>>, vector<1x128xf32>
    %370 = vector.broadcast %367 : f32 to vector<1x128xf32>
    %371 = arith.mulf %370, %369 : vector<1x128xf32>
    %372 = arith.addf %362, %371 : vector<1x128xf32>
    %373 = arith.index_cast %arg0 : i32 to index
    %c31 = arith.constant 31 : index
    %374 = memref.load %arg1[%373, %c31] : memref<3x32xi32, #tpu.memory_space<smem>>
    %c3_i32_89 = arith.constant 3 : i32
    %375 = arith.cmpi sgt, %341, %c3_i32_89 : i32
    %376 = arith.extui %375 : i1 to i32
    %377 = arith.sitofp %376 : i32 to f32
    %378 = arith.index_cast %374 : i32 to index
    %c0_90 = arith.constant 0 : index
    %379 = vector.load %arg7[%378, %c0_90] : memref<56x128xf32, #tpu.memory_space<vmem>>, vector<1x128xf32>
    %380 = vector.broadcast %377 : f32 to vector<1x128xf32>
    %381 = arith.mulf %380, %379 : vector<1x128xf32>
    %382 = arith.addf %372, %381 : vector<1x128xf32>
    %c1_i32_91 = arith.constant 1 : i32
    %383 = arith.maxsi %341, %c1_i32_91 : i32
    %384 = arith.sitofp %383 : i32 to f32
    %cst_92 = arith.constant 1.000000e+00 : f32
    %385 = arith.divf %cst_92, %384 : f32
    %386 = vector.broadcast %385 : f32 to vector<1x128xf32>
    %387 = arith.mulf %382, %386 : vector<1x128xf32>
    %388 = tpu.concatenate %51, %99, %147, %195, %243, %291, %339, %387 in 0 : vector<1x128xf32>, vector<1x128xf32>, vector<1x128xf32>, vector<1x128xf32>, vector<1x128xf32>, vector<1x128xf32>, vector<1x128xf32>, vector<1x128xf32> -> vector<8x128xf32>
    %389 = arith.truncf %388 : vector<8x128xf32> to vector<8x128xbf16>
    %c0_93 = arith.constant 0 : index
    %c0_94 = arith.constant 0 : index
    %c0_95 = arith.constant 0 : index
    %390 = vector.load %arg10[%c0_93, %c0_94, %c0_95] : memref<2x128x128xbf16, #tpu.memory_space<vmem>>, vector<1x128x128xbf16>
    %391 = vector.shape_cast %390 : vector<1x128x128xbf16> to vector<128x128xbf16>
    %cst_96 = arith.constant dense<0.000000e+00> : vector<8x128xf32>
    %392 = tpu.matmul %389, %391, %cst_96 {dimension_numbers = #tpu.dot_dimension_numbers<[1], [0], [0], [1], [0, 0, 1, 1], [], []>} : vector<8x128xbf16>, vector<128x128xbf16>, vector<8x128xf32> -> vector<8x128xf32>
    %c0_97 = arith.constant 0 : index
    %c0_98 = arith.constant 0 : index
    %c0_99 = arith.constant 0 : index
    %393 = vector.load %arg11[%c0_97, %c0_98, %c0_99] : memref<2x1x128xf32, #tpu.memory_space<vmem>>, vector<1x1x128xf32>
    %394 = vector.shape_cast %393 : vector<1x1x128xf32> to vector<1x128xf32>
    %395 = vector.broadcast %394 : vector<1x128xf32> to vector<8x128xf32>
    %396 = arith.addf %392, %395 : vector<8x128xf32>
    %397 = math.tanh %396 : vector<8x128xf32>
    %398 = arith.truncf %397 : vector<8x128xf32> to vector<8x128xbf16>
    %c0_100 = arith.constant 0 : index
    %c0_101 = arith.constant 0 : index
    %c0_102 = arith.constant 0 : index
    %399 = vector.load %arg12[%c0_100, %c0_101, %c0_102] : memref<2x128x128xbf16, #tpu.memory_space<vmem>>, vector<1x128x128xbf16>
    %400 = vector.shape_cast %399 : vector<1x128x128xbf16> to vector<128x128xbf16>
    %cst_103 = arith.constant dense<0.000000e+00> : vector<8x128xf32>
    %401 = tpu.matmul %398, %400, %cst_103 {dimension_numbers = #tpu.dot_dimension_numbers<[1], [0], [0], [1], [0, 0, 1, 1], [], []>} : vector<8x128xbf16>, vector<128x128xbf16>, vector<8x128xf32> -> vector<8x128xf32>
    %c0_104 = arith.constant 0 : index
    %c0_105 = arith.constant 0 : index
    %c0_106 = arith.constant 0 : index
    %402 = vector.load %arg13[%c0_104, %c0_105, %c0_106] : memref<2x1x128xf32, #tpu.memory_space<vmem>>, vector<1x1x128xf32>
    %403 = vector.shape_cast %402 : vector<1x1x128xf32> to vector<1x128xf32>
    %404 = vector.broadcast %403 : vector<1x128xf32> to vector<8x128xf32>
    %405 = arith.addf %401, %404 : vector<8x128xf32>
    %406 = math.tanh %405 : vector<8x128xf32>
    %407 = arith.truncf %406 : vector<8x128xf32> to vector<8x128xbf16>
    %c0_107 = arith.constant 0 : index
    %c0_108 = arith.constant 0 : index
    %c0_109 = arith.constant 0 : index
    %408 = vector.load %arg14[%c0_107, %c0_108, %c0_109] : memref<2x128x128xbf16, #tpu.memory_space<vmem>>, vector<1x128x128xbf16>
    %409 = vector.shape_cast %408 : vector<1x128x128xbf16> to vector<128x128xbf16>
    %cst_110 = arith.constant dense<0.000000e+00> : vector<8x128xf32>
    %410 = tpu.matmul %407, %409, %cst_110 {dimension_numbers = #tpu.dot_dimension_numbers<[1], [0], [0], [1], [0, 0, 1, 1], [], []>} : vector<8x128xbf16>, vector<128x128xbf16>, vector<8x128xf32> -> vector<8x128xf32>
    %c0_111 = arith.constant 0 : index
    %c0_112 = arith.constant 0 : index
    %c0_113 = arith.constant 0 : index
    %411 = vector.load %arg15[%c0_111, %c0_112, %c0_113] : memref<2x1x128xf32, #tpu.memory_space<vmem>>, vector<1x1x128xf32>
    %412 = vector.shape_cast %411 : vector<1x1x128xf32> to vector<1x128xf32>
    %413 = vector.broadcast %412 : vector<1x128xf32> to vector<8x128xf32>
    %414 = arith.addf %410, %413 : vector<8x128xf32>
    %415 = math.tanh %414 : vector<8x128xf32>
    %416 = arith.truncf %415 : vector<8x128xf32> to vector<8x128xbf16>
    %c0_114 = arith.constant 0 : index
    %c0_115 = arith.constant 0 : index
    %c0_116 = arith.constant 0 : index
    %417 = vector.load %arg16[%c0_114, %c0_115, %c0_116] : memref<2x128x128xbf16, #tpu.memory_space<vmem>>, vector<1x128x128xbf16>
    %418 = vector.shape_cast %417 : vector<1x128x128xbf16> to vector<128x128xbf16>
    %cst_117 = arith.constant dense<0.000000e+00> : vector<8x128xf32>
    %419 = tpu.matmul %416, %418, %cst_117 {dimension_numbers = #tpu.dot_dimension_numbers<[1], [0], [0], [1], [0, 0, 1, 1], [], []>} : vector<8x128xbf16>, vector<128x128xbf16>, vector<8x128xf32> -> vector<8x128xf32>
    %c0_118 = arith.constant 0 : index
    %c0_119 = arith.constant 0 : index
    %c0_120 = arith.constant 0 : index
    %420 = vector.load %arg17[%c0_118, %c0_119, %c0_120] : memref<2x1x128xf32, #tpu.memory_space<vmem>>, vector<1x1x128xf32>
    %421 = vector.shape_cast %420 : vector<1x1x128xf32> to vector<1x128xf32>
    %422 = vector.broadcast %421 : vector<1x128xf32> to vector<8x128xf32>
    %423 = arith.addf %419, %422 : vector<8x128xf32>
    %424 = arith.negf %423 : vector<8x128xf32>
    %425 = math.exp %424 : vector<8x128xf32>
    %cst_121 = arith.constant 1.000000e+00 : f32
    %426 = vector.broadcast %cst_121 : f32 to vector<8x128xf32>
    %427 = arith.addf %426, %425 : vector<8x128xf32>
    %428 = arith.divf %426, %427 : vector<8x128xf32>
    %429 = arith.index_cast %arg0 : i32 to index
    %c0_122 = arith.constant 0 : index
    %430 = memref.load %arg5[%429, %c0_122] : memref<3x8xi32, #tpu.memory_space<smem>>
    %cst_123 = arith.constant 0.000000e+00 : f32
    %431 = vector.broadcast %cst_123 : f32 to vector<1x128xf32>
    %432 = arith.index_cast %arg0 : i32 to index
    %c0_124 = arith.constant 0 : index
    %433 = memref.load %arg2[%432, %c0_124] : memref<3x24xi32, #tpu.memory_space<smem>>
    %c0_i32_125 = arith.constant 0 : i32
    %434 = arith.cmpi sgt, %430, %c0_i32_125 : i32
    %435 = arith.extui %434 : i1 to i32
    %436 = arith.sitofp %435 : i32 to f32
    %437 = arith.index_cast %433 : i32 to index
    %c0_126 = arith.constant 0 : index
    %438 = vector.load %arg8[%437, %c0_126] : memref<40x128xf32, #tpu.memory_space<vmem>>, vector<1x128xf32>
    %439 = vector.broadcast %436 : f32 to vector<1x128xf32>
    %440 = arith.mulf %439, %438 : vector<1x128xf32>
    %441 = arith.addf %431, %440 : vector<1x128xf32>
    %442 = arith.index_cast %arg0 : i32 to index
    %c1_127 = arith.constant 1 : index
    %443 = memref.load %arg2[%442, %c1_127] : memref<3x24xi32, #tpu.memory_space<smem>>
    %c1_i32_128 = arith.constant 1 : i32
    %444 = arith.cmpi sgt, %430, %c1_i32_128 : i32
    %445 = arith.extui %444 : i1 to i32
    %446 = arith.sitofp %445 : i32 to f32
    %447 = arith.index_cast %443 : i32 to index
    %c0_129 = arith.constant 0 : index
    %448 = vector.load %arg8[%447, %c0_129] : memref<40x128xf32, #tpu.memory_space<vmem>>, vector<1x128xf32>
    %449 = vector.broadcast %446 : f32 to vector<1x128xf32>
    %450 = arith.mulf %449, %448 : vector<1x128xf32>
    %451 = arith.addf %441, %450 : vector<1x128xf32>
    %452 = arith.index_cast %arg0 : i32 to index
    %c2_130 = arith.constant 2 : index
    %453 = memref.load %arg2[%452, %c2_130] : memref<3x24xi32, #tpu.memory_space<smem>>
    %c2_i32_131 = arith.constant 2 : i32
    %454 = arith.cmpi sgt, %430, %c2_i32_131 : i32
    %455 = arith.extui %454 : i1 to i32
    %456 = arith.sitofp %455 : i32 to f32
    %457 = arith.index_cast %453 : i32 to index
    %c0_132 = arith.constant 0 : index
    %458 = vector.load %arg8[%457, %c0_132] : memref<40x128xf32, #tpu.memory_space<vmem>>, vector<1x128xf32>
    %459 = vector.broadcast %456 : f32 to vector<1x128xf32>
    %460 = arith.mulf %459, %458 : vector<1x128xf32>
    %461 = arith.addf %451, %460 : vector<1x128xf32>
    %c1_i32_133 = arith.constant 1 : i32
    %462 = arith.maxsi %430, %c1_i32_133 : i32
    %463 = arith.sitofp %462 : i32 to f32
    %cst_134 = arith.constant 1.000000e+00 : f32
    %464 = arith.divf %cst_134, %463 : f32
    %465 = vector.broadcast %464 : f32 to vector<1x128xf32>
    %466 = arith.mulf %461, %465 : vector<1x128xf32>
    %467 = arith.index_cast %arg0 : i32 to index
    %c1_135 = arith.constant 1 : index
    %468 = memref.load %arg5[%467, %c1_135] : memref<3x8xi32, #tpu.memory_space<smem>>
    %cst_136 = arith.constant 0.000000e+00 : f32
    %469 = vector.broadcast %cst_136 : f32 to vector<1x128xf32>
    %470 = arith.index_cast %arg0 : i32 to index
    %c3_137 = arith.constant 3 : index
    %471 = memref.load %arg2[%470, %c3_137] : memref<3x24xi32, #tpu.memory_space<smem>>
    %c0_i32_138 = arith.constant 0 : i32
    %472 = arith.cmpi sgt, %468, %c0_i32_138 : i32
    %473 = arith.extui %472 : i1 to i32
    %474 = arith.sitofp %473 : i32 to f32
    %475 = arith.index_cast %471 : i32 to index
    %c0_139 = arith.constant 0 : index
    %476 = vector.load %arg8[%475, %c0_139] : memref<40x128xf32, #tpu.memory_space<vmem>>, vector<1x128xf32>
    %477 = vector.broadcast %474 : f32 to vector<1x128xf32>
    %478 = arith.mulf %477, %476 : vector<1x128xf32>
    %479 = arith.addf %469, %478 : vector<1x128xf32>
    %480 = arith.index_cast %arg0 : i32 to index
    %c4_140 = arith.constant 4 : index
    %481 = memref.load %arg2[%480, %c4_140] : memref<3x24xi32, #tpu.memory_space<smem>>
    %c1_i32_141 = arith.constant 1 : i32
    %482 = arith.cmpi sgt, %468, %c1_i32_141 : i32
    %483 = arith.extui %482 : i1 to i32
    %484 = arith.sitofp %483 : i32 to f32
    %485 = arith.index_cast %481 : i32 to index
    %c0_142 = arith.constant 0 : index
    %486 = vector.load %arg8[%485, %c0_142] : memref<40x128xf32, #tpu.memory_space<vmem>>, vector<1x128xf32>
    %487 = vector.broadcast %484 : f32 to vector<1x128xf32>
    %488 = arith.mulf %487, %486 : vector<1x128xf32>
    %489 = arith.addf %479, %488 : vector<1x128xf32>
    %490 = arith.index_cast %arg0 : i32 to index
    %c5_143 = arith.constant 5 : index
    %491 = memref.load %arg2[%490, %c5_143] : memref<3x24xi32, #tpu.memory_space<smem>>
    %c2_i32_144 = arith.constant 2 : i32
    %492 = arith.cmpi sgt, %468, %c2_i32_144 : i32
    %493 = arith.extui %492 : i1 to i32
    %494 = arith.sitofp %493 : i32 to f32
    %495 = arith.index_cast %491 : i32 to index
    %c0_145 = arith.constant 0 : index
    %496 = vector.load %arg8[%495, %c0_145] : memref<40x128xf32, #tpu.memory_space<vmem>>, vector<1x128xf32>
    %497 = vector.broadcast %494 : f32 to vector<1x128xf32>
    %498 = arith.mulf %497, %496 : vector<1x128xf32>
    %499 = arith.addf %489, %498 : vector<1x128xf32>
    %c1_i32_146 = arith.constant 1 : i32
    %500 = arith.maxsi %468, %c1_i32_146 : i32
    %501 = arith.sitofp %500 : i32 to f32
    %cst_147 = arith.constant 1.000000e+00 : f32
    %502 = arith.divf %cst_147, %501 : f32
    %503 = vector.broadcast %502 : f32 to vector<1x128xf32>
    %504 = arith.mulf %499, %503 : vector<1x128xf32>
    %505 = arith.index_cast %arg0 : i32 to index
    %c2_148 = arith.constant 2 : index
    %506 = memref.load %arg5[%505, %c2_148] : memref<3x8xi32, #tpu.memory_space<smem>>
    %cst_149 = arith.constant 0.000000e+00 : f32
    %507 = vector.broadcast %cst_149 : f32 to vector<1x128xf32>
    %508 = arith.index_cast %arg0 : i32 to index
    %c6_150 = arith.constant 6 : index
    %509 = memref.load %arg2[%508, %c6_150] : memref<3x24xi32, #tpu.memory_space<smem>>
    %c0_i32_151 = arith.constant 0 : i32
    %510 = arith.cmpi sgt, %506, %c0_i32_151 : i32
    %511 = arith.extui %510 : i1 to i32
    %512 = arith.sitofp %511 : i32 to f32
    %513 = arith.index_cast %509 : i32 to index
    %c0_152 = arith.constant 0 : index
    %514 = vector.load %arg8[%513, %c0_152] : memref<40x128xf32, #tpu.memory_space<vmem>>, vector<1x128xf32>
    %515 = vector.broadcast %512 : f32 to vector<1x128xf32>
    %516 = arith.mulf %515, %514 : vector<1x128xf32>
    %517 = arith.addf %507, %516 : vector<1x128xf32>
    %518 = arith.index_cast %arg0 : i32 to index
    %c7_153 = arith.constant 7 : index
    %519 = memref.load %arg2[%518, %c7_153] : memref<3x24xi32, #tpu.memory_space<smem>>
    %c1_i32_154 = arith.constant 1 : i32
    %520 = arith.cmpi sgt, %506, %c1_i32_154 : i32
    %521 = arith.extui %520 : i1 to i32
    %522 = arith.sitofp %521 : i32 to f32
    %523 = arith.index_cast %519 : i32 to index
    %c0_155 = arith.constant 0 : index
    %524 = vector.load %arg8[%523, %c0_155] : memref<40x128xf32, #tpu.memory_space<vmem>>, vector<1x128xf32>
    %525 = vector.broadcast %522 : f32 to vector<1x128xf32>
    %526 = arith.mulf %525, %524 : vector<1x128xf32>
    %527 = arith.addf %517, %526 : vector<1x128xf32>
    %528 = arith.index_cast %arg0 : i32 to index
    %c8_156 = arith.constant 8 : index
    %529 = memref.load %arg2[%528, %c8_156] : memref<3x24xi32, #tpu.memory_space<smem>>
    %c2_i32_157 = arith.constant 2 : i32
    %530 = arith.cmpi sgt, %506, %c2_i32_157 : i32
    %531 = arith.extui %530 : i1 to i32
    %532 = arith.sitofp %531 : i32 to f32
    %533 = arith.index_cast %529 : i32 to index
    %c0_158 = arith.constant 0 : index
    %534 = vector.load %arg8[%533, %c0_158] : memref<40x128xf32, #tpu.memory_space<vmem>>, vector<1x128xf32>
    %535 = vector.broadcast %532 : f32 to vector<1x128xf32>
    %536 = arith.mulf %535, %534 : vector<1x128xf32>
    %537 = arith.addf %527, %536 : vector<1x128xf32>
    %c1_i32_159 = arith.constant 1 : i32
    %538 = arith.maxsi %506, %c1_i32_159 : i32
    %539 = arith.sitofp %538 : i32 to f32
    %cst_160 = arith.constant 1.000000e+00 : f32
    %540 = arith.divf %cst_160, %539 : f32
    %541 = vector.broadcast %540 : f32 to vector<1x128xf32>
    %542 = arith.mulf %537, %541 : vector<1x128xf32>
    %543 = arith.index_cast %arg0 : i32 to index
    %c3_161 = arith.constant 3 : index
    %544 = memref.load %arg5[%543, %c3_161] : memref<3x8xi32, #tpu.memory_space<smem>>
    %cst_162 = arith.constant 0.000000e+00 : f32
    %545 = vector.broadcast %cst_162 : f32 to vector<1x128xf32>
    %546 = arith.index_cast %arg0 : i32 to index
    %c9_163 = arith.constant 9 : index
    %547 = memref.load %arg2[%546, %c9_163] : memref<3x24xi32, #tpu.memory_space<smem>>
    %c0_i32_164 = arith.constant 0 : i32
    %548 = arith.cmpi sgt, %544, %c0_i32_164 : i32
    %549 = arith.extui %548 : i1 to i32
    %550 = arith.sitofp %549 : i32 to f32
    %551 = arith.index_cast %547 : i32 to index
    %c0_165 = arith.constant 0 : index
    %552 = vector.load %arg8[%551, %c0_165] : memref<40x128xf32, #tpu.memory_space<vmem>>, vector<1x128xf32>
    %553 = vector.broadcast %550 : f32 to vector<1x128xf32>
    %554 = arith.mulf %553, %552 : vector<1x128xf32>
    %555 = arith.addf %545, %554 : vector<1x128xf32>
    %556 = arith.index_cast %arg0 : i32 to index
    %c10_166 = arith.constant 10 : index
    %557 = memref.load %arg2[%556, %c10_166] : memref<3x24xi32, #tpu.memory_space<smem>>
    %c1_i32_167 = arith.constant 1 : i32
    %558 = arith.cmpi sgt, %544, %c1_i32_167 : i32
    %559 = arith.extui %558 : i1 to i32
    %560 = arith.sitofp %559 : i32 to f32
    %561 = arith.index_cast %557 : i32 to index
    %c0_168 = arith.constant 0 : index
    %562 = vector.load %arg8[%561, %c0_168] : memref<40x128xf32, #tpu.memory_space<vmem>>, vector<1x128xf32>
    %563 = vector.broadcast %560 : f32 to vector<1x128xf32>
    %564 = arith.mulf %563, %562 : vector<1x128xf32>
    %565 = arith.addf %555, %564 : vector<1x128xf32>
    %566 = arith.index_cast %arg0 : i32 to index
    %c11_169 = arith.constant 11 : index
    %567 = memref.load %arg2[%566, %c11_169] : memref<3x24xi32, #tpu.memory_space<smem>>
    %c2_i32_170 = arith.constant 2 : i32
    %568 = arith.cmpi sgt, %544, %c2_i32_170 : i32
    %569 = arith.extui %568 : i1 to i32
    %570 = arith.sitofp %569 : i32 to f32
    %571 = arith.index_cast %567 : i32 to index
    %c0_171 = arith.constant 0 : index
    %572 = vector.load %arg8[%571, %c0_171] : memref<40x128xf32, #tpu.memory_space<vmem>>, vector<1x128xf32>
    %573 = vector.broadcast %570 : f32 to vector<1x128xf32>
    %574 = arith.mulf %573, %572 : vector<1x128xf32>
    %575 = arith.addf %565, %574 : vector<1x128xf32>
    %c1_i32_172 = arith.constant 1 : i32
    %576 = arith.maxsi %544, %c1_i32_172 : i32
    %577 = arith.sitofp %576 : i32 to f32
    %cst_173 = arith.constant 1.000000e+00 : f32
    %578 = arith.divf %cst_173, %577 : f32
    %579 = vector.broadcast %578 : f32 to vector<1x128xf32>
    %580 = arith.mulf %575, %579 : vector<1x128xf32>
    %581 = arith.index_cast %arg0 : i32 to index
    %c4_174 = arith.constant 4 : index
    %582 = memref.load %arg5[%581, %c4_174] : memref<3x8xi32, #tpu.memory_space<smem>>
    %cst_175 = arith.constant 0.000000e+00 : f32
    %583 = vector.broadcast %cst_175 : f32 to vector<1x128xf32>
    %584 = arith.index_cast %arg0 : i32 to index
    %c12_176 = arith.constant 12 : index
    %585 = memref.load %arg2[%584, %c12_176] : memref<3x24xi32, #tpu.memory_space<smem>>
    %c0_i32_177 = arith.constant 0 : i32
    %586 = arith.cmpi sgt, %582, %c0_i32_177 : i32
    %587 = arith.extui %586 : i1 to i32
    %588 = arith.sitofp %587 : i32 to f32
    %589 = arith.index_cast %585 : i32 to index
    %c0_178 = arith.constant 0 : index
    %590 = vector.load %arg8[%589, %c0_178] : memref<40x128xf32, #tpu.memory_space<vmem>>, vector<1x128xf32>
    %591 = vector.broadcast %588 : f32 to vector<1x128xf32>
    %592 = arith.mulf %591, %590 : vector<1x128xf32>
    %593 = arith.addf %583, %592 : vector<1x128xf32>
    %594 = arith.index_cast %arg0 : i32 to index
    %c13_179 = arith.constant 13 : index
    %595 = memref.load %arg2[%594, %c13_179] : memref<3x24xi32, #tpu.memory_space<smem>>
    %c1_i32_180 = arith.constant 1 : i32
    %596 = arith.cmpi sgt, %582, %c1_i32_180 : i32
    %597 = arith.extui %596 : i1 to i32
    %598 = arith.sitofp %597 : i32 to f32
    %599 = arith.index_cast %595 : i32 to index
    %c0_181 = arith.constant 0 : index
    %600 = vector.load %arg8[%599, %c0_181] : memref<40x128xf32, #tpu.memory_space<vmem>>, vector<1x128xf32>
    %601 = vector.broadcast %598 : f32 to vector<1x128xf32>
    %602 = arith.mulf %601, %600 : vector<1x128xf32>
    %603 = arith.addf %593, %602 : vector<1x128xf32>
    %604 = arith.index_cast %arg0 : i32 to index
    %c14_182 = arith.constant 14 : index
    %605 = memref.load %arg2[%604, %c14_182] : memref<3x24xi32, #tpu.memory_space<smem>>
    %c2_i32_183 = arith.constant 2 : i32
    %606 = arith.cmpi sgt, %582, %c2_i32_183 : i32
    %607 = arith.extui %606 : i1 to i32
    %608 = arith.sitofp %607 : i32 to f32
    %609 = arith.index_cast %605 : i32 to index
    %c0_184 = arith.constant 0 : index
    %610 = vector.load %arg8[%609, %c0_184] : memref<40x128xf32, #tpu.memory_space<vmem>>, vector<1x128xf32>
    %611 = vector.broadcast %608 : f32 to vector<1x128xf32>
    %612 = arith.mulf %611, %610 : vector<1x128xf32>
    %613 = arith.addf %603, %612 : vector<1x128xf32>
    %c1_i32_185 = arith.constant 1 : i32
    %614 = arith.maxsi %582, %c1_i32_185 : i32
    %615 = arith.sitofp %614 : i32 to f32
    %cst_186 = arith.constant 1.000000e+00 : f32
    %616 = arith.divf %cst_186, %615 : f32
    %617 = vector.broadcast %616 : f32 to vector<1x128xf32>
    %618 = arith.mulf %613, %617 : vector<1x128xf32>
    %619 = arith.index_cast %arg0 : i32 to index
    %c5_187 = arith.constant 5 : index
    %620 = memref.load %arg5[%619, %c5_187] : memref<3x8xi32, #tpu.memory_space<smem>>
    %cst_188 = arith.constant 0.000000e+00 : f32
    %621 = vector.broadcast %cst_188 : f32 to vector<1x128xf32>
    %622 = arith.index_cast %arg0 : i32 to index
    %c15_189 = arith.constant 15 : index
    %623 = memref.load %arg2[%622, %c15_189] : memref<3x24xi32, #tpu.memory_space<smem>>
    %c0_i32_190 = arith.constant 0 : i32
    %624 = arith.cmpi sgt, %620, %c0_i32_190 : i32
    %625 = arith.extui %624 : i1 to i32
    %626 = arith.sitofp %625 : i32 to f32
    %627 = arith.index_cast %623 : i32 to index
    %c0_191 = arith.constant 0 : index
    %628 = vector.load %arg8[%627, %c0_191] : memref<40x128xf32, #tpu.memory_space<vmem>>, vector<1x128xf32>
    %629 = vector.broadcast %626 : f32 to vector<1x128xf32>
    %630 = arith.mulf %629, %628 : vector<1x128xf32>
    %631 = arith.addf %621, %630 : vector<1x128xf32>
    %632 = arith.index_cast %arg0 : i32 to index
    %c16_192 = arith.constant 16 : index
    %633 = memref.load %arg2[%632, %c16_192] : memref<3x24xi32, #tpu.memory_space<smem>>
    %c1_i32_193 = arith.constant 1 : i32
    %634 = arith.cmpi sgt, %620, %c1_i32_193 : i32
    %635 = arith.extui %634 : i1 to i32
    %636 = arith.sitofp %635 : i32 to f32
    %637 = arith.index_cast %633 : i32 to index
    %c0_194 = arith.constant 0 : index
    %638 = vector.load %arg8[%637, %c0_194] : memref<40x128xf32, #tpu.memory_space<vmem>>, vector<1x128xf32>
    %639 = vector.broadcast %636 : f32 to vector<1x128xf32>
    %640 = arith.mulf %639, %638 : vector<1x128xf32>
    %641 = arith.addf %631, %640 : vector<1x128xf32>
    %642 = arith.index_cast %arg0 : i32 to index
    %c17_195 = arith.constant 17 : index
    %643 = memref.load %arg2[%642, %c17_195] : memref<3x24xi32, #tpu.memory_space<smem>>
    %c2_i32_196 = arith.constant 2 : i32
    %644 = arith.cmpi sgt, %620, %c2_i32_196 : i32
    %645 = arith.extui %644 : i1 to i32
    %646 = arith.sitofp %645 : i32 to f32
    %647 = arith.index_cast %643 : i32 to index
    %c0_197 = arith.constant 0 : index
    %648 = vector.load %arg8[%647, %c0_197] : memref<40x128xf32, #tpu.memory_space<vmem>>, vector<1x128xf32>
    %649 = vector.broadcast %646 : f32 to vector<1x128xf32>
    %650 = arith.mulf %649, %648 : vector<1x128xf32>
    %651 = arith.addf %641, %650 : vector<1x128xf32>
    %c1_i32_198 = arith.constant 1 : i32
    %652 = arith.maxsi %620, %c1_i32_198 : i32
    %653 = arith.sitofp %652 : i32 to f32
    %cst_199 = arith.constant 1.000000e+00 : f32
    %654 = arith.divf %cst_199, %653 : f32
    %655 = vector.broadcast %654 : f32 to vector<1x128xf32>
    %656 = arith.mulf %651, %655 : vector<1x128xf32>
    %657 = arith.index_cast %arg0 : i32 to index
    %c6_200 = arith.constant 6 : index
    %658 = memref.load %arg5[%657, %c6_200] : memref<3x8xi32, #tpu.memory_space<smem>>
    %cst_201 = arith.constant 0.000000e+00 : f32
    %659 = vector.broadcast %cst_201 : f32 to vector<1x128xf32>
    %660 = arith.index_cast %arg0 : i32 to index
    %c18_202 = arith.constant 18 : index
    %661 = memref.load %arg2[%660, %c18_202] : memref<3x24xi32, #tpu.memory_space<smem>>
    %c0_i32_203 = arith.constant 0 : i32
    %662 = arith.cmpi sgt, %658, %c0_i32_203 : i32
    %663 = arith.extui %662 : i1 to i32
    %664 = arith.sitofp %663 : i32 to f32
    %665 = arith.index_cast %661 : i32 to index
    %c0_204 = arith.constant 0 : index
    %666 = vector.load %arg8[%665, %c0_204] : memref<40x128xf32, #tpu.memory_space<vmem>>, vector<1x128xf32>
    %667 = vector.broadcast %664 : f32 to vector<1x128xf32>
    %668 = arith.mulf %667, %666 : vector<1x128xf32>
    %669 = arith.addf %659, %668 : vector<1x128xf32>
    %670 = arith.index_cast %arg0 : i32 to index
    %c19_205 = arith.constant 19 : index
    %671 = memref.load %arg2[%670, %c19_205] : memref<3x24xi32, #tpu.memory_space<smem>>
    %c1_i32_206 = arith.constant 1 : i32
    %672 = arith.cmpi sgt, %658, %c1_i32_206 : i32
    %673 = arith.extui %672 : i1 to i32
    %674 = arith.sitofp %673 : i32 to f32
    %675 = arith.index_cast %671 : i32 to index
    %c0_207 = arith.constant 0 : index
    %676 = vector.load %arg8[%675, %c0_207] : memref<40x128xf32, #tpu.memory_space<vmem>>, vector<1x128xf32>
    %677 = vector.broadcast %674 : f32 to vector<1x128xf32>
    %678 = arith.mulf %677, %676 : vector<1x128xf32>
    %679 = arith.addf %669, %678 : vector<1x128xf32>
    %680 = arith.index_cast %arg0 : i32 to index
    %c20_208 = arith.constant 20 : index
    %681 = memref.load %arg2[%680, %c20_208] : memref<3x24xi32, #tpu.memory_space<smem>>
    %c2_i32_209 = arith.constant 2 : i32
    %682 = arith.cmpi sgt, %658, %c2_i32_209 : i32
    %683 = arith.extui %682 : i1 to i32
    %684 = arith.sitofp %683 : i32 to f32
    %685 = arith.index_cast %681 : i32 to index
    %c0_210 = arith.constant 0 : index
    %686 = vector.load %arg8[%685, %c0_210] : memref<40x128xf32, #tpu.memory_space<vmem>>, vector<1x128xf32>
    %687 = vector.broadcast %684 : f32 to vector<1x128xf32>
    %688 = arith.mulf %687, %686 : vector<1x128xf32>
    %689 = arith.addf %679, %688 : vector<1x128xf32>
    %c1_i32_211 = arith.constant 1 : i32
    %690 = arith.maxsi %658, %c1_i32_211 : i32
    %691 = arith.sitofp %690 : i32 to f32
    %cst_212 = arith.constant 1.000000e+00 : f32
    %692 = arith.divf %cst_212, %691 : f32
    %693 = vector.broadcast %692 : f32 to vector<1x128xf32>
    %694 = arith.mulf %689, %693 : vector<1x128xf32>
    %695 = arith.index_cast %arg0 : i32 to index
    %c7_213 = arith.constant 7 : index
    %696 = memref.load %arg5[%695, %c7_213] : memref<3x8xi32, #tpu.memory_space<smem>>
    %cst_214 = arith.constant 0.000000e+00 : f32
    %697 = vector.broadcast %cst_214 : f32 to vector<1x128xf32>
    %698 = arith.index_cast %arg0 : i32 to index
    %c21_215 = arith.constant 21 : index
    %699 = memref.load %arg2[%698, %c21_215] : memref<3x24xi32, #tpu.memory_space<smem>>
    %c0_i32_216 = arith.constant 0 : i32
    %700 = arith.cmpi sgt, %696, %c0_i32_216 : i32
    %701 = arith.extui %700 : i1 to i32
    %702 = arith.sitofp %701 : i32 to f32
    %703 = arith.index_cast %699 : i32 to index
    %c0_217 = arith.constant 0 : index
    %704 = vector.load %arg8[%703, %c0_217] : memref<40x128xf32, #tpu.memory_space<vmem>>, vector<1x128xf32>
    %705 = vector.broadcast %702 : f32 to vector<1x128xf32>
    %706 = arith.mulf %705, %704 : vector<1x128xf32>
    %707 = arith.addf %697, %706 : vector<1x128xf32>
    %708 = arith.index_cast %arg0 : i32 to index
    %c22_218 = arith.constant 22 : index
    %709 = memref.load %arg2[%708, %c22_218] : memref<3x24xi32, #tpu.memory_space<smem>>
    %c1_i32_219 = arith.constant 1 : i32
    %710 = arith.cmpi sgt, %696, %c1_i32_219 : i32
    %711 = arith.extui %710 : i1 to i32
    %712 = arith.sitofp %711 : i32 to f32
    %713 = arith.index_cast %709 : i32 to index
    %c0_220 = arith.constant 0 : index
    %714 = vector.load %arg8[%713, %c0_220] : memref<40x128xf32, #tpu.memory_space<vmem>>, vector<1x128xf32>
    %715 = vector.broadcast %712 : f32 to vector<1x128xf32>
    %716 = arith.mulf %715, %714 : vector<1x128xf32>
    %717 = arith.addf %707, %716 : vector<1x128xf32>
    %718 = arith.index_cast %arg0 : i32 to index
    %c23_221 = arith.constant 23 : index
    %719 = memref.load %arg2[%718, %c23_221] : memref<3x24xi32, #tpu.memory_space<smem>>
    %c2_i32_222 = arith.constant 2 : i32
    %720 = arith.cmpi sgt, %696, %c2_i32_222 : i32
    %721 = arith.extui %720 : i1 to i32
    %722 = arith.sitofp %721 : i32 to f32
    %723 = arith.index_cast %719 : i32 to index
    %c0_223 = arith.constant 0 : index
    %724 = vector.load %arg8[%723, %c0_223] : memref<40x128xf32, #tpu.memory_space<vmem>>, vector<1x128xf32>
    %725 = vector.broadcast %722 : f32 to vector<1x128xf32>
    %726 = arith.mulf %725, %724 : vector<1x128xf32>
    %727 = arith.addf %717, %726 : vector<1x128xf32>
    %c1_i32_224 = arith.constant 1 : i32
    %728 = arith.maxsi %696, %c1_i32_224 : i32
    %729 = arith.sitofp %728 : i32 to f32
    %cst_225 = arith.constant 1.000000e+00 : f32
    %730 = arith.divf %cst_225, %729 : f32
    %731 = vector.broadcast %730 : f32 to vector<1x128xf32>
    %732 = arith.mulf %727, %731 : vector<1x128xf32>
    %733 = tpu.concatenate %466, %504, %542, %580, %618, %656, %694, %732 in 0 : vector<1x128xf32>, vector<1x128xf32>, vector<1x128xf32>, vector<1x128xf32>, vector<1x128xf32>, vector<1x128xf32>, vector<1x128xf32>, vector<1x128xf32> -> vector<8x128xf32>
    %734 = arith.truncf %733 : vector<8x128xf32> to vector<8x128xbf16>
    %c1_226 = arith.constant 1 : index
    %c0_227 = arith.constant 0 : index
    %c0_228 = arith.constant 0 : index
    %735 = vector.load %arg10[%c1_226, %c0_227, %c0_228] : memref<2x128x128xbf16, #tpu.memory_space<vmem>>, vector<1x128x128xbf16>
    %736 = vector.shape_cast %735 : vector<1x128x128xbf16> to vector<128x128xbf16>
    %cst_229 = arith.constant dense<0.000000e+00> : vector<8x128xf32>
    %737 = tpu.matmul %734, %736, %cst_229 {dimension_numbers = #tpu.dot_dimension_numbers<[1], [0], [0], [1], [0, 0, 1, 1], [], []>} : vector<8x128xbf16>, vector<128x128xbf16>, vector<8x128xf32> -> vector<8x128xf32>
    %c1_230 = arith.constant 1 : index
    %c0_231 = arith.constant 0 : index
    %c0_232 = arith.constant 0 : index
    %738 = vector.load %arg11[%c1_230, %c0_231, %c0_232] : memref<2x1x128xf32, #tpu.memory_space<vmem>>, vector<1x1x128xf32>
    %739 = vector.shape_cast %738 : vector<1x1x128xf32> to vector<1x128xf32>
    %740 = vector.broadcast %739 : vector<1x128xf32> to vector<8x128xf32>
    %741 = arith.addf %737, %740 : vector<8x128xf32>
    %742 = math.tanh %741 : vector<8x128xf32>
    %743 = arith.truncf %742 : vector<8x128xf32> to vector<8x128xbf16>
    %c1_233 = arith.constant 1 : index
    %c0_234 = arith.constant 0 : index
    %c0_235 = arith.constant 0 : index
    %744 = vector.load %arg12[%c1_233, %c0_234, %c0_235] : memref<2x128x128xbf16, #tpu.memory_space<vmem>>, vector<1x128x128xbf16>
    %745 = vector.shape_cast %744 : vector<1x128x128xbf16> to vector<128x128xbf16>
    %cst_236 = arith.constant dense<0.000000e+00> : vector<8x128xf32>
    %746 = tpu.matmul %743, %745, %cst_236 {dimension_numbers = #tpu.dot_dimension_numbers<[1], [0], [0], [1], [0, 0, 1, 1], [], []>} : vector<8x128xbf16>, vector<128x128xbf16>, vector<8x128xf32> -> vector<8x128xf32>
    %c1_237 = arith.constant 1 : index
    %c0_238 = arith.constant 0 : index
    %c0_239 = arith.constant 0 : index
    %747 = vector.load %arg13[%c1_237, %c0_238, %c0_239] : memref<2x1x128xf32, #tpu.memory_space<vmem>>, vector<1x1x128xf32>
    %748 = vector.shape_cast %747 : vector<1x1x128xf32> to vector<1x128xf32>
    %749 = vector.broadcast %748 : vector<1x128xf32> to vector<8x128xf32>
    %750 = arith.addf %746, %749 : vector<8x128xf32>
    %751 = math.tanh %750 : vector<8x128xf32>
    %752 = arith.truncf %751 : vector<8x128xf32> to vector<8x128xbf16>
    %c1_240 = arith.constant 1 : index
    %c0_241 = arith.constant 0 : index
    %c0_242 = arith.constant 0 : index
    %753 = vector.load %arg14[%c1_240, %c0_241, %c0_242] : memref<2x128x128xbf16, #tpu.memory_space<vmem>>, vector<1x128x128xbf16>
    %754 = vector.shape_cast %753 : vector<1x128x128xbf16> to vector<128x128xbf16>
    %cst_243 = arith.constant dense<0.000000e+00> : vector<8x128xf32>
    %755 = tpu.matmul %752, %754, %cst_243 {dimension_numbers = #tpu.dot_dimension_numbers<[1], [0], [0], [1], [0, 0, 1, 1], [], []>} : vector<8x128xbf16>, vector<128x128xbf16>, vector<8x128xf32> -> vector<8x128xf32>
    %c1_244 = arith.constant 1 : index
    %c0_245 = arith.constant 0 : index
    %c0_246 = arith.constant 0 : index
    %756 = vector.load %arg15[%c1_244, %c0_245, %c0_246] : memref<2x1x128xf32, #tpu.memory_space<vmem>>, vector<1x1x128xf32>
    %757 = vector.shape_cast %756 : vector<1x1x128xf32> to vector<1x128xf32>
    %758 = vector.broadcast %757 : vector<1x128xf32> to vector<8x128xf32>
    %759 = arith.addf %755, %758 : vector<8x128xf32>
    %760 = math.tanh %759 : vector<8x128xf32>
    %761 = arith.truncf %760 : vector<8x128xf32> to vector<8x128xbf16>
    %c1_247 = arith.constant 1 : index
    %c0_248 = arith.constant 0 : index
    %c0_249 = arith.constant 0 : index
    %762 = vector.load %arg16[%c1_247, %c0_248, %c0_249] : memref<2x128x128xbf16, #tpu.memory_space<vmem>>, vector<1x128x128xbf16>
    %763 = vector.shape_cast %762 : vector<1x128x128xbf16> to vector<128x128xbf16>
    %cst_250 = arith.constant dense<0.000000e+00> : vector<8x128xf32>
    %764 = tpu.matmul %761, %763, %cst_250 {dimension_numbers = #tpu.dot_dimension_numbers<[1], [0], [0], [1], [0, 0, 1, 1], [], []>} : vector<8x128xbf16>, vector<128x128xbf16>, vector<8x128xf32> -> vector<8x128xf32>
    %c1_251 = arith.constant 1 : index
    %c0_252 = arith.constant 0 : index
    %c0_253 = arith.constant 0 : index
    %765 = vector.load %arg17[%c1_251, %c0_252, %c0_253] : memref<2x1x128xf32, #tpu.memory_space<vmem>>, vector<1x1x128xf32>
    %766 = vector.shape_cast %765 : vector<1x1x128xf32> to vector<1x128xf32>
    %767 = vector.broadcast %766 : vector<1x128xf32> to vector<8x128xf32>
    %768 = arith.addf %764, %767 : vector<8x128xf32>
    %769 = arith.negf %768 : vector<8x128xf32>
    %770 = math.exp %769 : vector<8x128xf32>
    %cst_254 = arith.constant 1.000000e+00 : f32
    %771 = vector.broadcast %cst_254 : f32 to vector<8x128xf32>
    %772 = arith.addf %771, %770 : vector<8x128xf32>
    %773 = arith.divf %771, %772 : vector<8x128xf32>
    %774 = tpu.concatenate %428, %773 in 1 : vector<8x128xf32>, vector<8x128xf32> -> vector<8x256xf32>
    %775 = arith.index_cast %arg0 : i32 to index
    %c0_255 = arith.constant 0 : index
    %776 = memref.load %arg3[%775, %c0_255] : memref<3x8xi32, #tpu.memory_space<smem>>
    %c0_i32_256 = arith.constant 0 : i32
    %777 = arith.cmpi sgt, %3, %c0_i32_256 : i32
    %778 = arith.extui %777 : i1 to i32
    %779 = arith.sitofp %778 : i32 to f32
    %780 = arith.index_cast %776 : i32 to index
    %c0_257 = arith.constant 0 : index
    %781 = vector.load %arg9[%780, %c0_257] : memref<32x256xf32, #tpu.memory_space<vmem>>, vector<1x256xf32>
    %782 = vector.broadcast %779 : f32 to vector<1x256xf32>
    %783 = arith.mulf %782, %781 : vector<1x256xf32>
    %784 = arith.index_cast %arg0 : i32 to index
    %c1_258 = arith.constant 1 : index
    %785 = memref.load %arg3[%784, %c1_258] : memref<3x8xi32, #tpu.memory_space<smem>>
    %c1_i32_259 = arith.constant 1 : i32
    %786 = arith.cmpi sgt, %3, %c1_i32_259 : i32
    %787 = arith.extui %786 : i1 to i32
    %788 = arith.sitofp %787 : i32 to f32
    %789 = arith.index_cast %785 : i32 to index
    %c0_260 = arith.constant 0 : index
    %790 = vector.load %arg9[%789, %c0_260] : memref<32x256xf32, #tpu.memory_space<vmem>>, vector<1x256xf32>
    %791 = vector.broadcast %788 : f32 to vector<1x256xf32>
    %792 = arith.mulf %791, %790 : vector<1x256xf32>
    %793 = arith.index_cast %arg0 : i32 to index
    %c2_261 = arith.constant 2 : index
    %794 = memref.load %arg3[%793, %c2_261] : memref<3x8xi32, #tpu.memory_space<smem>>
    %c2_i32_262 = arith.constant 2 : i32
    %795 = arith.cmpi sgt, %3, %c2_i32_262 : i32
    %796 = arith.extui %795 : i1 to i32
    %797 = arith.sitofp %796 : i32 to f32
    %798 = arith.index_cast %794 : i32 to index
    %c0_263 = arith.constant 0 : index
    %799 = vector.load %arg9[%798, %c0_263] : memref<32x256xf32, #tpu.memory_space<vmem>>, vector<1x256xf32>
    %800 = vector.broadcast %797 : f32 to vector<1x256xf32>
    %801 = arith.mulf %800, %799 : vector<1x256xf32>
    %802 = arith.index_cast %arg0 : i32 to index
    %c3_264 = arith.constant 3 : index
    %803 = memref.load %arg3[%802, %c3_264] : memref<3x8xi32, #tpu.memory_space<smem>>
    %c3_i32_265 = arith.constant 3 : i32
    %804 = arith.cmpi sgt, %3, %c3_i32_265 : i32
    %805 = arith.extui %804 : i1 to i32
    %806 = arith.sitofp %805 : i32 to f32
    %807 = arith.index_cast %803 : i32 to index
    %c0_266 = arith.constant 0 : index
    %808 = vector.load %arg9[%807, %c0_266] : memref<32x256xf32, #tpu.memory_space<vmem>>, vector<1x256xf32>
    %809 = vector.broadcast %806 : f32 to vector<1x256xf32>
    %810 = arith.mulf %809, %808 : vector<1x256xf32>
    %811 = arith.index_cast %arg0 : i32 to index
    %c4_267 = arith.constant 4 : index
    %812 = memref.load %arg3[%811, %c4_267] : memref<3x8xi32, #tpu.memory_space<smem>>
    %c4_i32 = arith.constant 4 : i32
    %813 = arith.cmpi sgt, %3, %c4_i32 : i32
    %814 = arith.extui %813 : i1 to i32
    %815 = arith.sitofp %814 : i32 to f32
    %816 = arith.index_cast %812 : i32 to index
    %c0_268 = arith.constant 0 : index
    %817 = vector.load %arg9[%816, %c0_268] : memref<32x256xf32, #tpu.memory_space<vmem>>, vector<1x256xf32>
    %818 = vector.broadcast %815 : f32 to vector<1x256xf32>
    %819 = arith.mulf %818, %817 : vector<1x256xf32>
    %820 = arith.index_cast %arg0 : i32 to index
    %c5_269 = arith.constant 5 : index
    %821 = memref.load %arg3[%820, %c5_269] : memref<3x8xi32, #tpu.memory_space<smem>>
    %c5_i32 = arith.constant 5 : i32
    %822 = arith.cmpi sgt, %3, %c5_i32 : i32
    %823 = arith.extui %822 : i1 to i32
    %824 = arith.sitofp %823 : i32 to f32
    %825 = arith.index_cast %821 : i32 to index
    %c0_270 = arith.constant 0 : index
    %826 = vector.load %arg9[%825, %c0_270] : memref<32x256xf32, #tpu.memory_space<vmem>>, vector<1x256xf32>
    %827 = vector.broadcast %824 : f32 to vector<1x256xf32>
    %828 = arith.mulf %827, %826 : vector<1x256xf32>
    %829 = arith.index_cast %arg0 : i32 to index
    %c6_271 = arith.constant 6 : index
    %830 = memref.load %arg3[%829, %c6_271] : memref<3x8xi32, #tpu.memory_space<smem>>
    %c6_i32 = arith.constant 6 : i32
    %831 = arith.cmpi sgt, %3, %c6_i32 : i32
    %832 = arith.extui %831 : i1 to i32
    %833 = arith.sitofp %832 : i32 to f32
    %834 = arith.index_cast %830 : i32 to index
    %c0_272 = arith.constant 0 : index
    %835 = vector.load %arg9[%834, %c0_272] : memref<32x256xf32, #tpu.memory_space<vmem>>, vector<1x256xf32>
    %836 = vector.broadcast %833 : f32 to vector<1x256xf32>
    %837 = arith.mulf %836, %835 : vector<1x256xf32>
    %838 = arith.index_cast %arg0 : i32 to index
    %c7_273 = arith.constant 7 : index
    %839 = memref.load %arg3[%838, %c7_273] : memref<3x8xi32, #tpu.memory_space<smem>>
    %c7_i32 = arith.constant 7 : i32
    %840 = arith.cmpi sgt, %3, %c7_i32 : i32
    %841 = arith.extui %840 : i1 to i32
    %842 = arith.sitofp %841 : i32 to f32
    %843 = arith.index_cast %839 : i32 to index
    %c0_274 = arith.constant 0 : index
    %844 = vector.load %arg9[%843, %c0_274] : memref<32x256xf32, #tpu.memory_space<vmem>>, vector<1x256xf32>
    %845 = vector.broadcast %842 : f32 to vector<1x256xf32>
    %846 = arith.mulf %845, %844 : vector<1x256xf32>
    %847 = tpu.concatenate %783, %792, %801, %810, %819, %828, %837, %846 in 0 : vector<1x256xf32>, vector<1x256xf32>, vector<1x256xf32>, vector<1x256xf32>, vector<1x256xf32>, vector<1x256xf32>, vector<1x256xf32>, vector<1x256xf32> -> vector<8x256xf32>
    %848 = arith.truncf %774 : vector<8x256xf32> to vector<8x256xbf16>
    %849 = arith.truncf %847 : vector<8x256xf32> to vector<8x256xbf16>
    %cst_275 = arith.constant dense<0.000000e+00> : vector<8x8xf32>
    %850 = tpu.matmul %848, %849, %cst_275 {dimension_numbers = #tpu.dot_dimension_numbers<[1], [1], [0], [0], [0, 0, 1, 0], [], []>} : vector<8x256xbf16>, vector<8x256xbf16>, vector<8x8xf32> -> vector<8x8xf32>
    %851 = tpu.iota {dimensions = array<i32: 1>} : vector<8x8xi32>
    %852 = tpu.iota {dimensions = array<i32: 0>} : vector<8x8xi32>
    %853 = vector.broadcast %3 : i32 to vector<8x8xi32>
    %854 = arith.cmpi slt, %851, %853 : vector<8x8xi32>
    %cst_276 = arith.constant -1.000000e+30 : f32
    %855 = vector.broadcast %cst_276 : f32 to vector<8x8xf32>
    %856 = arith.select %854, %850, %855 : vector<8x8xi1>, vector<8x8xf32>
    %cst_277 = arith.constant dense<0xFF800000> : vector<8xf32>
    %857 = vector.multi_reduction <maximumf>, %856, %cst_277 [1] : vector<8x8xf32> to vector<8xf32>
    %858 = vector.shape_cast %857 : vector<8xf32> to vector<8x1xf32>
    %859 = vector.broadcast %858 : vector<8x1xf32> to vector<8x8xf32>
    %860 = arith.subf %856, %859 : vector<8x8xf32>
    %861 = math.exp %860 : vector<8x8xf32>
    %cst_278 = arith.constant dense<0.000000e+00> : vector<8xf32>
    %862 = vector.multi_reduction <add>, %861, %cst_278 [1] : vector<8x8xf32> to vector<8xf32>
    %863 = vector.shape_cast %862 : vector<8xf32> to vector<8x1xf32>
    %864 = math.log %863 : vector<8x1xf32>
    %865 = vector.broadcast %864 : vector<8x1xf32> to vector<8x8xf32>
    %866 = arith.subf %860, %865 : vector<8x8xf32>
    %c0_279 = arith.constant 0 : index
    %c0_280 = arith.constant 0 : index
    %c0_281 = arith.constant 0 : index
    %867 = vector.load %arg18[%c0_279, %c0_280, %c0_281] : memref<1x8x8xf32, #tpu.memory_space<vmem>>, vector<1x8x8xf32>
    %868 = vector.shape_cast %867 : vector<1x8x8xf32> to vector<8x8xf32>
    %869 = vector.shape_cast %866 : vector<8x8xf32> to vector<1x8x8xf32>
    tpu.vector_store %arg18[%c0_279, %c0_280, %c0_281], %869 {strides = array<i32>} : memref<1x8x8xf32, #tpu.memory_space<vmem>>, vector<1x8x8xf32>,
    %870 = vector.broadcast %1 : i32 to vector<8x8xi32>
    %871 = arith.cmpi slt, %852, %870 : vector<8x8xi32>
    %872 = vector.broadcast %3 : i32 to vector<8x8xi32>
    %873 = arith.cmpi slt, %851, %872 : vector<8x8xi32>
    %874 = arith.andi %871, %873 : vector<8x8xi1>
    %cst_282 = arith.constant 0.000000e+00 : f32
    %875 = vector.broadcast %cst_282 : f32 to vector<8x8xf32>
    %876 = arith.select %874, %866, %875 : vector<8x8xi1>, vector<8x8xf32>
    %877 = arith.truncf %876 : vector<8x8xf32> to vector<8x8xbf16>
    %878 = arith.truncf %774 : vector<8x256xf32> to vector<8x256xbf16>
    %cst_283 = arith.constant dense<0.000000e+00> : vector<8x256xf32>
    %879 = tpu.matmul %877, %878, %cst_283 {dimension_numbers = #tpu.dot_dimension_numbers<[0], [0], [1], [1], [0, 1, 1, 1], [], []>} : vector<8x8xbf16>, vector<8x256xbf16>, vector<8x256xf32> -> vector<8x256xf32>
    %880 = arith.addf %879, %847 : vector<8x256xf32>
    %c0_284 = arith.constant 0 : index
    %c0_285 = arith.constant 0 : index
    %c0_286 = arith.constant 0 : index
    %881 = vector.load %arg19[%c0_284, %c0_285, %c0_286] : memref<1x8x256xf32, #tpu.memory_space<vmem>>, vector<1x8x256xf32>
    %882 = vector.shape_cast %881 : vector<1x8x256xf32> to vector<8x256xf32>
    %883 = vector.shape_cast %880 : vector<8x256xf32> to vector<1x8x256xf32>
    tpu.vector_store %arg19[%c0_284, %c0_285, %c0_286], %883 {strides = array<i32>} : memref<1x8x256xf32, #tpu.memory_space<vmem>>, vector<1x8x256xf32>,
    return
  }
  func.func @transform_0(%arg0: i32, %arg1: memref<3x32xi32, #tpu.memory_space<smem>>, %arg2: memref<3x24xi32, #tpu.memory_space<smem>>, %arg3: memref<3x8xi32, #tpu.memory_space<smem>>, %arg4: memref<3x8xi32, #tpu.memory_space<smem>>, %arg5: memref<3x8xi32, #tpu.memory_space<smem>>, %arg6: memref<3x2xi32, #tpu.memory_space<smem>>) -> (i32, i32) {
    %c0_i32 = arith.constant 0 : i32
    %c0_i32_0 = arith.constant 0 : i32
    %c0_i32_1 = arith.constant 0 : i32
    return %c0_i32, %c0_i32_0 : i32, i32
  }
  func.func @transform_1(%arg0: i32, %arg1: memref<3x32xi32, #tpu.memory_space<smem>>, %arg2: memref<3x24xi32, #tpu.memory_space<smem>>, %arg3: memref<3x8xi32, #tpu.memory_space<smem>>, %arg4: memref<3x8xi32, #tpu.memory_space<smem>>, %arg5: memref<3x8xi32, #tpu.memory_space<smem>>, %arg6: memref<3x2xi32, #tpu.memory_space<smem>>) -> (i32, i32) {
    %c0_i32 = arith.constant 0 : i32
    %c0_i32_0 = arith.constant 0 : i32
    %c0_i32_1 = arith.constant 0 : i32
    return %c0_i32, %c0_i32_0 : i32, i32
  }
  func.func @transform_2(%arg0: i32, %arg1: memref<3x32xi32, #tpu.memory_space<smem>>, %arg2: memref<3x24xi32, #tpu.memory_space<smem>>, %arg3: memref<3x8xi32, #tpu.memory_space<smem>>, %arg4: memref<3x8xi32, #tpu.memory_space<smem>>, %arg5: memref<3x8xi32, #tpu.memory_space<smem>>, %arg6: memref<3x2xi32, #tpu.memory_space<smem>>) -> (i32, i32) {
    %c0_i32 = arith.constant 0 : i32
    %c0_i32_0 = arith.constant 0 : i32
    %c0_i32_1 = arith.constant 0 : i32
    return %c0_i32, %c0_i32_0 : i32, i32
  }
  func.func @transform_3(%arg0: i32, %arg1: memref<3x32xi32, #tpu.memory_space<smem>>, %arg2: memref<3x24xi32, #tpu.memory_space<smem>>, %arg3: memref<3x8xi32, #tpu.memory_space<smem>>, %arg4: memref<3x8xi32, #tpu.memory_space<smem>>, %arg5: memref<3x8xi32, #tpu.memory_space<smem>>, %arg6: memref<3x2xi32, #tpu.memory_space<smem>>) -> (i32, i32, i32) {
    %c0_i32 = arith.constant 0 : i32
    %c0_i32_0 = arith.constant 0 : i32
    %c0_i32_1 = arith.constant 0 : i32
    %c0_i32_2 = arith.constant 0 : i32
    return %c0_i32, %c0_i32_0, %c0_i32_1 : i32, i32, i32
  }
  func.func @transform_4(%arg0: i32, %arg1: memref<3x32xi32, #tpu.memory_space<smem>>, %arg2: memref<3x24xi32, #tpu.memory_space<smem>>, %arg3: memref<3x8xi32, #tpu.memory_space<smem>>, %arg4: memref<3x8xi32, #tpu.memory_space<smem>>, %arg5: memref<3x8xi32, #tpu.memory_space<smem>>, %arg6: memref<3x2xi32, #tpu.memory_space<smem>>) -> (i32, i32, i32) {
    %c0_i32 = arith.constant 0 : i32
    %c0_i32_0 = arith.constant 0 : i32
    %c0_i32_1 = arith.constant 0 : i32
    %c0_i32_2 = arith.constant 0 : i32
    return %c0_i32, %c0_i32_0, %c0_i32_1 : i32, i32, i32
  }
  func.func @transform_5(%arg0: i32, %arg1: memref<3x32xi32, #tpu.memory_space<smem>>, %arg2: memref<3x24xi32, #tpu.memory_space<smem>>, %arg3: memref<3x8xi32, #tpu.memory_space<smem>>, %arg4: memref<3x8xi32, #tpu.memory_space<smem>>, %arg5: memref<3x8xi32, #tpu.memory_space<smem>>, %arg6: memref<3x2xi32, #tpu.memory_space<smem>>) -> (i32, i32, i32) {
    %c0_i32 = arith.constant 0 : i32
    %c0_i32_0 = arith.constant 0 : i32
    %c0_i32_1 = arith.constant 0 : i32
    %c0_i32_2 = arith.constant 0 : i32
    return %c0_i32, %c0_i32_0, %c0_i32_1 : i32, i32, i32
  }
  func.func @transform_6(%arg0: i32, %arg1: memref<3x32xi32, #tpu.memory_space<smem>>, %arg2: memref<3x24xi32, #tpu.memory_space<smem>>, %arg3: memref<3x8xi32, #tpu.memory_space<smem>>, %arg4: memref<3x8xi32, #tpu.memory_space<smem>>, %arg5: memref<3x8xi32, #tpu.memory_space<smem>>, %arg6: memref<3x2xi32, #tpu.memory_space<smem>>) -> (i32, i32, i32) {
    %c0_i32 = arith.constant 0 : i32
    %c0_i32_0 = arith.constant 0 : i32
    %c0_i32_1 = arith.constant 0 : i32
    %c0_i32_2 = arith.constant 0 : i32
    return %c0_i32, %c0_i32_0, %c0_i32_1 : i32, i32, i32
  }
  func.func @transform_7(%arg0: i32, %arg1: memref<3x32xi32, #tpu.memory_space<smem>>, %arg2: memref<3x24xi32, #tpu.memory_space<smem>>, %arg3: memref<3x8xi32, #tpu.memory_space<smem>>, %arg4: memref<3x8xi32, #tpu.memory_space<smem>>, %arg5: memref<3x8xi32, #tpu.memory_space<smem>>, %arg6: memref<3x2xi32, #tpu.memory_space<smem>>) -> (i32, i32, i32) {
    %c0_i32 = arith.constant 0 : i32
    %c0_i32_0 = arith.constant 0 : i32
    %c0_i32_1 = arith.constant 0 : i32
    %c0_i32_2 = arith.constant 0 : i32
    return %c0_i32, %c0_i32_0, %c0_i32_1 : i32, i32, i32
  }
  func.func @transform_8(%arg0: i32, %arg1: memref<3x32xi32, #tpu.memory_space<smem>>, %arg2: memref<3x24xi32, #tpu.memory_space<smem>>, %arg3: memref<3x8xi32, #tpu.memory_space<smem>>, %arg4: memref<3x8xi32, #tpu.memory_space<smem>>, %arg5: memref<3x8xi32, #tpu.memory_space<smem>>, %arg6: memref<3x2xi32, #tpu.memory_space<smem>>) -> (i32, i32, i32) {
    %c0_i32 = arith.constant 0 : i32
    %c0_i32_0 = arith.constant 0 : i32
    %c0_i32_1 = arith.constant 0 : i32
    %c0_i32_2 = arith.constant 0 : i32
    return %c0_i32, %c0_i32_0, %c0_i32_1 : i32, i32, i32
  }
  func.func @transform_9(%arg0: i32, %arg1: memref<3x32xi32, #tpu.memory_space<smem>>, %arg2: memref<3x24xi32, #tpu.memory_space<smem>>, %arg3: memref<3x8xi32, #tpu.memory_space<smem>>, %arg4: memref<3x8xi32, #tpu.memory_space<smem>>, %arg5: memref<3x8xi32, #tpu.memory_space<smem>>, %arg6: memref<3x2xi32, #tpu.memory_space<smem>>) -> (i32, i32, i32) {
    %c0_i32 = arith.constant 0 : i32
    %c0_i32_0 = arith.constant 0 : i32
    %c0_i32_1 = arith.constant 0 : i32
    %c0_i32_2 = arith.constant 0 : i32
    return %c0_i32, %c0_i32_0, %c0_i32_1 : i32, i32, i32
  }
  func.func @transform_10(%arg0: i32, %arg1: memref<3x32xi32, #tpu.memory_space<smem>>, %arg2: memref<3x24xi32, #tpu.memory_space<smem>>, %arg3: memref<3x8xi32, #tpu.memory_space<smem>>, %arg4: memref<3x8xi32, #tpu.memory_space<smem>>, %arg5: memref<3x8xi32, #tpu.memory_space<smem>>, %arg6: memref<3x2xi32, #tpu.memory_space<smem>>) -> (i32, i32, i32) {
    %c0_i32 = arith.constant 0 : i32
    %c0_i32_0 = arith.constant 0 : i32
    %c0_i32_1 = arith.constant 0 : i32
    %c0_i32_2 = arith.constant 0 : i32
    return %c0_i32, %c0_i32_0, %c0_i32_1 : i32, i32, i32
  }
  func.func @transform_11(%arg0: i32, %arg1: memref<3x32xi32, #tpu.memory_space<smem>>, %arg2: memref<3x24xi32, #tpu.memory_space<smem>>, %arg3: memref<3x8xi32, #tpu.memory_space<smem>>, %arg4: memref<3x8xi32, #tpu.memory_space<smem>>, %arg5: memref<3x8xi32, #tpu.memory_space<smem>>, %arg6: memref<3x2xi32, #tpu.memory_space<smem>>) -> (i32, i32, i32) {
    %c0_i32 = arith.constant 0 : i32
    %c0_i32_0 = arith.constant 0 : i32
    %c0_i32_1 = arith.constant 0 : i32
    return %arg0, %c0_i32, %c0_i32_0 : i32, i32, i32
  }
  func.func @transform_12(%arg0: i32, %arg1: memref<3x32xi32, #tpu.memory_space<smem>>, %arg2: memref<3x24xi32, #tpu.memory_space<smem>>, %arg3: memref<3x8xi32, #tpu.memory_space<smem>>, %arg4: memref<3x8xi32, #tpu.memory_space<smem>>, %arg5: memref<3x8xi32, #tpu.memory_space<smem>>, %arg6: memref<3x2xi32, #tpu.memory_space<smem>>) -> (i32, i32, i32) {
    %c0_i32 = arith.constant 0 : i32
    %c0_i32_0 = arith.constant 0 : i32
    %c0_i32_1 = arith.constant 0 : i32
    return %arg0, %c0_i32, %c0_i32_0 : i32, i32, i32
  }
}

</mosaic_0001>

<llo_original>
// kernel: health_status_update_batch.1
$region0: #{health_status_update_batch.1}
  #allocation0 [shape = 'u32[]', space=smem, size = 0x4, offset = 0x4, fixed_abs, tag = 'smem constant byte address 0x4 - core index']
  #allocation1 [shape = 'u32[144,128]{1,0:T(1,128)}', space=vmem, size = 0x12000, scoped, tag = 'internal scratch']
  #allocation2 [shape = 's32[1]{0}', space=sflag, size = 0x4, scoped, tag = 'scoped memory for health_status_update_batch.1']
  #allocation3 [shape = 'u8[2048]{0}', space=smem, size = 0x800, scoped, tag = 'prefetched SMEM operand 0']
  #allocation4 [shape = 'u8[2048]{0}', space=smem, size = 0x800, scoped, tag = 'prefetched SMEM operand 1']
  #allocation5 [shape = 'u8[2048]{0}', space=smem, size = 0x800, scoped, tag = 'prefetched SMEM operand 2']
  #allocation6 [shape = 'u8[2048]{0}', space=smem, size = 0x800, scoped, tag = 'prefetched SMEM operand 3']
  #allocation7 [shape = 'u8[2048]{0}', space=smem, size = 0x800, scoped, tag = 'prefetched SMEM operand 4']
  #allocation8 [shape = 'u8[2048]{0}', space=smem, size = 0x800, scoped, tag = 'prefetched SMEM operand 5']
  %s0 = inlined_call_operand.vmem [shape: s32[3,32], index: 0, kind: input, shape index: {}]
  %s1 = inlined_call_operand.vmem [shape: s32[3,24], index: 1, kind: input, shape index: {}]
  %s2 = inlined_call_operand.vmem [shape: s32[3,8], index: 2, kind: input, shape index: {}]
  %s3 = inlined_call_operand.vmem [shape: s32[3,8], index: 3, kind: input, shape index: {}]
  %s4 = inlined_call_operand.vmem [shape: s32[3,8], index: 4, kind: input, shape index: {}]
  %s5 = inlined_call_operand.vmem [shape: s32[3,2], index: 5, kind: input, shape index: {}]
  %s6 = inlined_call_operand.hbm [shape: f32[56,128], index: 6, kind: input, shape index: {}]
  %s7 = inlined_call_operand.hbm [shape: f32[40,128], index: 7, kind: input, shape index: {}]
  %s8 = inlined_call_operand.vmem [shape: f32[32,256], index: 8, kind: input, shape index: {}]
  %s9 = inlined_call_operand.vmem [shape: bf16[2,128,128], index: 9, kind: input, shape index: {}]
  %s10 = inlined_call_operand.hbm [shape: f32[2,1,128], index: 10, kind: input, shape index: {}]
  %s11 = inlined_call_operand.vmem [shape: bf16[2,128,128], index: 11, kind: input, shape index: {}]
  %s12 = inlined_call_operand.hbm [shape: f32[2,1,128], index: 12, kind: input, shape index: {}]
  %s13 = inlined_call_operand.hbm [shape: bf16[2,128,128], index: 13, kind: input, shape index: {}]
  %s14 = inlined_call_operand.hbm [shape: f32[2,1,128], index: 14, kind: input, shape index: {}]
  %s15 = inlined_call_operand.hbm [shape: bf16[2,128,128], index: 15, kind: input, shape index: {}]
  %s16 = inlined_call_operand.hbm [shape: f32[2,1,128], index: 16, kind: input, shape index: {}]
  %s17 = inlined_call_operand.vmem [shape: f32[3,8,8], index: 17, kind: output, shape index: {0}]
  %s18 = inlined_call_operand.vmem [shape: f32[3,8,256], index: 18, kind: output, shape index: {1}]
  %19 = xla_tuple %s17, %s18
  %s20 = sld [smem:[#allocation0]]
  $region117: #{health_status_update_batch.1} parent=0
    _
  %s22 = ssub.s32 1, %s20
  %s23 = scalar_select 0, %s22, %s20
  %s24 = sshll.u32 %s0, 4
  %s25 = int_to_ptr.vmem [resolvable:$true] %s24
  %27 = dma.vmem_to_smem %s25, 64, [#allocation3], [#allocation2]
  %s28 = sshll.u32 %s1, 4
  %s29 = int_to_ptr.vmem [resolvable:$true] %s28
  %31 = dma.vmem_to_smem %s29, 64, [#allocation4], [#allocation2]
  %s32 = sshll.u32 %s2, 4
  %s33 = int_to_ptr.vmem [resolvable:$true] %s32
  %35 = dma.vmem_to_smem %s33, 64, [#allocation5], [#allocation2]
  %s36 = sshll.u32 %s3, 4
  %s37 = int_to_ptr.vmem [resolvable:$true] %s36
  %39 = dma.vmem_to_smem %s37, 64, [#allocation6], [#allocation2]
  %s40 = sshll.u32 %s4, 4
  %s41 = int_to_ptr.vmem [resolvable:$true] %s40
  %43 = dma.vmem_to_smem %s41, 64, [#allocation7], [#allocation2]
  %s44 = sshll.u32 %s5, 4
  %s45 = int_to_ptr.vmem [resolvable:$true] %s44
  %47 = dma.vmem_to_smem %s45, 64, [#allocation8], [#allocation2]
  %48 = dma.done [#allocation2], 384
  %49 = sfence
  $region1: #{health_status_update_batch.1} parent=0
    #allocation9 [shape = 'u8[28672]{0}', space=vmem, size = 0x7000, scoped, tag = 'input window, operand 6, single buffered']
    #allocation10 [shape = 's32[2]{0}', space=sflag, size = 0x8, scoped, tag = 'scoped memory for health_status_update_batch.1']
    #allocation11 [shape = 'u8[20480]{0}', space=vmem, size = 0x5000, scoped, tag = 'input window, operand 7, single buffered']
    #allocation12 [shape = 's32[1]{0}', space=sflag, size = 0x4, scoped, tag = 'scoped memory for health_status_update_batch.1']
    #allocation13 [shape = 'u8[1024]{0}', space=vmem, size = 0x400, scoped, tag = 'input window, operand 10, single buffered']
    #allocation14 [shape = 'u8[1024]{0}', space=vmem, size = 0x400, scoped, tag = 'input window, operand 12, single buffered']
    #allocation15 [shape = 's32[1]{0}', space=sflag, size = 0x4, scoped, tag = 'scoped memory for health_status_update_batch.1']
    #allocation16 [shape = 'u8[65536]{0}', space=vmem, size = 0x10000, scoped, tag = 'input window, operand 13, single buffered']
    #allocation17 [shape = 'u8[1024]{0}', space=vmem, size = 0x400, scoped, tag = 'input window, operand 14, single buffered']
    #allocation18 [shape = 's32[1]{0}', space=sflag, size = 0x4, scoped, tag = 'scoped memory for health_status_update_batch.1']
    #allocation19 [shape = 'u8[65536]{0}', space=vmem, size = 0x10000, scoped, tag = 'input window, operand 15, single buffered']
    #allocation20 [shape = 'u8[1024]{0}', space=vmem, size = 0x400, scoped, tag = 'input window, operand 16, single buffered']
    #allocation21 [shape = 's32[1]{0}', space=sflag, size = 0x4, scoped, tag = 'scoped memory for health_status_update_batch.1']
    %50 = vsyncpa [#allocation10], 0
    %51 = vsyncpa [#allocation12], 0
    %52 = vsyncpa [#allocation15], 0
    %53 = vsyncpa [#allocation18], 0
    %54 = vsyncpa [#allocation21], 0
    loop: start=0, step=1, limit=5
    $region2: #{health_status_update_batch.1} parent=1 // loop_pre_header
      _
    $region3: #{health_status_update_batch.1} parent=1 // loop_header
      %s56 = sphi 0, %s60
      %p57 = scmp.ge.s32.totalorder %s56, 5
      %s64 = sphi 0, %s64
      %s66 = sphi 0, %s64
      %s67 = sphi 0, %s66
      %s81 = sphi 0, %s67
      %s85 = sphi 0, %s85
      %s87 = sphi 0, %s85
      %s88 = sphi 0, %s87
      %s102 = sphi 0, %s88
      %s106 = sphi 0, %s106
      %s108 = sphi 0, %s106
      %s109 = sphi 0, %s108
      %s123 = sphi 0, %s109
      %s127 = sphi 0, %s127
      %s129 = sphi 0, %s127
      %s130 = sphi 0, %s129
      %s144 = sphi 0, %s130
      %s148 = sphi 0, %s148
      %s150 = sphi 0, %s148
      %s151 = sphi 0, %s150
      %s165 = sphi 0, %s151
      %s169 = sphi 0, %s169
      %s171 = sphi 0, %s169
      %s172 = sphi 0, %s171
      %s186 = sphi 0, %s172
      %s190 = sphi 0, %s190
      %s192 = sphi 0, %s190
      %s193 = sphi 0, %s192
      %s207 = sphi 0, %s193
      %s211 = sphi 0, %s211
      %s213 = sphi 0, %s211
      %s214 = sphi 0, %s213
      %s228 = sphi 0, %s214
      %s232 = sphi 0, %s232
      %s234 = sphi 0, %s232
      %s235 = sphi 0, %s234
      %s249 = sphi 0, %s235
      %s253 = sphi 0, %s253
      %s255 = sphi 0, %s253
      %s256 = sphi 0, %s255
      %s270 = sphi 0, %s256
      %s274 = sphi 0, %s274
      %s276 = sphi 0, %s274
      %s277 = sphi 0, %s276
      %s291 = sphi 0, %s277
      %s297 = sphi 0, %s299
      %s300 = sphi 0, %s297
      %s301 = sphi 0, %s300
      %s317 = sphi 0, %s301
      %s323 = sphi 0, %s325
      %s326 = sphi 0, %s323
      %s327 = sphi 0, %s326
      %s343 = sphi 0, %s327
    $region4: #{health_status_update_batch.1} parent=1 // loop_header_branch
      %59 = sbr.rel (%p57) target = $region8
    $region5: #{health_status_update_batch.1} parent=1 // loop_body
      %s61 = ssub.s32 %s56, 1
      %s62 = ssub.s32 %s56, 2
      %s63 = sadd.s32 %s56, 1
      %s65 = sadd.s32 %s64, 1
      %p68 = scmp.eq.s32.totalorder %s56, 2
      %p69 = scmp.ne.s32.totalorder %s64, %s66
      %p70 = scmp.eq.s32.totalorder %s56, 0
      %p71 = por %p69, %p70
      %p72 = scmp.ne.s32.totalorder %s64, %s66
      %p73 = scmp.eq.s32.totalorder %s61, 2
      %p74 = por %p72, %p73
      %p75 = scmp.ne.s32.totalorder %s66, %s67
      %p76 = scmp.eq.s32.totalorder %s61, 0
      %p77 = por %p75, %p76
      %p78 = scmp.ne.s32.totalorder %s66, %s67
      %p79 = scmp.eq.s32.totalorder %s62, 2
      %p80 = por %p78, %p79
      %p82 = scmp.ne.s32.totalorder %s67, %s81
      %p83 = scmp.eq.s32.totalorder %s62, 0
      %p84 = por %p82, %p83
      %s86 = sadd.s32 %s85, 1
      %p89 = scmp.eq.s32.totalorder %s56, 2
      %p90 = scmp.ne.s32.totalorder %s85, %s87
      %p91 = scmp.eq.s32.totalorder %s56, 0
      %p92 = por %p90, %p91
      %p93 = scmp.ne.s32.totalorder %s85, %s87
      %p94 = scmp.eq.s32.totalorder %s61, 2
      %p95 = por %p93, %p94
      %p96 = scmp.ne.s32.totalorder %s87, %s88
      %p97 = scmp.eq.s32.totalorder %s61, 0
      %p98 = por %p96, %p97
      %p99 = scmp.ne.s32.totalorder %s87, %s88
      %p100 = scmp.eq.s32.totalorder %s62, 2
      %p101 = por %p99, %p100
      %p103 = scmp.ne.s32.totalorder %s88, %s102
      %p104 = scmp.eq.s32.totalorder %s62, 0
      %p105 = por %p103, %p104
      %s107 = sadd.s32 %s106, 1
      %p110 = scmp.eq.s32.totalorder %s56, 2
      %p111 = scmp.ne.s32.totalorder %s106, %s108
      %p112 = scmp.eq.s32.totalorder %s56, 0
      %p113 = por %p111, %p112
      %p114 = scmp.ne.s32.totalorder %s106, %s108
      %p115 = scmp.eq.s32.totalorder %s61, 2
      %p116 = por %p114, %p115
      %p117 = scmp.ne.s32.totalorder %s108, %s109
      %p118 = scmp.eq.s32.totalorder %s61, 0
      %p119 = por %p117, %p118
      %p120 = scmp.ne.s32.totalorder %s108, %s109
      %p121 = scmp.eq.s32.totalorder %s62, 2
      %p122 = por %p120, %p121
      %p124 = scmp.ne.s32.totalorder %s109, %s123
      %p125 = scmp.eq.s32.totalorder %s62, 0
      %p126 = por %p124, %p125
      %s128 = sadd.s32 %s127, 1
      %p131 = scmp.eq.s32.totalorder %s56, 2
      %p132 = scmp.ne.s32.totalorder %s127, %s129
      %p133 = scmp.eq.s32.totalorder %s56, 0
      %p134 = por %p132, %p133
      %p135 = scmp.ne.s32.totalorder %s127, %s129
      %p136 = scmp.eq.s32.totalorder %s61, 2
      %p137 = por %p135, %p136
      %p138 = scmp.ne.s32.totalorder %s129, %s130
      %p139 = scmp.eq.s32.totalorder %s61, 0
      %p140 = por %p138, %p139
      %p141 = scmp.ne.s32.totalorder %s129, %s130
      %p142 = scmp.eq.s32.totalorder %s62, 2
      %p143 = por %p141, %p142
      %p145 = scmp.ne.s32.totalorder %s130, %s144
      %p146 = scmp.eq.s32.totalorder %s62, 0
      %p147 = por %p145, %p146
      %s149 = sadd.s32 %s148, 1
      %p152 = scmp.eq.s32.totalorder %s56, 2
      %p153 = scmp.ne.s32.totalorder %s148, %s150
      %p154 = scmp.eq.s32.totalorder %s56, 0
      %p155 = por %p153, %p154
      %p156 = scmp.ne.s32.totalorder %s148, %s150
      %p157 = scmp.eq.s32.totalorder %s61, 2
      %p158 = por %p156, %p157
      %p159 = scmp.ne.s32.totalorder %s150, %s151
      %p160 = scmp.eq.s32.totalorder %s61, 0
      %p161 = por %p159, %p160
      %p162 = scmp.ne.s32.totalorder %s150, %s151
      %p163 = scmp.eq.s32.totalorder %s62, 2
      %p164 = por %p162, %p163
      %p166 = scmp.ne.s32.totalorder %s151, %s165
      %p167 = scmp.eq.s32.totalorder %s62, 0
      %p168 = por %p166, %p167
      %s170 = sadd.s32 %s169, 1
      %p173 = scmp.eq.s32.totalorder %s56, 2
      %p174 = scmp.ne.s32.totalorder %s169, %s171
      %p175 = scmp.eq.s32.totalorder %s56, 0
      %p176 = por %p174, %p175
      %p177 = scmp.ne.s32.totalorder %s169, %s171
      %p178 = scmp.eq.s32.totalorder %s61, 2
      %p179 = por %p177, %p178
      %p180 = scmp.ne.s32.totalorder %s171, %s172
      %p181 = scmp.eq.s32.totalorder %s61, 0
      %p182 = por %p180, %p181
      %p183 = scmp.ne.s32.totalorder %s171, %s172
      %p184 = scmp.eq.s32.totalorder %s62, 2
      %p185 = por %p183, %p184
      %p187 = scmp.ne.s32.totalorder %s172, %s186
      %p188 = scmp.eq.s32.totalorder %s62, 0
      %p189 = por %p187, %p188
      %s191 = sadd.s32 %s190, 1
      %p194 = scmp.eq.s32.totalorder %s56, 2
      %p195 = scmp.ne.s32.totalorder %s190, %s192
      %p196 = scmp.eq.s32.totalorder %s56, 0
      %p197 = por %p195, %p196
      %p198 = scmp.ne.s32.totalorder %s190, %s192
      %p199 = scmp.eq.s32.totalorder %s61, 2
      %p200 = por %p198, %p199
      %p201 = scmp.ne.s32.totalorder %s192, %s193
      %p202 = scmp.eq.s32.totalorder %s61, 0
      %p203 = por %p201, %p202
      %p204 = scmp.ne.s32.totalorder %s192, %s193
      %p205 = scmp.eq.s32.totalorder %s62, 2
      %p206 = por %p204, %p205
      %p208 = scmp.ne.s32.totalorder %s193, %s207
      %p209 = scmp.eq.s32.totalorder %s62, 0
      %p210 = por %p208, %p209
      %s212 = sadd.s32 %s211, 1
      %p215 = scmp.eq.s32.totalorder %s56, 2
      %p216 = scmp.ne.s32.totalorder %s211, %s213
      %p217 = scmp.eq.s32.totalorder %s56, 0
      %p218 = por %p216, %p217
      %p219 = scmp.ne.s32.totalorder %s211, %s213
      %p220 = scmp.eq.s32.totalorder %s61, 2
      %p221 = por %p219, %p220
      %p222 = scmp.ne.s32.totalorder %s213, %s214
      %p223 = scmp.eq.s32.totalorder %s61, 0
      %p224 = por %p222, %p223
      %p225 = scmp.ne.s32.totalorder %s213, %s214
      %p226 = scmp.eq.s32.totalorder %s62, 2
      %p227 = por %p225, %p226
      %p229 = scmp.ne.s32.totalorder %s214, %s228
      %p230 = scmp.eq.s32.totalorder %s62, 0
      %p231 = por %p229, %p230
      %s233 = sadd.s32 %s232, 1
      %p236 = scmp.eq.s32.totalorder %s56, 2
      %p237 = scmp.ne.s32.totalorder %s232, %s234
      %p238 = scmp.eq.s32.totalorder %s56, 0
      %p239 = por %p237, %p238
      %p240 = scmp.ne.s32.totalorder %s232, %s234
      %p241 = scmp.eq.s32.totalorder %s61, 2
      %p242 = por %p240, %p241
      %p243 = scmp.ne.s32.totalorder %s234, %s235
      %p244 = scmp.eq.s32.totalorder %s61, 0
      %p245 = por %p243, %p244
      %p246 = scmp.ne.s32.totalorder %s234, %s235
      %p247 = scmp.eq.s32.totalorder %s62, 2
      %p248 = por %p246, %p247
      %p250 = scmp.ne.s32.totalorder %s235, %s249
      %p251 = scmp.eq.s32.totalorder %s62, 0
      %p252 = por %p250, %p251
      %s254 = sadd.s32 %s253, 1
      %p257 = scmp.eq.s32.totalorder %s56, 2
      %p258 = scmp.ne.s32.totalorder %s253, %s255
      %p259 = scmp.eq.s32.totalorder %s56, 0
      %p260 = por %p258, %p259
      %p261 = scmp.ne.s32.totalorder %s253, %s255
      %p262 = scmp.eq.s32.totalorder %s61, 2
      %p263 = por %p261, %p262
      %p264 = scmp.ne.s32.totalorder %s255, %s256
      %p265 = scmp.eq.s32.totalorder %s61, 0
      %p266 = por %p264, %p265
      %p267 = scmp.ne.s32.totalorder %s255, %s256
      %p268 = scmp.eq.s32.totalorder %s62, 2
      %p269 = por %p267, %p268
      %p271 = scmp.ne.s32.totalorder %s256, %s270
      %p272 = scmp.eq.s32.totalorder %s62, 0
      %p273 = por %p271, %p272
      %s275 = sadd.s32 %s274, 1
      %p278 = scmp.eq.s32.totalorder %s56, 2
      %p279 = scmp.ne.s32.totalorder %s274, %s276
      %p280 = scmp.eq.s32.totalorder %s56, 0
      %p281 = por %p279, %p280
      %p282 = scmp.ne.s32.totalorder %s274, %s276
      %p283 = scmp.eq.s32.totalorder %s61, 2
      %p284 = por %p282, %p283
      %p285 = scmp.ne.s32.totalorder %s276, %s277
      %p286 = scmp.eq.s32.totalorder %s61, 0
      %p287 = por %p285, %p286
      %p288 = scmp.ne.s32.totalorder %s276, %s277
      %p289 = scmp.eq.s32.totalorder %s62, 2
      %p290 = por %p288, %p289
      %p292 = scmp.ne.s32.totalorder %s277, %s291
      %p293 = scmp.eq.s32.totalorder %s62, 0
      %p294 = por %p292, %p293
      %s295 = ssub.s32 %s56, %s63
      %p296 = scmp.eq.s32.totalorder %s295, 0
      %s298 = sadd.s32 %s297, 1
      %s299 = scalar_select %p296, %s297, %s298
      %p302 = pneg %p296
      %p303 = scmp.eq.s32.totalorder %s56, 2
      %p304 = por %p302, %p303
      %p305 = scmp.ne.s32.totalorder %s297, %s300
      %p306 = scmp.eq.s32.totalorder %s56, 0
      %p307 = por %p305, %p306
      %p308 = scmp.ne.s32.totalorder %s297, %s300
      %p309 = scmp.eq.s32.totalorder %s61, 2
      %p310 = por %p308, %p309
      %p311 = scmp.ne.s32.totalorder %s300, %s301
      %p312 = scmp.eq.s32.totalorder %s61, 0
      %p313 = por %p311, %p312
      %p314 = scmp.ne.s32.totalorder %s300, %s301
      %p315 = scmp.eq.s32.totalorder %s62, 2
      %p316 = por %p314, %p315
      %p318 = scmp.ne.s32.totalorder %s301, %s317
      %p319 = scmp.eq.s32.totalorder %s62, 0
      %p320 = por %p318, %p319
      %s321 = ssub.s32 %s56, %s63
      %p322 = scmp.eq.s32.totalorder %s321, 0
      %s324 = sadd.s32 %s323, 1
      %s325 = scalar_select %p322, %s323, %s324
      %p328 = pneg %p322
      %p329 = scmp.eq.s32.totalorder %s56, 2
      %p330 = por %p328, %p329
      %p331 = scmp.ne.s32.totalorder %s323, %s326
      %p332 = scmp.eq.s32.totalorder %s56, 0
      %p333 = por %p331, %p332
      %p334 = scmp.ne.s32.totalorder %s323, %s326
      %p335 = scmp.eq.s32.totalorder %s61, 2
      %p336 = por %p334, %p335
      %p337 = scmp.ne.s32.totalorder %s326, %s327
      %p338 = scmp.eq.s32.totalorder %s61, 0
      %p339 = por %p337, %p338
      %p340 = scmp.ne.s32.totalorder %s326, %s327
      %p341 = scmp.eq.s32.totalorder %s62, 2
      %p342 = por %p340, %p341
      %p344 = scmp.ne.s32.totalorder %s327, %s343
      %p345 = scmp.eq.s32.totalorder %s62, 0
      %p346 = por %p344, %p345
      %p347 = scmp.le.s32.totalorder 1, %s56
      %p348 = scmp.lt.s32.totalorder %s56, 4
      %p349 = pnand %p347, %p348
      %p350 = pneg %p349
      // Predicated region
      $region9: #{health_status_update_batch.1} parent=5 // pred_check
        _
      $region10: #{health_status_update_batch.1} parent=5 // pred_check_branch
        %352 = sbr.rel (%p349) target = $region12
      $region11: #{health_status_update_batch.1} parent=5 // pred_region
        %s353 = ssub.s32 %s56, 1
        // Predicated region
        $region13: #{health_status_update_batch.1} parent=11 // pred_check
          %p354 = pneg %p77
        $region14: #{health_status_update_batch.1} parent=11 // pred_check_branch
          %356 = sbr.rel (%p354) target = $region16
        $region15: #{health_status_update_batch.1} parent=11 // pred_region
          %s358 = ssub.s32 896, 896
          %359 = vsyncadd [#allocation10], %s358
          %s360 = sshll.u32 [#allocation9], 4
          %s361 = int_to_ptr.vmem [resolvable:$true] %s360
          %366 = dma.hbm_to_vmem [thread:$0]  %s6, 896, %s361, [#allocation10], 128, 128, 8
        $region16: #{health_status_update_batch.1} parent=11 // pred_fallthru
          _
        // Predicated region
        $region17: #{health_status_update_batch.1} parent=11 // pred_check
          %p367 = pneg %p98
        $region18: #{health_status_update_batch.1} parent=11 // pred_check_branch
          %369 = sbr.rel (%p367) target = $region20
        $region19: #{health_status_update_batch.1} parent=11 // pred_region
          %s371 = ssub.s32 640, 640
          %372 = vsyncadd [#allocation12], %s371
          %s373 = sshll.u32 [#allocation11], 4
          %s374 = int_to_ptr.vmem [resolvable:$true] %s373
          %379 = dma.hbm_to_vmem [thread:$0]  %s7, 640, %s374, [#allocation12], 128, 128, 8
        $region20: #{health_status_update_batch.1} parent=11 // pred_fallthru
          _
        // Predicated region
        $region21: #{health_status_update_batch.1} parent=11 // pred_check
          %p380 = pneg %p119
        $region22: #{health_status_update_batch.1} parent=11 // pred_check_branch
          %382 = sbr.rel (%p380) target = $region24
        $region23: #{health_status_update_batch.1} parent=11 // pred_region
          _
        $region24: #{health_status_update_batch.1} parent=11 // pred_fallthru
          _
        // Predicated region
        $region25: #{health_status_update_batch.1} parent=11 // pred_check
          %p383 = pneg %p140
        $region26: #{health_status_update_batch.1} parent=11 // pred_check_branch
          %385 = sbr.rel (%p383) target = $region28
        $region27: #{health_status_update_batch.1} parent=11 // pred_region
          _
        $region28: #{health_status_update_batch.1} parent=11 // pred_fallthru
          _
        // Predicated region
        $region29: #{health_status_update_batch.1} parent=11 // pred_check
          %p386 = pneg %p161
        $region30: #{health_status_update_batch.1} parent=11 // pred_check_branch
          %388 = sbr.rel (%p386) target = $region32
        $region31: #{health_status_update_batch.1} parent=11 // pred_region
          %s390 = ssub.s32 32, 32
          %391 = vsyncadd [#allocation12], %s390
          %s392 = sshll.u32 [#allocation13], 4
          %s393 = int_to_ptr.vmem [resolvable:$true] %s392
          %398 = dma.hbm_to_vmem [thread:$0]  %s10, 32, %s393, [#allocation12], 16, 16, 1
        $region32: #{health_status_update_batch.1} parent=11 // pred_fallthru
          _
        // Predicated region
        $region33: #{health_status_update_batch.1} parent=11 // pred_check
          %p399 = pneg %p182
        $region34: #{health_status_update_batch.1} parent=11 // pred_check_branch
          %401 = sbr.rel (%p399) target = $region36
        $region35: #{health_status_update_batch.1} parent=11 // pred_region
          _
        $region36: #{health_status_update_batch.1} parent=11 // pred_fallthru
          _
        // Predicated region
        $region37: #{health_status_update_batch.1} parent=11 // pred_check
          %p402 = pneg %p203
        $region38: #{health_status_update_batch.1} parent=11 // pred_check_branch
          %404 = sbr.rel (%p402) target = $region40
        $region39: #{health_status_update_batch.1} parent=11 // pred_region
          %s406 = ssub.s32 32, 32
          %407 = vsyncadd [#allocation15], %s406
          %s408 = sshll.u32 [#allocation14], 4
          %s409 = int_to_ptr.vmem [resolvable:$true] %s408
          %414 = dma.hbm_to_vmem [thread:$0]  %s12, 32, %s409, [#allocation15], 16, 16, 1
        $region40: #{health_status_update_batch.1} parent=11 // pred_fallthru
          _
        // Predicated region
        $region41: #{health_status_update_batch.1} parent=11 // pred_check
          %p415 = pneg %p224
        $region42: #{health_status_update_batch.1} parent=11 // pred_check_branch
          %417 = sbr.rel (%p415) target = $region44
        $region43: #{health_status_update_batch.1} parent=11 // pred_region
          %s419 = ssub.s32 2048, 2048
          %420 = vsyncadd [#allocation15], %s419
          %s421 = sshll.u32 [#allocation16], 4
          %s422 = int_to_ptr.vmem [resolvable:$true] %s421
          %427 = dma.hbm_to_vmem [thread:$0]  %s13, 2048, %s422, [#allocation15], 64, 64, 4
        $region44: #{health_status_update_batch.1} parent=11 // pred_fallthru
          _
        // Predicated region
        $region45: #{health_status_update_batch.1} parent=11 // pred_check
          %p428 = pneg %p245
        $region46: #{health_status_update_batch.1} parent=11 // pred_check_branch
          %430 = sbr.rel (%p428) target = $region48
        $region47: #{health_status_update_batch.1} parent=11 // pred_region
          %s432 = ssub.s32 32, 32
          %433 = vsyncadd [#allocation18], %s432
          %s434 = sshll.u32 [#allocation17], 4
          %s435 = int_to_ptr.vmem [resolvable:$true] %s434
          %440 = dma.hbm_to_vmem [thread:$0]  %s14, 32, %s435, [#allocation18], 16, 16, 1
        $region48: #{health_status_update_batch.1} parent=11 // pred_fallthru
          _
        // Predicated region
        $region49: #{health_status_update_batch.1} parent=11 // pred_check
          %p441 = pneg %p266
        $region50: #{health_status_update_batch.1} parent=11 // pred_check_branch
          %443 = sbr.rel (%p441) target = $region52
        $region51: #{health_status_update_batch.1} parent=11 // pred_region
          %s445 = ssub.s32 2048, 2048
          %446 = vsyncadd [#allocation18], %s445
          %s447 = sshll.u32 [#allocation19], 4
          %s448 = int_to_ptr.vmem [resolvable:$true] %s447
          %453 = dma.hbm_to_vmem [thread:$0]  %s15, 2048, %s448, [#allocation18], 64, 64, 4
        $region52: #{health_status_update_batch.1} parent=11 // pred_fallthru
          _
        // Predicated region
        $region53: #{health_status_update_batch.1} parent=11 // pred_check
          %p454 = pneg %p287
        $region54: #{health_status_update_batch.1} parent=11 // pred_check_branch
          %456 = sbr.rel (%p454) target = $region56
        $region55: #{health_status_update_batch.1} parent=11 // pred_region
          %s458 = ssub.s32 32, 32
          %459 = vsyncadd [#allocation21], %s458
          %s460 = sshll.u32 [#allocation20], 4
          %s461 = int_to_ptr.vmem [resolvable:$true] %s460
          %466 = dma.hbm_to_vmem [thread:$0]  %s16, 32, %s461, [#allocation21], 16, 16, 1
        $region56: #{health_status_update_batch.1} parent=11 // pred_fallthru
          _
      $region12: #{health_status_update_batch.1} parent=5 // pred_fallthru
        _
      %p467 = scmp.lt.s32.totalorder %s56, 3
      // Predicated region
      $region57: #{health_status_update_batch.1} parent=5 // pred_check
        %p468 = pneg %p467
      $region58: #{health_status_update_batch.1} parent=5 // pred_check_branch
        %470 = sbr.rel (%p468) target = $region60
      $region59: #{health_status_update_batch.1} parent=5 // pred_region
        _
      $region60: #{health_status_update_batch.1} parent=5 // pred_fallthru
        _
      %p471 = scmp.le.s32.totalorder 1, %s56
      %p472 = scmp.lt.s32.totalorder %s56, 4
      %p473 = pnand %p471, %p472
      %p474 = pneg %p473
      // Predicated region
      $region61: #{health_status_update_batch.1} parent=5 // pred_check
        _
      $region62: #{health_status_update_batch.1} parent=5 // pred_check_branch
        %476 = sbr.rel (%p473) target = $region64
      $region63: #{health_status_update_batch.1} parent=5 // pred_region
        %s477 = ssub.s32 %s56, 1
        // Predicated region
        $region65: #{health_status_update_batch.1} parent=63 // pred_check
          %p478 = pneg %p77
        $region66: #{health_status_update_batch.1} parent=63 // pred_check_branch
          %480 = sbr.rel (%p478) target = $region68
        $region67: #{health_status_update_batch.1} parent=63 // pred_region
          %481 = dma.done [#allocation10], 896
        $region68: #{health_status_update_batch.1} parent=63 // pred_fallthru
          _
        // Predicated region
        $region69: #{health_status_update_batch.1} parent=63 // pred_check
          %p482 = pneg %p98
        $region70: #{health_status_update_batch.1} parent=63 // pred_check_branch
          %484 = sbr.rel (%p482) target = $region72
        $region71: #{health_status_update_batch.1} parent=63 // pred_region
          %485 = dma.done [#allocation12], 640
        $region72: #{health_status_update_batch.1} parent=63 // pred_fallthru
          _
        // Predicated region
        $region73: #{health_status_update_batch.1} parent=63 // pred_check
          %p486 = pneg %p161
        $region74: #{health_status_update_batch.1} parent=63 // pred_check_branch
          %488 = sbr.rel (%p486) target = $region76
        $region75: #{health_status_update_batch.1} parent=63 // pred_region
          %489 = dma.done [#allocation12], 32
        $region76: #{health_status_update_batch.1} parent=63 // pred_fallthru
          _
        // Predicated region
        $region77: #{health_status_update_batch.1} parent=63 // pred_check
          %p490 = pneg %p203
        $region78: #{health_status_update_batch.1} parent=63 // pred_check_branch
          %492 = sbr.rel (%p490) target = $region80
        $region79: #{health_status_update_batch.1} parent=63 // pred_region
          %493 = dma.done [#allocation15], 32
        $region80: #{health_status_update_batch.1} parent=63 // pred_fallthru
          _
        // Predicated region
        $region81: #{health_status_update_batch.1} parent=63 // pred_check
          %p494 = pneg %p224
        $region82: #{health_status_update_batch.1} parent=63 // pred_check_branch
          %496 = sbr.rel (%p494) target = $region84
        $region83: #{health_status_update_batch.1} parent=63 // pred_region
          %497 = dma.done [#allocation15], 2048
        $region84: #{health_status_update_batch.1} parent=63 // pred_fallthru
          _
        // Predicated region
        $region85: #{health_status_update_batch.1} parent=63 // pred_check
          %p498 = pneg %p245
        $region86: #{health_status_update_batch.1} parent=63 // pred_check_branch
          %500 = sbr.rel (%p498) target = $region88
        $region87: #{health_status_update_batch.1} parent=63 // pred_region
          %501 = dma.done [#allocation18], 32
        $region88: #{health_status_update_batch.1} parent=63 // pred_fallthru
          _
        // Predicated region
        $region89: #{health_status_update_batch.1} parent=63 // pred_check
          %p502 = pneg %p266
        $region90: #{health_status_update_batch.1} parent=63 // pred_check_branch
          %504 = sbr.rel (%p502) target = $region92
        $region91: #{health_status_update_batch.1} parent=63 // pred_region
          %505 = dma.done [#allocation18], 2048
        $region92: #{health_status_update_batch.1} parent=63 // pred_fallthru
          _
        // Predicated region
        $region93: #{health_status_update_batch.1} parent=63 // pred_check
          %p506 = pneg %p287
        $region94: #{health_status_update_batch.1} parent=63 // pred_check_branch
          %508 = sbr.rel (%p506) target = $region96
        $region95: #{health_status_update_batch.1} parent=63 // pred_region
          %509 = dma.done [#allocation21], 32
        $region96: #{health_status_update_batch.1} parent=63 // pred_fallthru
          _
        %p510 = pneg %p77
        %p511 = pneg %p74
        %p512 = pneg %p98
        %p513 = pneg %p95
        %p514 = pneg %p119
        %p515 = pneg %p116
        %p516 = pneg %p140
        %p517 = pneg %p137
        %p518 = pneg %p161
        %p519 = pneg %p158
        %p520 = pneg %p182
        %p521 = pneg %p179
        %p522 = pneg %p203
        %p523 = pneg %p200
        %p524 = pneg %p224
        %p525 = pneg %p221
        %p526 = pneg %p245
        %p527 = pneg %p242
        %p528 = pneg %p266
        %p529 = pneg %p263
        %p530 = pneg %p287
        %p531 = pneg %p284
        %p532 = pneg %p313
        %p533 = pneg %p310
        %p534 = scmp.lt.s32.totalorder %s61, 2
        %s535 = scalar_select %p534, %s61, 2
        %s536 = smul.addr %s535, 8
        %s537 = scalar_lea.vmem %s17, %s536
        %p538 = pneg %p339
        %p539 = pneg %p336
        %p540 = scmp.lt.s32.totalorder %s61, 2
        %s541 = scalar_select %p540, %s61, 2
        %s542 = smul.addr %s541, 2
        %s543 = smul.addr %s542, 8
        %s544 = scalar_lea.vmem %s18, %s543
        %p545 = scmp.lt.s32.totalorder %s61, 2
        %s546 = scalar_select %p545, %s61, 2
        %s547 = smul.addr %s546, 8
        %s548 = scalar_lea.vmem %s17, %s547
        %p549 = scmp.lt.s32.totalorder %s61, 2
        %s550 = scalar_select %p549, %s61, 2
        %s551 = smul.addr %s550, 2
        %s552 = smul.addr %s551, 8
        %s553 = scalar_lea.vmem %s18, %s552
        %s555 = smul.u32 %s61, 128
        %s556 = sld [smem:[#allocation8 + %s555]]
        %s557 = sadd.s32 %s555, 1
        %s558 = sld [smem:[#allocation8 + %s557]]
        %s559 = sld [smem:[#allocation6 + %s555]]
        %s560 = sld [smem:[#allocation3 + %s555]]
        %p561 = scmp.gt.s32.totalorder %s559, 0
        %s562 = scalar_select %p561, 1, 0
        %s563 = scvt.s32.f32 %s562
        %s564 = scalar_lea.vmem [#allocation9], %s560
        %v565 = vld [vmem:[%s564] sm:$0x1]
        %v566 = vstv %s563
        %v567 = vmul.f32 %v566, %v565
        %v568 = vadd.f32 %v567, 0.0
        %s569 = sld [smem:[#allocation3 + %s557]]
        %p570 = scmp.gt.s32.totalorder %s559, 1
        %s571 = scalar_select %p570, 1, 0
        %s572 = scvt.s32.f32 %s571
        %s573 = scalar_lea.vmem [#allocation9], %s569
        %v574 = vld [vmem:[%s573] sm:$0x1]
        %v575 = vstv %s572
        %v576 = vmul.f32 %v575, %v574
        %v577 = vadd.f32 %v568, %v576
        %s578 = sadd.s32 %s555, 2
        %s579 = sld [smem:[#allocation3 + %s578]]
        %p580 = scmp.gt.s32.totalorder %s559, 2
        %s581 = scalar_select %p580, 1, 0
        %s582 = scvt.s32.f32 %s581
        %s583 = scalar_lea.vmem [#allocation9], %s579
        %v584 = vld [vmem:[%s583] sm:$0x1]
        %v585 = vstv %s582
        %v586 = vmul.f32 %v585, %v584
        %v587 = vadd.f32 %v577, %v586
        %s588 = sadd.s32 %s555, 3
        %s589 = sld [smem:[#allocation3 + %s588]]
        %p590 = scmp.gt.s32.totalorder %s559, 3
        %s591 = scalar_select %p590, 1, 0
        %s592 = scvt.s32.f32 %s591
        %s593 = scalar_lea.vmem [#allocation9], %s589
        %v594 = vld [vmem:[%s593] sm:$0x1]
        %v595 = vstv %s592
        %v596 = vmul.f32 %v595, %v594
        %v597 = vadd.f32 %v587, %v596
        %p598 = scmp.gt.s32.totalorder %s559, 1
        %s599 = scalar_select %p598, %s559, 1
        %s600 = scvt.s32.f32 %s599
        %v601 = vstv %s600
        %v602 = vrcp.pop %v601
        %s603 = vtos %v602
        %v604 = vstv %s603
        %v605 = vmul.f32 %v597, %v604
        %s606 = sld [smem:[#allocation6 + %s557]]
        %s607 = sadd.s32 %s555, 4
        %s608 = sld [smem:[#allocation3 + %s607]]
        %p609 = scmp.gt.s32.totalorder %s606, 0
        %s610 = scalar_select %p609, 1, 0
        %s611 = scvt.s32.f32 %s610
        %s612 = scalar_lea.vmem [#allocation9], %s608
        %v613 = vld [vmem:[%s612] sm:$0x1]
        %v614 = vstv %s611
        %v615 = vmul.f32 %v614, %v613
        %v616 = vadd.f32 %v615, 0.0
        %s617 = sadd.s32 %s555, 5
        %s618 = sld [smem:[#allocation3 + %s617]]
        %p619 = scmp.gt.s32.totalorder %s606, 1
        %s620 = scalar_select %p619, 1, 0
        %s621 = scvt.s32.f32 %s620
        %s622 = scalar_lea.vmem [#allocation9], %s618
        %v623 = vld [vmem:[%s622] sm:$0x1]
        %v624 = vstv %s621
        %v625 = vmul.f32 %v624, %v623
        %v626 = vadd.f32 %v616, %v625
        %s627 = sadd.s32 %s555, 6
        %s628 = sld [smem:[#allocation3 + %s627]]
        %p629 = scmp.gt.s32.totalorder %s606, 2
        %s630 = scalar_select %p629, 1, 0
        %s631 = scvt.s32.f32 %s630
        %s632 = scalar_lea.vmem [#allocation9], %s628
        %v633 = vld [vmem:[%s632] sm:$0x1]
        %v634 = vstv %s631
        %v635 = vmul.f32 %v634, %v633
        %v636 = vadd.f32 %v626, %v635
        %s637 = sadd.s32 %s555, 7
        %s638 = sld [smem:[#allocation3 + %s637]]
        %p639 = scmp.gt.s32.totalorder %s606, 3
        %s640 = scalar_select %p639, 1, 0
        %s641 = scvt.s32.f32 %s640
        %s642 = scalar_lea.vmem [#allocation9], %s638
        %v643 = vld [vmem:[%s642] sm:$0x1]
        %v644 = vstv %s641
        %v645 = vmul.f32 %v644, %v643
        %v646 = vadd.f32 %v636, %v645
        %p647 = scmp.gt.s32.totalorder %s606, 1
        %s648 = scalar_select %p647, %s606, 1
        %s649 = scvt.s32.f32 %s648
        %v650 = vstv %s649
        %v651 = vrcp.pop %v650
        %s652 = vtos %v651
        %v653 = vstv %s652
        %v654 = vmul.f32 %v646, %v653
        %s655 = sld [smem:[#allocation6 + %s578]]
        %s656 = sadd.s32 %s555, 8
        %s657 = sld [smem:[#allocation3 + %s656]]
        %p658 = scmp.gt.s32.totalorder %s655, 0
        %s659 = scalar_select %p658, 1, 0
        %s660 = scvt.s32.f32 %s659
        %s661 = scalar_lea.vmem [#allocation9], %s657
        %v662 = vld [vmem:[%s661] sm:$0x1]
        %v663 = vstv %s660
        %v664 = vmul.f32 %v663, %v662
        %v665 = vadd.f32 %v664, 0.0
        %s666 = sadd.s32 %s555, 9
        %s667 = sld [smem:[#allocation3 + %s666]]
        %p668 = scmp.gt.s32.totalorder %s655, 1
        %s669 = scalar_select %p668, 1, 0
        %s670 = scvt.s32.f32 %s669
        %s671 = scalar_lea.vmem [#allocation9], %s667
        %v672 = vld [vmem:[%s671] sm:$0x1]
        %v673 = vstv %s670
        %v674 = vmul.f32 %v673, %v672
        %v675 = vadd.f32 %v665, %v674
        %s676 = sadd.s32 %s555, 10
        %s677 = sld [smem:[#allocation3 + %s676]]
        %p678 = scmp.gt.s32.totalorder %s655, 2
        %s679 = scalar_select %p678, 1, 0
        %s680 = scvt.s32.f32 %s679
        %s681 = scalar_lea.vmem [#allocation9], %s677
        %v682 = vld [vmem:[%s681] sm:$0x1]
        %v683 = vstv %s680
        %v684 = vmul.f32 %v683, %v682
        %v685 = vadd.f32 %v675, %v684
        %s686 = sadd.s32 %s555, 11
        %s687 = sld [smem:[#allocation3 + %s686]]
        %p688 = scmp.gt.s32.totalorder %s655, 3
        %s689 = scalar_select %p688, 1, 0
        %s690 = scvt.s32.f32 %s689
        %s691 = scalar_lea.vmem [#allocation9], %s687
        %v692 = vld [vmem:[%s691] sm:$0x1]
        %v693 = vstv %s690
        %v694 = vmul.f32 %v693, %v692
        %v695 = vadd.f32 %v685, %v694
        %p696 = scmp.gt.s32.totalorder %s655, 1
        %s697 = scalar_select %p696, %s655, 1
        %s698 = scvt.s32.f32 %s697
        %v699 = vstv %s698
        %v700 = vrcp.pop %v699
        %s701 = vtos %v700
        %v702 = vstv %s701
        %v703 = vmul.f32 %v695, %v702
        %s704 = sld [smem:[#allocation6 + %s588]]
        %s705 = sadd.s32 %s555, 12
        %s706 = sld [smem:[#allocation3 + %s705]]
        %p707 = scmp.gt.s32.totalorder %s704, 0
        %s708 = scalar_select %p707, 1, 0
        %s709 = scvt.s32.f32 %s708
        %s710 = scalar_lea.vmem [#allocation9], %s706
        %v711 = vld [vmem:[%s710] sm:$0x1]
        %v712 = vstv %s709
        %v713 = vmul.f32 %v712, %v711
        %v714 = vadd.f32 %v713, 0.0
        %s715 = sadd.s32 %s555, 13
        %s716 = sld [smem:[#allocation3 + %s715]]
        %p717 = scmp.gt.s32.totalorder %s704, 1
        %s718 = scalar_select %p717, 1, 0
        %s719 = scvt.s32.f32 %s718
        %s720 = scalar_lea.vmem [#allocation9], %s716
        %v721 = vld [vmem:[%s720] sm:$0x1]
        %v722 = vstv %s719
        %v723 = vmul.f32 %v722, %v721
        %v724 = vadd.f32 %v714, %v723
        %s725 = sadd.s32 %s555, 14
        %s726 = sld [smem:[#allocation3 + %s725]]
        %p727 = scmp.gt.s32.totalorder %s704, 2
        %s728 = scalar_select %p727, 1, 0
        %s729 = scvt.s32.f32 %s728
        %s730 = scalar_lea.vmem [#allocation9], %s726
        %v731 = vld [vmem:[%s730] sm:$0x1]
        %v732 = vstv %s729
        %v733 = vmul.f32 %v732, %v731
        %v734 = vadd.f32 %v724, %v733
        %s735 = sadd.s32 %s555, 15
        %s736 = sld [smem:[#allocation3 + %s735]]
        %p737 = scmp.gt.s32.totalorder %s704, 3
        %s738 = scalar_select %p737, 1, 0
        %s739 = scvt.s32.f32 %s738
        %s740 = scalar_lea.vmem [#allocation9], %s736
        %v741 = vld [vmem:[%s740] sm:$0x1]
        %v742 = vstv %s739
        %v743 = vmul.f32 %v742, %v741
        %v744 = vadd.f32 %v734, %v743
        %p745 = scmp.gt.s32.totalorder %s704, 1
        %s746 = scalar_select %p745, %s704, 1
        %s747 = scvt.s32.f32 %s746
        %v748 = vstv %s747
        %v749 = vrcp.pop %v748
        %s750 = vtos %v749
        %v751 = vstv %s750
        %v752 = vmul.f32 %v744, %v751
        %s753 = sld [smem:[#allocation6 + %s607]]
        %s754 = sadd.s32 %s555, 16
        %s755 = sld [smem:[#allocation3 + %s754]]
        %p756 = scmp.gt.s32.totalorder %s753, 0
        %s757 = scalar_select %p756, 1, 0
        %s758 = scvt.s32.f32 %s757
        %s759 = scalar_lea.vmem [#allocation9], %s755
        %v760 = vld [vmem:[%s759] sm:$0x1]
        %v761 = vstv %s758
        %v762 = vmul.f32 %v761, %v760
        %v763 = vadd.f32 %v762, 0.0
        %s764 = sadd.s32 %s555, 17
        %s765 = sld [smem:[#allocation3 + %s764]]
        %p766 = scmp.gt.s32.totalorder %s753, 1
        %s767 = scalar_select %p766, 1, 0
        %s768 = scvt.s32.f32 %s767
        %s769 = scalar_lea.vmem [#allocation9], %s765
        %v770 = vld [vmem:[%s769] sm:$0x1]
        %v771 = vstv %s768
        %v772 = vmul.f32 %v771, %v770
        %v773 = vadd.f32 %v763, %v772
        %s774 = sadd.s32 %s555, 18
        %s775 = sld [smem:[#allocation3 + %s774]]
        %p776 = scmp.gt.s32.totalorder %s753, 2
        %s777 = scalar_select %p776, 1, 0
        %s778 = scvt.s32.f32 %s777
        %s779 = scalar_lea.vmem [#allocation9], %s775
        %v780 = vld [vmem:[%s779] sm:$0x1]
        %v781 = vstv %s778
        %v782 = vmul.f32 %v781, %v780
        %v783 = vadd.f32 %v773, %v782
        %s784 = sadd.s32 %s555, 19
        %s785 = sld [smem:[#allocation3 + %s784]]
        %p786 = scmp.gt.s32.totalorder %s753, 3
        %s787 = scalar_select %p786, 1, 0
        %s788 = scvt.s32.f32 %s787
        %s789 = scalar_lea.vmem [#allocation9], %s785
        %v790 = vld [vmem:[%s789] sm:$0x1]
        %v791 = vstv %s788
        %v792 = vmul.f32 %v791, %v790
        %v793 = vadd.f32 %v783, %v792
        %p794 = scmp.gt.s32.totalorder %s753, 1
        %s795 = scalar_select %p794, %s753, 1
        %s796 = scvt.s32.f32 %s795
        %v797 = vstv %s796
        %v798 = vrcp.pop %v797
        %s799 = vtos %v798
        %v800 = vstv %s799
        %v801 = vmul.f32 %v793, %v800
        %s802 = sld [smem:[#allocation6 + %s617]]
        %s803 = sadd.s32 %s555, 20
        %s804 = sld [smem:[#allocation3 + %s803]]
        %p805 = scmp.gt.s32.totalorder %s802, 0
        %s806 = scalar_select %p805, 1, 0
        %s807 = scvt.s32.f32 %s806
        %s808 = scalar_lea.vmem [#allocation9], %s804
        %v809 = vld [vmem:[%s808] sm:$0x1]
        %v810 = vstv %s807
        %v811 = vmul.f32 %v810, %v809
        %v812 = vadd.f32 %v811, 0.0
        %s813 = sadd.s32 %s555, 21
        %s814 = sld [smem:[#allocation3 + %s813]]
        %p815 = scmp.gt.s32.totalorder %s802, 1
        %s816 = scalar_select %p815, 1, 0
        %s817 = scvt.s32.f32 %s816
        %s818 = scalar_lea.vmem [#allocation9], %s814
        %v819 = vld [vmem:[%s818] sm:$0x1]
        %v820 = vstv %s817
        %v821 = vmul.f32 %v820, %v819
        %v822 = vadd.f32 %v812, %v821
        %s823 = sadd.s32 %s555, 22
        %s824 = sld [smem:[#allocation3 + %s823]]
        %p825 = scmp.gt.s32.totalorder %s802, 2
        %s826 = scalar_select %p825, 1, 0
        %s827 = scvt.s32.f32 %s826
        %s828 = scalar_lea.vmem [#allocation9], %s824
        %v829 = vld [vmem:[%s828] sm:$0x1]
        %v830 = vstv %s827
        %v831 = vmul.f32 %v830, %v829
        %v832 = vadd.f32 %v822, %v831
        %s833 = sadd.s32 %s555, 23
        %s834 = sld [smem:[#allocation3 + %s833]]
        %p835 = scmp.gt.s32.totalorder %s802, 3
        %s836 = scalar_select %p835, 1, 0
        %s837 = scvt.s32.f32 %s836
        %s838 = scalar_lea.vmem [#allocation9], %s834
        %v839 = vld [vmem:[%s838] sm:$0x1]
        %v840 = vstv %s837
        %v841 = vmul.f32 %v840, %v839
        %v842 = vadd.f32 %v832, %v841
        %p843 = scmp.gt.s32.totalorder %s802, 1
        %s844 = scalar_select %p843, %s802, 1
        %s845 = scvt.s32.f32 %s844
        %v846 = vstv %s845
        %v847 = vrcp.pop %v846
        %s848 = vtos %v847
        %v849 = vstv %s848
        %v850 = vmul.f32 %v842, %v849
        %s851 = sld [smem:[#allocation6 + %s627]]
        %s852 = sadd.s32 %s555, 24
        %s853 = sld [smem:[#allocation3 + %s852]]
        %p854 = scmp.gt.s32.totalorder %s851, 0
        %s855 = scalar_select %p854, 1, 0
        %s856 = scvt.s32.f32 %s855
        %s857 = scalar_lea.vmem [#allocation9], %s853
        %v858 = vld [vmem:[%s857] sm:$0x1]
        %v859 = vstv %s856
        %v860 = vmul.f32 %v859, %v858
        %v861 = vadd.f32 %v860, 0.0
        %s862 = sadd.s32 %s555, 25
        %s863 = sld [smem:[#allocation3 + %s862]]
        %p864 = scmp.gt.s32.totalorder %s851, 1
        %s865 = scalar_select %p864, 1, 0
        %s866 = scvt.s32.f32 %s865
        %s867 = scalar_lea.vmem [#allocation9], %s863
        %v868 = vld [vmem:[%s867] sm:$0x1]
        %v869 = vstv %s866
        %v870 = vmul.f32 %v869, %v868
        %v871 = vadd.f32 %v861, %v870
        %s872 = sadd.s32 %s555, 26
        %s873 = sld [smem:[#allocation3 + %s872]]
        %p874 = scmp.gt.s32.totalorder %s851, 2
        %s875 = scalar_select %p874, 1, 0
        %s876 = scvt.s32.f32 %s875
        %s877 = scalar_lea.vmem [#allocation9], %s873
        %v878 = vld [vmem:[%s877] sm:$0x1]
        %v879 = vstv %s876
        %v880 = vmul.f32 %v879, %v878
        %v881 = vadd.f32 %v871, %v880
        %s882 = sadd.s32 %s555, 27
        %s883 = sld [smem:[#allocation3 + %s882]]
        %p884 = scmp.gt.s32.totalorder %s851, 3
        %s885 = scalar_select %p884, 1, 0
        %s886 = scvt.s32.f32 %s885
        %s887 = scalar_lea.vmem [#allocation9], %s883
        %v888 = vld [vmem:[%s887] sm:$0x1]
        %v889 = vstv %s886
        %v890 = vmul.f32 %v889, %v888
        %v891 = vadd.f32 %v881, %v890
        %p892 = scmp.gt.s32.totalorder %s851, 1
        %s893 = scalar_select %p892, %s851, 1
        %s894 = scvt.s32.f32 %s893
        %v895 = vstv %s894
        %v896 = vrcp.pop %v895
        %s897 = vtos %v896
        %v898 = vstv %s897
        %v899 = vmul.f32 %v891, %v898
        %s900 = sld [smem:[#allocation6 + %s637]]
        %s901 = sadd.s32 %s555, 28
        %s902 = sld [smem:[#allocation3 + %s901]]
        %p903 = scmp.gt.s32.totalorder %s900, 0
        %s904 = scalar_select %p903, 1, 0
        %s905 = scvt.s32.f32 %s904
        %s906 = scalar_lea.vmem [#allocation9], %s902
        %v907 = vld [vmem:[%s906] sm:$0x1]
        %v908 = vstv %s905
        %v909 = vmul.f32 %v908, %v907
        %v910 = vadd.f32 %v909, 0.0
        %s911 = sadd.s32 %s555, 29
        %s912 = sld [smem:[#allocation3 + %s911]]
        %p913 = scmp.gt.s32.totalorder %s900, 1
        %s914 = scalar_select %p913, 1, 0
        %s915 = scvt.s32.f32 %s914
        %s916 = scalar_lea.vmem [#allocation9], %s912
        %v917 = vld [vmem:[%s916] sm:$0x1]
        %v918 = vstv %s915
        %v919 = vmul.f32 %v918, %v917
        %v920 = vadd.f32 %v910, %v919
        %s921 = sadd.s32 %s555, 30
        %s922 = sld [smem:[#allocation3 + %s921]]
        %p923 = scmp.gt.s32.totalorder %s900, 2
        %s924 = scalar_select %p923, 1, 0
        %s925 = scvt.s32.f32 %s924
        %s926 = scalar_lea.vmem [#allocation9], %s922
        %v927 = vld [vmem:[%s926] sm:$0x1]
        %v928 = vstv %s925
        %v929 = vmul.f32 %v928, %v927
        %v930 = vadd.f32 %v920, %v929
        %s931 = sadd.s32 %s555, 31
        %s932 = sld [smem:[#allocation3 + %s931]]
        %p933 = scmp.gt.s32.totalorder %s900, 3
        %s934 = scalar_select %p933, 1, 0
        %s935 = scvt.s32.f32 %s934
        %s936 = scalar_lea.vmem [#allocation9], %s932
        %v937 = vld [vmem:[%s936] sm:$0x1]
        %v938 = vstv %s935
        %v939 = vmul.f32 %v938, %v937
        %v940 = vadd.f32 %v930, %v939
        %p941 = scmp.gt.s32.totalorder %s900, 1
        %s942 = scalar_select %p941, %s900, 1
        %s943 = scvt.s32.f32 %s942
        %v944 = vstv %s943
        %v945 = vrcp.pop %v944
        %s946 = vtos %v945
        %v947 = vstv %s946
        %v948 = vmul.f32 %v940, %v947
        %v950 = vrot.slane %v654, 7
        %v953 = vrot.slane %v703, 6
        %v956 = vrot.slane %v752, 5
        %v959 = vrot.slane %v801, 4
        %v962 = vrot.slane %v850, 3
        %v965 = vrot.slane %v899, 2
        %v968 = vrot.slane %v948, 1
        %vm970 = vcmask 1040384
        %v971 = vsel %vm970, %v605, %v950
        %vm972 = vcmask 1041408
        %v973 = vsel %vm972, %v971, %v953
        %vm974 = vcmask 1042432
        %v975 = vsel %vm974, %v973, %v956
        %vm976 = vcmask 1043456
        %v977 = vsel %vm976, %v975, %v959
        %vm978 = vcmask 1044480
        %v979 = vsel %vm978, %v977, %v962
        %vm980 = vcmask 1045504
        %v981 = vsel %vm980, %v979, %v965
        %vm982 = vcmask 1046528
        %v983 = vsel %vm982, %v981, %v968
        %v984 = vpack.c.bf16 %v983, %v983
        %v985 = vld [vmem:[%s9] sm:$0xf]
        %v986 = vld [vmem:[%s9 + $0x4] sm:$0xf]
        %v987 = vld [vmem:[%s9 + $0x8] sm:$0xf]
        %v988 = vld [vmem:[%s9 + $0xc] sm:$0xf]
        %v989 = vld [vmem:[%s9 + $0x10] sm:$0xf]
        %v990 = vld [vmem:[%s9 + $0x14] sm:$0xf]
        %v991 = vld [vmem:[%s9 + $0x18] sm:$0xf]
        %v992 = vld [vmem:[%s9 + $0x1c] sm:$0xf]
        %v993 = vld [vmem:[%s9 + $0x20] sm:$0xf]
        %v994 = vld [vmem:[%s9 + $0x24] sm:$0xf]
        %v995 = vld [vmem:[%s9 + $0x28] sm:$0xf]
        %v996 = vld [vmem:[%s9 + $0x2c] sm:$0xf]
        %v997 = vld [vmem:[%s9 + $0x30] sm:$0xf]
        %v998 = vld [vmem:[%s9 + $0x34] sm:$0xf]
        %v999 = vld [vmem:[%s9 + $0x38] sm:$0xf]
        %v1000 = vld [vmem:[%s9 + $0x3c] sm:$0xf]
        %v1001 = vld [vmem:[#allocation13] sm:$0x1]
        %v1003 = vlaneseq
        %v1004 = vshrl.u32 %v1003, 7
        %v1005 = vsub.s32 0, %v1004
        %v1006 = vrot.slane %v1001, %v1005
        %v1024 = vunpack.c.l.b16 %v985
        %v1025 = vunpack.c.l.b16 %v986
        %v1026 = vunpack.c.l.b16 %v987
        %v1027 = vunpack.c.l.b16 %v988
        %v1028 = vunpack.c.l.b16 %v989
        %v1029 = vunpack.c.l.b16 %v990
        %v1030 = vunpack.c.l.b16 %v991
        %v1031 = vunpack.c.l.b16 %v992
        %v1032 = vunpack.c.l.b16 %v993
        %v1033 = vunpack.c.l.b16 %v994
        %v1034 = vunpack.c.l.b16 %v995
        %v1035 = vunpack.c.l.b16 %v996
        %v1036 = vunpack.c.l.b16 %v997
        %v1037 = vunpack.c.l.b16 %v998
        %v1038 = vunpack.c.l.b16 %v999
        %v1039 = vunpack.c.l.b16 %v1000
        %v1040 = vpack.c.b16 %v1025, %v1024
        %v1041 = vpack.c.b16 %v1027, %v1026
        %v1042 = vpack.c.b16 %v1029, %v1028
        %v1043 = vpack.c.b16 %v1031, %v1030
        %v1044 = vpack.c.b16 %v1033, %v1032
        %v1045 = vpack.c.b16 %v1035, %v1034
        %v1046 = vpack.c.b16 %v1037, %v1036
        %v1047 = vpack.c.b16 %v1039, %v1038
        %1056 = vmatprep.subr.bf16.mxu0 0
        %1057 = vmatpush1.bf16.msra.mxu0 %v1040
        %1058 = vmatprep.subr.bf16.mxu0 0
        %1059 = vmatpush1.bf16.msra.mxu0 %v1041
        %1060 = vmatprep.subr.bf16.mxu0 0
        %1061 = vmatpush1.bf16.msra.mxu0 %v1042
        %1062 = vmatprep.subr.bf16.mxu0 0
        %1063 = vmatpush1.bf16.msra.mxu0 %v1043
        %1064 = vmatprep.subr.bf16.mxu0 0
        %1065 = vmatpush1.bf16.msra.mxu0 %v1044
        %1066 = vmatprep.subr.bf16.mxu0 0
        %1067 = vmatpush1.bf16.msra.mxu0 %v1045
        %1068 = vmatprep.subr.bf16.mxu0 0
        %1069 = vmatpush1.bf16.msra.mxu0 %v1046
        %1070 = vmatprep.subr.bf16.mxu0 0
        %1071 = vmatpush1.bf16.msra.mxu0 %v1047
        %1072 = vmatprep.subr.bf16.mxu0 0
        %1073 = vmatpush1.bf16.msra.mxu0 0
        %1074 = vmatprep.subr.bf16.mxu0 0
        %1075 = vmatpush1.bf16.msra.mxu0 0
        %1076 = vmatprep.subr.bf16.mxu0 0
        %1077 = vmatpush1.bf16.msra.mxu0 0
        %1078 = vmatprep.subr.bf16.mxu0 0
        %1079 = vmatpush1.bf16.msra.mxu0 0
        %1080 = vmatprep.subr.bf16.mxu0 0
        %1081 = vmatpush1.bf16.msra.mxu0 0
        %1082 = vmatprep.subr.bf16.mxu0 0
        %1083 = vmatpush1.bf16.msra.mxu0 0
        %1084 = vmatprep.subr.bf16.mxu0 0
        %1085 = vmatpush1.bf16.msra.mxu0 0
        %1086 = vmatprep.subr.bf16.mxu0 0
        %1087 = vmatpush1.bf16.msra.mxu0 0
        %1088 = vmatprep.mubr.bf16.mxu0 0
        %1089 = vmatmul.mubr.bf16.gmra.mrb[0].mxu0 %v984
        %v1090 = vpop.f32.mrb[0].mxu0
        %v1091 = vadd.f32 %v1006, %v1090
        %v1092 = vpop.f32.mrb[0].mxu0
        %v1093 = vpop.f32.mrb[0].mxu0
        %v1094 = vpop.f32.mrb[0].mxu0
        %1095 = vdwg.mxu0
        %v1096 = vtanh.pop %v1091
        %v1097 = vpack.c.bf16 %v1096, %v1096
        %v1098 = vld [vmem:[%s11] sm:$0xf]
        %v1099 = vld [vmem:[%s11 + $0x4] sm:$0xf]
        %v1100 = vld [vmem:[%s11 + $0x8] sm:$0xf]
        %v1101 = vld [vmem:[%s11 + $0xc] sm:$0xf]
        %v1102 = vld [vmem:[%s11 + $0x10] sm:$0xf]
        %v1103 = vld [vmem:[%s11 + $0x14] sm:$0xf]
        %v1104 = vld [vmem:[%s11 + $0x18] sm:$0xf]
        %v1105 = vld [vmem:[%s11 + $0x1c] sm:$0xf]
        %v1106 = vld [vmem:[%s11 + $0x20] sm:$0xf]
        %v1107 = vld [vmem:[%s11 + $0x24] sm:$0xf]
        %v1108 = vld [vmem:[%s11 + $0x28] sm:$0xf]
        %v1109 = vld [vmem:[%s11 + $0x2c] sm:$0xf]
        %v1110 = vld [vmem:[%s11 + $0x30] sm:$0xf]
        %v1111 = vld [vmem:[%s11 + $0x34] sm:$0xf]
        %v1112 = vld [vmem:[%s11 + $0x38] sm:$0xf]
        %v1113 = vld [vmem:[%s11 + $0x3c] sm:$0xf]
        %v1114 = vld [vmem:[#allocation14] sm:$0x1]
        %v1116 = vlaneseq
        %v1117 = vshrl.u32 %v1116, 7
        %v1118 = vsub.s32 0, %v1117
        %v1119 = vrot.slane %v1114, %v1118
        %v1137 = vunpack.c.l.b16 %v1098
        %v1138 = vunpack.c.l.b16 %v1099
        %v1139 = vunpack.c.l.b16 %v1100
        %v1140 = vunpack.c.l.b16 %v1101
        %v1141 = vunpack.c.l.b16 %v1102
        %v1142 = vunpack.c.l.b16 %v1103
        %v1143 = vunpack.c.l.b16 %v1104
        %v1144 = vunpack.c.l.b16 %v1105
        %v1145 = vunpack.c.l.b16 %v1106
        %v1146 = vunpack.c.l.b16 %v1107
        %v1147 = vunpack.c.l.b16 %v1108
        %v1148 = vunpack.c.l.b16 %v1109
        %v1149 = vunpack.c.l.b16 %v1110
        %v1150 = vunpack.c.l.b16 %v1111
        %v1151 = vunpack.c.l.b16 %v1112
        %v1152 = vunpack.c.l.b16 %v1113
        %v1153 = vpack.c.b16 %v1138, %v1137
        %v1154 = vpack.c.b16 %v1140, %v1139
        %v1155 = vpack.c.b16 %v1142, %v1141
        %v1156 = vpack.c.b16 %v1144, %v1143
        %v1157 = vpack.c.b16 %v1146, %v1145
        %v1158 = vpack.c.b16 %v1148, %v1147
        %v1159 = vpack.c.b16 %v1150, %v1149
        %v1160 = vpack.c.b16 %v1152, %v1151
        %1169 = vmatprep.subr.bf16.mxu0 0
        %1170 = vmatpush1.bf16.msra.mxu0 %v1153
        %1171 = vmatprep.subr.bf16.mxu0 0
        %1172 = vmatpush1.bf16.msra.mxu0 %v1154
        %1173 = vmatprep.subr.bf16.mxu0 0
        %1174 = vmatpush1.bf16.msra.mxu0 %v1155
        %1175 = vmatprep.subr.bf16.mxu0 0
        %1176 = vmatpush1.bf16.msra.mxu0 %v1156
        %1177 = vmatprep.subr.bf16.mxu0 0
        %1178 = vmatpush1.bf16.msra.mxu0 %v1157
        %1179 = vmatprep.subr.bf16.mxu0 0
        %1180 = vmatpush1.bf16.msra.mxu0 %v1158
        %1181 = vmatprep.subr.bf16.mxu0 0
        %1182 = vmatpush1.bf16.msra.mxu0 %v1159
        %1183 = vmatprep.subr.bf16.mxu0 0
        %1184 = vmatpush1.bf16.msra.mxu0 %v1160
        %1185 = vmatprep.subr.bf16.mxu0 0
        %1186 = vmatpush1.bf16.msra.mxu0 0
        %1187 = vmatprep.subr.bf16.mxu0 0
        %1188 = vmatpush1.bf16.msra.mxu0 0
        %1189 = vmatprep.subr.bf16.mxu0 0
        %1190 = vmatpush1.bf16.msra.mxu0 0
        %1191 = vmatprep.subr.bf16.mxu0 0
        %1192 = vmatpush1.bf16.msra.mxu0 0
        %1193 = vmatprep.subr.bf16.mxu0 0
        %1194 = vmatpush1.bf16.msra.mxu0 0
        %1195 = vmatprep.subr.bf16.mxu0 0
        %1196 = vmatpush1.bf16.msra.mxu0 0
        %1197 = vmatprep.subr.bf16.mxu0 0
        %1198 = vmatpush1.bf16.msra.mxu0 0
        %1199 = vmatprep.subr.bf16.mxu0 0
        %1200 = vmatpush1.bf16.msra.mxu0 0
        %1201 = vmatprep.mubr.bf16.mxu0 0
        %1202 = vmatmul.mubr.bf16.gmra.mrb[0].mxu0 %v1097
        %v1203 = vpop.f32.mrb[0].mxu0
        %v1204 = vadd.f32 %v1119, %v1203
        %v1205 = vpop.f32.mrb[0].mxu0
        %v1206 = vpop.f32.mrb[0].mxu0
        %v1207 = vpop.f32.mrb[0].mxu0
        %1208 = vdwg.mxu0
        %v1209 = vtanh.pop %v1204
        %v1210 = vpack.c.bf16 %v1209, %v1209
        %v1211 = vld [vmem:[#allocation16] sm:$0xf]
        %v1212 = vld [vmem:[#allocation16 + $0x4] sm:$0xf]
        %v1213 = vld [vmem:[#allocation16 + $0x8] sm:$0xf]
        %v1214 = vld [vmem:[#allocation16 + $0xc] sm:$0xf]
        %v1215 = vld [vmem:[#allocation16 + $0x10] sm:$0xf]
        %v1216 = vld [vmem:[#allocation16 + $0x14] sm:$0xf]
        %v1217 = vld [vmem:[#allocation16 + $0x18] sm:$0xf]
        %v1218 = vld [vmem:[#allocation16 + $0x1c] sm:$0xf]
        %v1219 = vld [vmem:[#allocation16 + $0x20] sm:$0xf]
        %v1220 = vld [vmem:[#allocation16 + $0x24] sm:$0xf]
        %v1221 = vld [vmem:[#allocation16 + $0x28] sm:$0xf]
        %v1222 = vld [vmem:[#allocation16 + $0x2c] sm:$0xf]
        %v1223 = vld [vmem:[#allocation16 + $0x30] sm:$0xf]
        %v1224 = vld [vmem:[#allocation16 + $0x34] sm:$0xf]
        %v1225 = vld [vmem:[#allocation16 + $0x38] sm:$0xf]
        %v1226 = vld [vmem:[#allocation16 + $0x3c] sm:$0xf]
        %v1227 = vld [vmem:[#allocation17] sm:$0x1]
        %v1229 = vlaneseq
        %v1230 = vshrl.u32 %v1229, 7
        %v1231 = vsub.s32 0, %v1230
        %v1232 = vrot.slane %v1227, %v1231
        %v1250 = vunpack.c.l.b16 %v1211
        %v1251 = vunpack.c.l.b16 %v1212
        %v1252 = vunpack.c.l.b16 %v1213
        %v1253 = vunpack.c.l.b16 %v1214
        %v1254 = vunpack.c.l.b16 %v1215
        %v1255 = vunpack.c.l.b16 %v1216
        %v1256 = vunpack.c.l.b16 %v1217
        %v1257 = vunpack.c.l.b16 %v1218
        %v1258 = vunpack.c.l.b16 %v1219
        %v1259 = vunpack.c.l.b16 %v1220
        %v1260 = vunpack.c.l.b16 %v1221
        %v1261 = vunpack.c.l.b16 %v1222
        %v1262 = vunpack.c.l.b16 %v1223
        %v1263 = vunpack.c.l.b16 %v1224
        %v1264 = vunpack.c.l.b16 %v1225
        %v1265 = vunpack.c.l.b16 %v1226
        %v1266 = vpack.c.b16 %v1251, %v1250
        %v1267 = vpack.c.b16 %v1253, %v1252
        %v1268 = vpack.c.b16 %v1255, %v1254
        %v1269 = vpack.c.b16 %v1257, %v1256
        %v1270 = vpack.c.b16 %v1259, %v1258
        %v1271 = vpack.c.b16 %v1261, %v1260
        %v1272 = vpack.c.b16 %v1263, %v1262
        %v1273 = vpack.c.b16 %v1265, %v1264
        %1282 = vmatprep.subr.bf16.mxu0 0
        %1283 = vmatpush1.bf16.msra.mxu0 %v1266
        %1284 = vmatprep.subr.bf16.mxu0 0
        %1285 = vmatpush1.bf16.msra.mxu0 %v1267
        %1286 = vmatprep.subr.bf16.mxu0 0
        %1287 = vmatpush1.bf16.msra.mxu0 %v1268
        %1288 = vmatprep.subr.bf16.mxu0 0
        %1289 = vmatpush1.bf16.msra.mxu0 %v1269
        %1290 = vmatprep.subr.bf16.mxu0 0
        %1291 = vmatpush1.bf16.msra.mxu0 %v1270
        %1292 = vmatprep.subr.bf16.mxu0 0
        %1293 = vmatpush1.bf16.msra.mxu0 %v1271
        %1294 = vmatprep.subr.bf16.mxu0 0
        %1295 = vmatpush1.bf16.msra.mxu0 %v1272
        %1296 = vmatprep.subr.bf16.mxu0 0
        %1297 = vmatpush1.bf16.msra.mxu0 %v1273
        %1298 = vmatprep.subr.bf16.mxu0 0
        %1299 = vmatpush1.bf16.msra.mxu0 0
        %1300 = vmatprep.subr.bf16.mxu0 0
        %1301 = vmatpush1.bf16.msra.mxu0 0
        %1302 = vmatprep.subr.bf16.mxu0 0
        %1303 = vmatpush1.bf16.msra.mxu0 0
        %1304 = vmatprep.subr.bf16.mxu0 0
        %1305 = vmatpush1.bf16.msra.mxu0 0
        %1306 = vmatprep.subr.bf16.mxu0 0
        %1307 = vmatpush1.bf16.msra.mxu0 0
        %1308 = vmatprep.subr.bf16.mxu0 0
        %1309 = vmatpush1.bf16.msra.mxu0 0
        %1310 = vmatprep.subr.bf16.mxu0 0
        %1311 = vmatpush1.bf16.msra.mxu0 0
        %1312 = vmatprep.subr.bf16.mxu0 0
        %1313 = vmatpush1.bf16.msra.mxu0 0
        %1314 = vmatprep.mubr.bf16.mxu0 0
        %1315 = vmatmul.mubr.bf16.gmra.mrb[0].mxu0 %v1210
        %v1316 = vpop.f32.mrb[0].mxu0
        %v1317 = vadd.f32 %v1232, %v1316
        %v1318 = vpop.f32.mrb[0].mxu0
        %v1319 = vpop.f32.mrb[0].mxu0
        %v1320 = vpop.f32.mrb[0].mxu0
        %1321 = vdwg.mxu0
        %v1322 = vtanh.pop %v1317
        %v1323 = vpack.c.bf16 %v1322, %v1322
        %v1324 = vld [vmem:[#allocation19] sm:$0xf]
        %v1325 = vld [vmem:[#allocation19 + $0x4] sm:$0xf]
        %v1326 = vld [vmem:[#allocation19 + $0x8] sm:$0xf]
        %v1327 = vld [vmem:[#allocation19 + $0xc] sm:$0xf]
        %v1328 = vld [vmem:[#allocation19 + $0x10] sm:$0xf]
        %v1329 = vld [vmem:[#allocation19 + $0x14] sm:$0xf]
        %v1330 = vld [vmem:[#allocation19 + $0x18] sm:$0xf]
        %v1331 = vld [vmem:[#allocation19 + $0x1c] sm:$0xf]
        %v1332 = vld [vmem:[#allocation19 + $0x20] sm:$0xf]
        %v1333 = vld [vmem:[#allocation19 + $0x24] sm:$0xf]
        %v1334 = vld [vmem:[#allocation19 + $0x28] sm:$0xf]
        %v1335 = vld [vmem:[#allocation19 + $0x2c] sm:$0xf]
        %v1336 = vld [vmem:[#allocation19 + $0x30] sm:$0xf]
        %v1337 = vld [vmem:[#allocation19 + $0x34] sm:$0xf]
        %v1338 = vld [vmem:[#allocation19 + $0x38] sm:$0xf]
        %v1339 = vld [vmem:[#allocation19 + $0x3c] sm:$0xf]
        %v1340 = vld [vmem:[#allocation20] sm:$0x1]
        %v1342 = vlaneseq
        %v1343 = vshrl.u32 %v1342, 7
        %v1344 = vsub.s32 0, %v1343
        %v1345 = vrot.slane %v1340, %v1344
        %v1363 = vunpack.c.l.b16 %v1324
        %v1364 = vunpack.c.l.b16 %v1325
        %v1365 = vunpack.c.l.b16 %v1326
        %v1366 = vunpack.c.l.b16 %v1327
        %v1367 = vunpack.c.l.b16 %v1328
        %v1368 = vunpack.c.l.b16 %v1329
        %v1369 = vunpack.c.l.b16 %v1330
        %v1370 = vunpack.c.l.b16 %v1331
        %v1371 = vunpack.c.l.b16 %v1332
        %v1372 = vunpack.c.l.b16 %v1333
        %v1373 = vunpack.c.l.b16 %v1334
        %v1374 = vunpack.c.l.b16 %v1335
        %v1375 = vunpack.c.l.b16 %v1336
        %v1376 = vunpack.c.l.b16 %v1337
        %v1377 = vunpack.c.l.b16 %v1338
        %v1378 = vunpack.c.l.b16 %v1339
        %v1379 = vpack.c.b16 %v1364, %v1363
        %v1380 = vpack.c.b16 %v1366, %v1365
        %v1381 = vpack.c.b16 %v1368, %v1367
        %v1382 = vpack.c.b16 %v1370, %v1369
        %v1383 = vpack.c.b16 %v1372, %v1371
        %v1384 = vpack.c.b16 %v1374, %v1373
        %v1385 = vpack.c.b16 %v1376, %v1375
        %v1386 = vpack.c.b16 %v1378, %v1377
        %1395 = vmatprep.subr.bf16.mxu0 0
        %1396 = vmatpush1.bf16.msra.mxu0 %v1379
        %1397 = vmatprep.subr.bf16.mxu0 0
        %1398 = vmatpush1.bf16.msra.mxu0 %v1380
        %1399 = vmatprep.subr.bf16.mxu0 0
        %1400 = vmatpush1.bf16.msra.mxu0 %v1381
        %1401 = vmatprep.subr.bf16.mxu0 0
        %1402 = vmatpush1.bf16.msra.mxu0 %v1382
        %1403 = vmatprep.subr.bf16.mxu0 0
        %1404 = vmatpush1.bf16.msra.mxu0 %v1383
        %1405 = vmatprep.subr.bf16.mxu0 0
        %1406 = vmatpush1.bf16.msra.mxu0 %v1384
        %1407 = vmatprep.subr.bf16.mxu0 0
        %1408 = vmatpush1.bf16.msra.mxu0 %v1385
        %1409 = vmatprep.subr.bf16.mxu0 0
        %1410 = vmatpush1.bf16.msra.mxu0 %v1386
        %1411 = vmatprep.subr.bf16.mxu0 0
        %1412 = vmatpush1.bf16.msra.mxu0 0
        %1413 = vmatprep.subr.bf16.mxu0 0
        %1414 = vmatpush1.bf16.msra.mxu0 0
        %1415 = vmatprep.subr.bf16.mxu0 0
        %1416 = vmatpush1.bf16.msra.mxu0 0
        %1417 = vmatprep.subr.bf16.mxu0 0
        %1418 = vmatpush1.bf16.msra.mxu0 0
        %1419 = vmatprep.subr.bf16.mxu0 0
        %1420 = vmatpush1.bf16.msra.mxu0 0
        %1421 = vmatprep.subr.bf16.mxu0 0
        %1422 = vmatpush1.bf16.msra.mxu0 0
        %1423 = vmatprep.subr.bf16.mxu0 0
        %1424 = vmatpush1.bf16.msra.mxu0 0
        %1425 = vmatprep.subr.bf16.mxu0 0
        %1426 = vmatpush1.bf16.msra.mxu0 0
        %1427 = vmatprep.mubr.bf16.mxu0 0
        %1428 = vmatmul.mubr.bf16.gmra.mrb[0].mxu0 %v1323
        %v1429 = vpop.f32.mrb[0].mxu0
        %v1430 = vadd.f32 %v1345, %v1429
        %v1431 = vpop.f32.mrb[0].mxu0
        %v1432 = vpop.f32.mrb[0].mxu0
        %v1433 = vpop.f32.mrb[0].mxu0
        %1434 = vdwg.mxu0
        %v1435 = vxor.u32 %v1430, 2147483648
        %v1436 = vmul.f32 %v1435, 1.442695
        %v1437 = vpow.pop %v1436
        %v1438 = vadd.f32 %v1437, 1.0
        %v1439 = vrcp.pop %v1438
        %v1440 = vmul.f32 1.0, %v1439
        %s1441 = sld [smem:[#allocation7 + %s555]]
        %s1442 = sld [smem:[#allocation4 + %s555]]
        %p1443 = scmp.gt.s32.totalorder %s1441, 0
        %s1444 = scalar_select %p1443, 1, 0
        %s1445 = scvt.s32.f32 %s1444
        %s1446 = scalar_lea.vmem [#allocation11], %s1442
        %v1447 = vld [vmem:[%s1446] sm:$0x1]
        %v1448 = vstv %s1445
        %v1449 = vmul.f32 %v1448, %v1447
        %v1450 = vadd.f32 %v1449, 0.0
        %s1451 = sld [smem:[#allocation4 + %s557]]
        %p1452 = scmp.gt.s32.totalorder %s1441, 1
        %s1453 = scalar_select %p1452, 1, 0
        %s1454 = scvt.s32.f32 %s1453
        %s1455 = scalar_lea.vmem [#allocation11], %s1451
        %v1456 = vld [vmem:[%s1455] sm:$0x1]
        %v1457 = vstv %s1454
        %v1458 = vmul.f32 %v1457, %v1456
        %v1459 = vadd.f32 %v1450, %v1458
        %s1460 = sld [smem:[#allocation4 + %s578]]
        %p1461 = scmp.gt.s32.totalorder %s1441, 2
        %s1462 = scalar_select %p1461, 1, 0
        %s1463 = scvt.s32.f32 %s1462
        %s1464 = scalar_lea.vmem [#allocation11], %s1460
        %v1465 = vld [vmem:[%s1464] sm:$0x1]
        %v1466 = vstv %s1463
        %v1467 = vmul.f32 %v1466, %v1465
        %v1468 = vadd.f32 %v1459, %v1467
        %p1469 = scmp.gt.s32.totalorder %s1441, 1
        %s1470 = scalar_select %p1469, %s1441, 1
        %s1471 = scvt.s32.f32 %s1470
        %v1472 = vstv %s1471
        %v1473 = vrcp.pop %v1472
        %s1474 = vtos %v1473
        %v1475 = vstv %s1474
        %v1476 = vmul.f32 %v1468, %v1475
        %s1477 = sld [smem:[#allocation7 + %s557]]
        %s1478 = sld [smem:[#allocation4 + %s588]]
        %p1479 = scmp.gt.s32.totalorder %s1477, 0
        %s1480 = scalar_select %p1479, 1, 0
        %s1481 = scvt.s32.f32 %s1480
        %s1482 = scalar_lea.vmem [#allocation11], %s1478
        %v1483 = vld [vmem:[%s1482] sm:$0x1]
        %v1484 = vstv %s1481
        %v1485 = vmul.f32 %v1484, %v1483
        %v1486 = vadd.f32 %v1485, 0.0
        %s1487 = sld [smem:[#allocation4 + %s607]]
        %p1488 = scmp.gt.s32.totalorder %s1477, 1
        %s1489 = scalar_select %p1488, 1, 0
        %s1490 = scvt.s32.f32 %s1489
        %s1491 = scalar_lea.vmem [#allocation11], %s1487
        %v1492 = vld [vmem:[%s1491] sm:$0x1]
        %v1493 = vstv %s1490
        %v1494 = vmul.f32 %v1493, %v1492
        %v1495 = vadd.f32 %v1486, %v1494
        %s1496 = sld [smem:[#allocation4 + %s617]]
        %p1497 = scmp.gt.s32.totalorder %s1477, 2
        %s1498 = scalar_select %p1497, 1, 0
        %s1499 = scvt.s32.f32 %s1498
        %s1500 = scalar_lea.vmem [#allocation11], %s1496
        %v1501 = vld [vmem:[%s1500] sm:$0x1]
        %v1502 = vstv %s1499
        %v1503 = vmul.f32 %v1502, %v1501
        %v1504 = vadd.f32 %v1495, %v1503
        %p1505 = scmp.gt.s32.totalorder %s1477, 1
        %s1506 = scalar_select %p1505, %s1477, 1
        %s1507 = scvt.s32.f32 %s1506
        %v1508 = vstv %s1507
        %v1509 = vrcp.pop %v1508
        %s1510 = vtos %v1509
        %v1511 = vstv %s1510
        %v1512 = vmul.f32 %v1504, %v1511
        %s1513 = sld [smem:[#allocation7 + %s578]]
        %s1514 = sld [smem:[#allocation4 + %s627]]
        %p1515 = scmp.gt.s32.totalorder %s1513, 0
        %s1516 = scalar_select %p1515, 1, 0
        %s1517 = scvt.s32.f32 %s1516
        %s1518 = scalar_lea.vmem [#allocation11], %s1514
        %v1519 = vld [vmem:[%s1518] sm:$0x1]
        %v1520 = vstv %s1517
        %v1521 = vmul.f32 %v1520, %v1519
        %v1522 = vadd.f32 %v1521, 0.0
        %s1523 = sld [smem:[#allocation4 + %s637]]
        %p1524 = scmp.gt.s32.totalorder %s1513, 1
        %s1525 = scalar_select %p1524, 1, 0
        %s1526 = scvt.s32.f32 %s1525
        %s1527 = scalar_lea.vmem [#allocation11], %s1523
        %v1528 = vld [vmem:[%s1527] sm:$0x1]
        %v1529 = vstv %s1526
        %v1530 = vmul.f32 %v1529, %v1528
        %v1531 = vadd.f32 %v1522, %v1530
        %s1532 = sld [smem:[#allocation4 + %s656]]
        %p1533 = scmp.gt.s32.totalorder %s1513, 2
        %s1534 = scalar_select %p1533, 1, 0
        %s1535 = scvt.s32.f32 %s1534
        %s1536 = scalar_lea.vmem [#allocation11], %s1532
        %v1537 = vld [vmem:[%s1536] sm:$0x1]
        %v1538 = vstv %s1535
        %v1539 = vmul.f32 %v1538, %v1537
        %v1540 = vadd.f32 %v1531, %v1539
        %p1541 = scmp.gt.s32.totalorder %s1513, 1
        %s1542 = scalar_select %p1541, %s1513, 1
        %s1543 = scvt.s32.f32 %s1542
        %v1544 = vstv %s1543
        %v1545 = vrcp.pop %v1544
        %s1546 = vtos %v1545
        %v1547 = vstv %s1546
        %v1548 = vmul.f32 %v1540, %v1547
        %s1549 = sld [smem:[#allocation7 + %s588]]
        %s1550 = sld [smem:[#allocation4 + %s666]]
        %p1551 = scmp.gt.s32.totalorder %s1549, 0
        %s1552 = scalar_select %p1551, 1, 0
        %s1553 = scvt.s32.f32 %s1552
        %s1554 = scalar_lea.vmem [#allocation11], %s1550
        %v1555 = vld [vmem:[%s1554] sm:$0x1]
        %v1556 = vstv %s1553
        %v1557 = vmul.f32 %v1556, %v1555
        %v1558 = vadd.f32 %v1557, 0.0
        %s1559 = sld [smem:[#allocation4 + %s676]]
        %p1560 = scmp.gt.s32.totalorder %s1549, 1
        %s1561 = scalar_select %p1560, 1, 0
        %s1562 = scvt.s32.f32 %s1561
        %s1563 = scalar_lea.vmem [#allocation11], %s1559
        %v1564 = vld [vmem:[%s1563] sm:$0x1]
        %v1565 = vstv %s1562
        %v1566 = vmul.f32 %v1565, %v1564
        %v1567 = vadd.f32 %v1558, %v1566
        %s1568 = sld [smem:[#allocation4 + %s686]]
        %p1569 = scmp.gt.s32.totalorder %s1549, 2
        %s1570 = scalar_select %p1569, 1, 0
        %s1571 = scvt.s32.f32 %s1570
        %s1572 = scalar_lea.vmem [#allocation11], %s1568
        %v1573 = vld [vmem:[%s1572] sm:$0x1]
        %v1574 = vstv %s1571
        %v1575 = vmul.f32 %v1574, %v1573
        %v1576 = vadd.f32 %v1567, %v1575
        %p1577 = scmp.gt.s32.totalorder %s1549, 1
        %s1578 = scalar_select %p1577, %s1549, 1
        %s1579 = scvt.s32.f32 %s1578
        %v1580 = vstv %s1579
        %v1581 = vrcp.pop %v1580
        %s1582 = vtos %v1581
        %v1583 = vstv %s1582
        %v1584 = vmul.f32 %v1576, %v1583
        %s1585 = sld [smem:[#allocation7 + %s607]]
        %s1586 = sld [smem:[#allocation4 + %s705]]
        %p1587 = scmp.gt.s32.totalorder %s1585, 0
        %s1588 = scalar_select %p1587, 1, 0
        %s1589 = scvt.s32.f32 %s1588
        %s1590 = scalar_lea.vmem [#allocation11], %s1586
        %v1591 = vld [vmem:[%s1590] sm:$0x1]
        %v1592 = vstv %s1589
        %v1593 = vmul.f32 %v1592, %v1591
        %v1594 = vadd.f32 %v1593, 0.0
        %s1595 = sld [smem:[#allocation4 + %s715]]
        %p1596 = scmp.gt.s32.totalorder %s1585, 1
        %s1597 = scalar_select %p1596, 1, 0
        %s1598 = scvt.s32.f32 %s1597
        %s1599 = scalar_lea.vmem [#allocation11], %s1595
        %v1600 = vld [vmem:[%s1599] sm:$0x1]
        %v1601 = vstv %s1598
        %v1602 = vmul.f32 %v1601, %v1600
        %v1603 = vadd.f32 %v1594, %v1602
        %s1604 = sld [smem:[#allocation4 + %s725]]
        %p1605 = scmp.gt.s32.totalorder %s1585, 2
        %s1606 = scalar_select %p1605, 1, 0
        %s1607 = scvt.s32.f32 %s1606
        %s1608 = scalar_lea.vmem [#allocation11], %s1604
        %v1609 = vld [vmem:[%s1608] sm:$0x1]
        %v1610 = vstv %s1607
        %v1611 = vmul.f32 %v1610, %v1609
        %v1612 = vadd.f32 %v1603, %v1611
        %p1613 = scmp.gt.s32.totalorder %s1585, 1
        %s1614 = scalar_select %p1613, %s1585, 1
        %s1615 = scvt.s32.f32 %s1614
        %v1616 = vstv %s1615
        %v1617 = vrcp.pop %v1616
        %s1618 = vtos %v1617
        %v1619 = vstv %s1618
        %v1620 = vmul.f32 %v1612, %v1619
        %s1621 = sld [smem:[#allocation7 + %s617]]
        %s1622 = sld [smem:[#allocation4 + %s735]]
        %p1623 = scmp.gt.s32.totalorder %s1621, 0
        %s1624 = scalar_select %p1623, 1, 0
        %s1625 = scvt.s32.f32 %s1624
        %s1626 = scalar_lea.vmem [#allocation11], %s1622
        %v1627 = vld [vmem:[%s1626] sm:$0x1]
        %v1628 = vstv %s1625
        %v1629 = vmul.f32 %v1628, %v1627
        %v1630 = vadd.f32 %v1629, 0.0
        %s1631 = sld [smem:[#allocation4 + %s754]]
        %p1632 = scmp.gt.s32.totalorder %s1621, 1
        %s1633 = scalar_select %p1632, 1, 0
        %s1634 = scvt.s32.f32 %s1633
        %s1635 = scalar_lea.vmem [#allocation11], %s1631
        %v1636 = vld [vmem:[%s1635] sm:$0x1]
        %v1637 = vstv %s1634
        %v1638 = vmul.f32 %v1637, %v1636
        %v1639 = vadd.f32 %v1630, %v1638
        %s1640 = sld [smem:[#allocation4 + %s764]]
        %p1641 = scmp.gt.s32.totalorder %s1621, 2
        %s1642 = scalar_select %p1641, 1, 0
        %s1643 = scvt.s32.f32 %s1642
        %s1644 = scalar_lea.vmem [#allocation11], %s1640
        %v1645 = vld [vmem:[%s1644] sm:$0x1]
        %v1646 = vstv %s1643
        %v1647 = vmul.f32 %v1646, %v1645
        %v1648 = vadd.f32 %v1639, %v1647
        %p1649 = scmp.gt.s32.totalorder %s1621, 1
        %s1650 = scalar_select %p1649, %s1621, 1
        %s1651 = scvt.s32.f32 %s1650
        %v1652 = vstv %s1651
        %v1653 = vrcp.pop %v1652
        %s1654 = vtos %v1653
        %v1655 = vstv %s1654
        %v1656 = vmul.f32 %v1648, %v1655
        %s1657 = sld [smem:[#allocation7 + %s627]]
        %s1658 = sld [smem:[#allocation4 + %s774]]
        %p1659 = scmp.gt.s32.totalorder %s1657, 0
        %s1660 = scalar_select %p1659, 1, 0
        %s1661 = scvt.s32.f32 %s1660
        %s1662 = scalar_lea.vmem [#allocation11], %s1658
        %v1663 = vld [vmem:[%s1662] sm:$0x1]
        %v1664 = vstv %s1661
        %v1665 = vmul.f32 %v1664, %v1663
        %v1666 = vadd.f32 %v1665, 0.0
        %s1667 = sld [smem:[#allocation4 + %s784]]
        %p1668 = scmp.gt.s32.totalorder %s1657, 1
        %s1669 = scalar_select %p1668, 1, 0
        %s1670 = scvt.s32.f32 %s1669
        %s1671 = scalar_lea.vmem [#allocation11], %s1667
        %v1672 = vld [vmem:[%s1671] sm:$0x1]
        %v1673 = vstv %s1670
        %v1674 = vmul.f32 %v1673, %v1672
        %v1675 = vadd.f32 %v1666, %v1674
        %s1676 = sld [smem:[#allocation4 + %s803]]
        %p1677 = scmp.gt.s32.totalorder %s1657, 2
        %s1678 = scalar_select %p1677, 1, 0
        %s1679 = scvt.s32.f32 %s1678
        %s1680 = scalar_lea.vmem [#allocation11], %s1676
        %v1681 = vld [vmem:[%s1680] sm:$0x1]
        %v1682 = vstv %s1679
        %v1683 = vmul.f32 %v1682, %v1681
        %v1684 = vadd.f32 %v1675, %v1683
        %p1685 = scmp.gt.s32.totalorder %s1657, 1
        %s1686 = scalar_select %p1685, %s1657, 1
        %s1687 = scvt.s32.f32 %s1686
        %v1688 = vstv %s1687
        %v1689 = vrcp.pop %v1688
        %s1690 = vtos %v1689
        %v1691 = vstv %s1690
        %v1692 = vmul.f32 %v1684, %v1691
        %s1693 = sld [smem:[#allocation7 + %s637]]
        %s1694 = sld [smem:[#allocation4 + %s813]]
        %p1695 = scmp.gt.s32.totalorder %s1693, 0
        %s1696 = scalar_select %p1695, 1, 0
        %s1697 = scvt.s32.f32 %s1696
        %s1698 = scalar_lea.vmem [#allocation11], %s1694
        %v1699 = vld [vmem:[%s1698] sm:$0x1]
        %v1700 = vstv %s1697
        %v1701 = vmul.f32 %v1700, %v1699
        %v1702 = vadd.f32 %v1701, 0.0
        %s1703 = sld [smem:[#allocation4 + %s823]]
        %p1704 = scmp.gt.s32.totalorder %s1693, 1
        %s1705 = scalar_select %p1704, 1, 0
        %s1706 = scvt.s32.f32 %s1705
        %s1707 = scalar_lea.vmem [#allocation11], %s1703
        %v1708 = vld [vmem:[%s1707] sm:$0x1]
        %v1709 = vstv %s1706
        %v1710 = vmul.f32 %v1709, %v1708
        %v1711 = vadd.f32 %v1702, %v1710
        %s1712 = sld [smem:[#allocation4 + %s833]]
        %p1713 = scmp.gt.s32.totalorder %s1693, 2
        %s1714 = scalar_select %p1713, 1, 0
        %s1715 = scvt.s32.f32 %s1714
        %s1716 = scalar_lea.vmem [#allocation11], %s1712
        %v1717 = vld [vmem:[%s1716] sm:$0x1]
        %v1718 = vstv %s1715
        %v1719 = vmul.f32 %v1718, %v1717
        %v1720 = vadd.f32 %v1711, %v1719
        %p1721 = scmp.gt.s32.totalorder %s1693, 1
        %s1722 = scalar_select %p1721, %s1693, 1
        %s1723 = scvt.s32.f32 %s1722
        %v1724 = vstv %s1723
        %v1725 = vrcp.pop %v1724
        %s1726 = vtos %v1725
        %v1727 = vstv %s1726
        %v1728 = vmul.f32 %v1720, %v1727
        %v1730 = vrot.slane %v1512, 7
        %v1733 = vrot.slane %v1548, 6
        %v1736 = vrot.slane %v1584, 5
        %v1739 = vrot.slane %v1620, 4
        %v1742 = vrot.slane %v1656, 3
        %v1745 = vrot.slane %v1692, 2
        %v1748 = vrot.slane %v1728, 1
        %v1750 = vsel %vm970, %v1476, %v1730
        %v1751 = vsel %vm972, %v1750, %v1733
        %v1752 = vsel %vm974, %v1751, %v1736
        %v1753 = vsel %vm976, %v1752, %v1739
        %v1754 = vsel %vm978, %v1753, %v1742
        %v1755 = vsel %vm980, %v1754, %v1745
        %v1756 = vsel %vm982, %v1755, %v1748
        %v1757 = vpack.c.bf16 %v1756, %v1756
        %s1758 = scalar_lea.vmem %s9, 64
        %v1759 = vld [vmem:[%s1758] sm:$0xf]
        %v1760 = vld [vmem:[%s1758 + $0x4] sm:$0xf]
        %v1761 = vld [vmem:[%s1758 + $0x8] sm:$0xf]
        %v1762 = vld [vmem:[%s1758 + $0xc] sm:$0xf]
        %v1763 = vld [vmem:[%s1758 + $0x10] sm:$0xf]
        %v1764 = vld [vmem:[%s1758 + $0x14] sm:$0xf]
        %v1765 = vld [vmem:[%s1758 + $0x18] sm:$0xf]
        %v1766 = vld [vmem:[%s1758 + $0x1c] sm:$0xf]
        %v1767 = vld [vmem:[%s1758 + $0x20] sm:$0xf]
        %v1768 = vld [vmem:[%s1758 + $0x24] sm:$0xf]
        %v1769 = vld [vmem:[%s1758 + $0x28] sm:$0xf]
        %v1770 = vld [vmem:[%s1758 + $0x2c] sm:$0xf]
        %v1771 = vld [vmem:[%s1758 + $0x30] sm:$0xf]
        %v1772 = vld [vmem:[%s1758 + $0x34] sm:$0xf]
        %v1773 = vld [vmem:[%s1758 + $0x38] sm:$0xf]
        %v1774 = vld [vmem:[%s1758 + $0x3c] sm:$0xf]
        %s1775 = scalar_lea.vmem [#allocation13], 1
        %v1776 = vld [vmem:[%s1775] sm:$0x1]
        %v1778 = vlaneseq
        %v1779 = vshrl.u32 %v1778, 7
        %v1780 = vsub.s32 0, %v1779
        %v1781 = vrot.slane %v1776, %v1780
        %v1799 = vunpack.c.l.b16 %v1759
        %v1800 = vunpack.c.l.b16 %v1760
        %v1801 = vunpack.c.l.b16 %v1761
        %v1802 = vunpack.c.l.b16 %v1762
        %v1803 = vunpack.c.l.b16 %v1763
        %v1804 = vunpack.c.l.b16 %v1764
        %v1805 = vunpack.c.l.b16 %v1765
        %v1806 = vunpack.c.l.b16 %v1766
        %v1807 = vunpack.c.l.b16 %v1767
        %v1808 = vunpack.c.l.b16 %v1768
        %v1809 = vunpack.c.l.b16 %v1769
        %v1810 = vunpack.c.l.b16 %v1770
        %v1811 = vunpack.c.l.b16 %v1771
        %v1812 = vunpack.c.l.b16 %v1772
        %v1813 = vunpack.c.l.b16 %v1773
        %v1814 = vunpack.c.l.b16 %v1774
        %v1815 = vpack.c.b16 %v1800, %v1799
        %v1816 = vpack.c.b16 %v1802, %v1801
        %v1817 = vpack.c.b16 %v1804, %v1803
        %v1818 = vpack.c.b16 %v1806, %v1805
        %v1819 = vpack.c.b16 %v1808, %v1807
        %v1820 = vpack.c.b16 %v1810, %v1809
        %v1821 = vpack.c.b16 %v1812, %v1811
        %v1822 = vpack.c.b16 %v1814, %v1813
        %1831 = vmatprep.subr.bf16.mxu0 0
        %1832 = vmatpush1.bf16.msra.mxu0 %v1815
        %1833 = vmatprep.subr.bf16.mxu0 0
        %1834 = vmatpush1.bf16.msra.mxu0 %v1816
        %1835 = vmatprep.subr.bf16.mxu0 0
        %1836 = vmatpush1.bf16.msra.mxu0 %v1817
        %1837 = vmatprep.subr.bf16.mxu0 0
        %1838 = vmatpush1.bf16.msra.mxu0 %v1818
        %1839 = vmatprep.subr.bf16.mxu0 0
        %1840 = vmatpush1.bf16.msra.mxu0 %v1819
        %1841 = vmatprep.subr.bf16.mxu0 0
        %1842 = vmatpush1.bf16.msra.mxu0 %v1820
        %1843 = vmatprep.subr.bf16.mxu0 0
        %1844 = vmatpush1.bf16.msra.mxu0 %v1821
        %1845 = vmatprep.subr.bf16.mxu0 0
        %1846 = vmatpush1.bf16.msra.mxu0 %v1822
        %1847 = vmatprep.subr.bf16.mxu0 0
        %1848 = vmatpush1.bf16.msra.mxu0 0
        %1849 = vmatprep.subr.bf16.mxu0 0
        %1850 = vmatpush1.bf16.msra.mxu0 0
        %1851 = vmatprep.subr.bf16.mxu0 0
        %1852 = vmatpush1.bf16.msra.mxu0 0
        %1853 = vmatprep.subr.bf16.mxu0 0
        %1854 = vmatpush1.bf16.msra.mxu0 0
        %1855 = vmatprep.subr.bf16.mxu0 0
        %1856 = vmatpush1.bf16.msra.mxu0 0
        %1857 = vmatprep.subr.bf16.mxu0 0
        %1858 = vmatpush1.bf16.msra.mxu0 0
        %1859 = vmatprep.subr.bf16.mxu0 0
        %1860 = vmatpush1.bf16.msra.mxu0 0
        %1861 = vmatprep.subr.bf16.mxu0 0
        %1862 = vmatpush1.bf16.msra.mxu0 0
        %1863 = vmatprep.mubr.bf16.mxu0 0
        %1864 = vmatmul.mubr.bf16.gmra.mrb[0].mxu0 %v1757
        %v1865 = vpop.f32.mrb[0].mxu0
        %v1866 = vadd.f32 %v1781, %v1865
        %v1867 = vpop.f32.mrb[0].mxu0
        %v1868 = vpop.f32.mrb[0].mxu0
        %v1869 = vpop.f32.mrb[0].mxu0
        %1870 = vdwg.mxu0
        %v1871 = vtanh.pop %v1866
        %v1872 = vpack.c.bf16 %v1871, %v1871
        %s1873 = scalar_lea.vmem %s11, 64
        %v1874 = vld [vmem:[%s1873] sm:$0xf]
        %v1875 = vld [vmem:[%s1873 + $0x4] sm:$0xf]
        %v1876 = vld [vmem:[%s1873 + $0x8] sm:$0xf]
        %v1877 = vld [vmem:[%s1873 + $0xc] sm:$0xf]
        %v1878 = vld [vmem:[%s1873 + $0x10] sm:$0xf]
        %v1879 = vld [vmem:[%s1873 + $0x14] sm:$0xf]
        %v1880 = vld [vmem:[%s1873 + $0x18] sm:$0xf]
        %v1881 = vld [vmem:[%s1873 + $0x1c] sm:$0xf]
        %v1882 = vld [vmem:[%s1873 + $0x20] sm:$0xf]
        %v1883 = vld [vmem:[%s1873 + $0x24] sm:$0xf]
        %v1884 = vld [vmem:[%s1873 + $0x28] sm:$0xf]
        %v1885 = vld [vmem:[%s1873 + $0x2c] sm:$0xf]
        %v1886 = vld [vmem:[%s1873 + $0x30] sm:$0xf]
        %v1887 = vld [vmem:[%s1873 + $0x34] sm:$0xf]
        %v1888 = vld [vmem:[%s1873 + $0x38] sm:$0xf]
        %v1889 = vld [vmem:[%s1873 + $0x3c] sm:$0xf]
        %s1890 = scalar_lea.vmem [#allocation14], 1
        %v1891 = vld [vmem:[%s1890] sm:$0x1]
        %v1893 = vlaneseq
        %v1894 = vshrl.u32 %v1893, 7
        %v1895 = vsub.s32 0, %v1894
        %v1896 = vrot.slane %v1891, %v1895
        %v1914 = vunpack.c.l.b16 %v1874
        %v1915 = vunpack.c.l.b16 %v1875
        %v1916 = vunpack.c.l.b16 %v1876
        %v1917 = vunpack.c.l.b16 %v1877
        %v1918 = vunpack.c.l.b16 %v1878
        %v1919 = vunpack.c.l.b16 %v1879
        %v1920 = vunpack.c.l.b16 %v1880
        %v1921 = vunpack.c.l.b16 %v1881
        %v1922 = vunpack.c.l.b16 %v1882
        %v1923 = vunpack.c.l.b16 %v1883
        %v1924 = vunpack.c.l.b16 %v1884
        %v1925 = vunpack.c.l.b16 %v1885
        %v1926 = vunpack.c.l.b16 %v1886
        %v1927 = vunpack.c.l.b16 %v1887
        %v1928 = vunpack.c.l.b16 %v1888
        %v1929 = vunpack.c.l.b16 %v1889
        %v1930 = vpack.c.b16 %v1915, %v1914
        %v1931 = vpack.c.b16 %v1917, %v1916
        %v1932 = vpack.c.b16 %v1919, %v1918
        %v1933 = vpack.c.b16 %v1921, %v1920
        %v1934 = vpack.c.b16 %v1923, %v1922
        %v1935 = vpack.c.b16 %v1925, %v1924
        %v1936 = vpack.c.b16 %v1927, %v1926
        %v1937 = vpack.c.b16 %v1929, %v1928
        %1946 = vmatprep.subr.bf16.mxu0 0
        %1947 = vmatpush1.bf16.msra.mxu0 %v1930
        %1948 = vmatprep.subr.bf16.mxu0 0
        %1949 = vmatpush1.bf16.msra.mxu0 %v1931
        %1950 = vmatprep.subr.bf16.mxu0 0
        %1951 = vmatpush1.bf16.msra.mxu0 %v1932
        %1952 = vmatprep.subr.bf16.mxu0 0
        %1953 = vmatpush1.bf16.msra.mxu0 %v1933
        %1954 = vmatprep.subr.bf16.mxu0 0
        %1955 = vmatpush1.bf16.msra.mxu0 %v1934
        %1956 = vmatprep.subr.bf16.mxu0 0
        %1957 = vmatpush1.bf16.msra.mxu0 %v1935
        %1958 = vmatprep.subr.bf16.mxu0 0
        %1959 = vmatpush1.bf16.msra.mxu0 %v1936
        %1960 = vmatprep.subr.bf16.mxu0 0
        %1961 = vmatpush1.bf16.msra.mxu0 %v1937
        %1962 = vmatprep.subr.bf16.mxu0 0
        %1963 = vmatpush1.bf16.msra.mxu0 0
        %1964 = vmatprep.subr.bf16.mxu0 0
        %1965 = vmatpush1.bf16.msra.mxu0 0
        %1966 = vmatprep.subr.bf16.mxu0 0
        %1967 = vmatpush1.bf16.msra.mxu0 0
        %1968 = vmatprep.subr.bf16.mxu0 0
        %1969 = vmatpush1.bf16.msra.mxu0 0
        %1970 = vmatprep.subr.bf16.mxu0 0
        %1971 = vmatpush1.bf16.msra.mxu0 0
        %1972 = vmatprep.subr.bf16.mxu0 0
        %1973 = vmatpush1.bf16.msra.mxu0 0
        %1974 = vmatprep.subr.bf16.mxu0 0
        %1975 = vmatpush1.bf16.msra.mxu0 0
        %1976 = vmatprep.subr.bf16.mxu0 0
        %1977 = vmatpush1.bf16.msra.mxu0 0
        %1978 = vmatprep.mubr.bf16.mxu0 0
        %1979 = vmatmul.mubr.bf16.gmra.mrb[0].mxu0 %v1872
        %v1980 = vpop.f32.mrb[0].mxu0
        %v1981 = vadd.f32 %v1896, %v1980
        %v1982 = vpop.f32.mrb[0].mxu0
        %v1983 = vpop.f32.mrb[0].mxu0
        %v1984 = vpop.f32.mrb[0].mxu0
        %1985 = vdwg.mxu0
        %v1986 = vtanh.pop %v1981
        %v1987 = vpack.c.bf16 %v1986, %v1986
        %s1988 = scalar_lea.vmem [#allocation16], 64
        %v1989 = vld [vmem:[%s1988] sm:$0xf]
        %v1990 = vld [vmem:[%s1988 + $0x4] sm:$0xf]
        %v1991 = vld [vmem:[%s1988 + $0x8] sm:$0xf]
        %v1992 = vld [vmem:[%s1988 + $0xc] sm:$0xf]
        %v1993 = vld [vmem:[%s1988 + $0x10] sm:$0xf]
        %v1994 = vld [vmem:[%s1988 + $0x14] sm:$0xf]
        %v1995 = vld [vmem:[%s1988 + $0x18] sm:$0xf]
        %v1996 = vld [vmem:[%s1988 + $0x1c] sm:$0xf]
        %v1997 = vld [vmem:[%s1988 + $0x20] sm:$0xf]
        %v1998 = vld [vmem:[%s1988 + $0x24] sm:$0xf]
        %v1999 = vld [vmem:[%s1988 + $0x28] sm:$0xf]
        %v2000 = vld [vmem:[%s1988 + $0x2c] sm:$0xf]
        %v2001 = vld [vmem:[%s1988 + $0x30] sm:$0xf]
        %v2002 = vld [vmem:[%s1988 + $0x34] sm:$0xf]
        %v2003 = vld [vmem:[%s1988 + $0x38] sm:$0xf]
        %v2004 = vld [vmem:[%s1988 + $0x3c] sm:$0xf]
        %s2005 = scalar_lea.vmem [#allocation17], 1
        %v2006 = vld [vmem:[%s2005] sm:$0x1]
        %v2008 = vlaneseq
        %v2009 = vshrl.u32 %v2008, 7
        %v2010 = vsub.s32 0, %v2009
        %v2011 = vrot.slane %v2006, %v2010
        %v2029 = vunpack.c.l.b16 %v1989
        %v2030 = vunpack.c.l.b16 %v1990
        %v2031 = vunpack.c.l.b16 %v1991
        %v2032 = vunpack.c.l.b16 %v1992
        %v2033 = vunpack.c.l.b16 %v1993
        %v2034 = vunpack.c.l.b16 %v1994
        %v2035 = vunpack.c.l.b16 %v1995
        %v2036 = vunpack.c.l.b16 %v1996
        %v2037 = vunpack.c.l.b16 %v1997
        %v2038 = vunpack.c.l.b16 %v1998
        %v2039 = vunpack.c.l.b16 %v1999
        %v2040 = vunpack.c.l.b16 %v2000
        %v2041 = vunpack.c.l.b16 %v2001
        %v2042 = vunpack.c.l.b16 %v2002
        %v2043 = vunpack.c.l.b16 %v2003
        %v2044 = vunpack.c.l.b16 %v2004
        %v2045 = vpack.c.b16 %v2030, %v2029
        %v2046 = vpack.c.b16 %v2032, %v2031
        %v2047 = vpack.c.b16 %v2034, %v2033
        %v2048 = vpack.c.b16 %v2036, %v2035
        %v2049 = vpack.c.b16 %v2038, %v2037
        %v2050 = vpack.c.b16 %v2040, %v2039
        %v2051 = vpack.c.b16 %v2042, %v2041
        %v2052 = vpack.c.b16 %v2044, %v2043
        %2061 = vmatprep.subr.bf16.mxu0 0
        %2062 = vmatpush1.bf16.msra.mxu0 %v2045
        %2063 = vmatprep.subr.bf16.mxu0 0
        %2064 = vmatpush1.bf16.msra.mxu0 %v2046
        %2065 = vmatprep.subr.bf16.mxu0 0
        %2066 = vmatpush1.bf16.msra.mxu0 %v2047
        %2067 = vmatprep.subr.bf16.mxu0 0
        %2068 = vmatpush1.bf16.msra.mxu0 %v2048
        %2069 = vmatprep.subr.bf16.mxu0 0
        %2070 = vmatpush1.bf16.msra.mxu0 %v2049
        %2071 = vmatprep.subr.bf16.mxu0 0
        %2072 = vmatpush1.bf16.msra.mxu0 %v2050
        %2073 = vmatprep.subr.bf16.mxu0 0
        %2074 = vmatpush1.bf16.msra.mxu0 %v2051
        %2075 = vmatprep.subr.bf16.mxu0 0
        %2076 = vmatpush1.bf16.msra.mxu0 %v2052
        %2077 = vmatprep.subr.bf16.mxu0 0
        %2078 = vmatpush1.bf16.msra.mxu0 0
        %2079 = vmatprep.subr.bf16.mxu0 0
        %2080 = vmatpush1.bf16.msra.mxu0 0
        %2081 = vmatprep.subr.bf16.mxu0 0
        %2082 = vmatpush1.bf16.msra.mxu0 0
        %2083 = vmatprep.subr.bf16.mxu0 0
        %2084 = vmatpush1.bf16.msra.mxu0 0
        %2085 = vmatprep.subr.bf16.mxu0 0
        %2086 = vmatpush1.bf16.msra.mxu0 0
        %2087 = vmatprep.subr.bf16.mxu0 0
        %2088 = vmatpush1.bf16.msra.mxu0 0
        %2089 = vmatprep.subr.bf16.mxu0 0
        %2090 = vmatpush1.bf16.msra.mxu0 0
        %2091 = vmatprep.subr.bf16.mxu0 0
        %2092 = vmatpush1.bf16.msra.mxu0 0
        %2093 = vmatprep.mubr.bf16.mxu0 0
        %2094 = vmatmul.mubr.bf16.gmra.mrb[0].mxu0 %v1987
        %v2095 = vpop.f32.mrb[0].mxu0
        %v2096 = vadd.f32 %v2011, %v2095
        %v2097 = vpop.f32.mrb[0].mxu0
        %v2098 = vpop.f32.mrb[0].mxu0
        %v2099 = vpop.f32.mrb[0].mxu0
        %2100 = vdwg.mxu0
        %v2101 = vtanh.pop %v2096
        %v2102 = vpack.c.bf16 %v2101, %v2101
        %s2103 = scalar_lea.vmem [#allocation19], 64
        %v2104 = vld [vmem:[%s2103] sm:$0xf]
        %v2105 = vld [vmem:[%s2103 + $0x4] sm:$0xf]
        %v2106 = vld [vmem:[%s2103 + $0x8] sm:$0xf]
        %v2107 = vld [vmem:[%s2103 + $0xc] sm:$0xf]
        %v2108 = vld [vmem:[%s2103 + $0x10] sm:$0xf]
        %v2109 = vld [vmem:[%s2103 + $0x14] sm:$0xf]
        %v2110 = vld [vmem:[%s2103 + $0x18] sm:$0xf]
        %v2111 = vld [vmem:[%s2103 + $0x1c] sm:$0xf]
        %v2112 = vld [vmem:[%s2103 + $0x20] sm:$0xf]
        %v2113 = vld [vmem:[%s2103 + $0x24] sm:$0xf]
        %v2114 = vld [vmem:[%s2103 + $0x28] sm:$0xf]
        %v2115 = vld [vmem:[%s2103 + $0x2c] sm:$0xf]
        %v2116 = vld [vmem:[%s2103 + $0x30] sm:$0xf]
        %v2117 = vld [vmem:[%s2103 + $0x34] sm:$0xf]
        %v2118 = vld [vmem:[%s2103 + $0x38] sm:$0xf]
        %v2119 = vld [vmem:[%s2103 + $0x3c] sm:$0xf]
        %s2120 = scalar_lea.vmem [#allocation20], 1
        %v2121 = vld [vmem:[%s2120] sm:$0x1]
        %v2123 = vlaneseq
        %v2124 = vshrl.u32 %v2123, 7
        %v2125 = vsub.s32 0, %v2124
        %v2126 = vrot.slane %v2121, %v2125
        %v2144 = vunpack.c.l.b16 %v2104
        %v2145 = vunpack.c.l.b16 %v2105
        %v2146 = vunpack.c.l.b16 %v2106
        %v2147 = vunpack.c.l.b16 %v2107
        %v2148 = vunpack.c.l.b16 %v2108
        %v2149 = vunpack.c.l.b16 %v2109
        %v2150 = vunpack.c.l.b16 %v2110
        %v2151 = vunpack.c.l.b16 %v2111
        %v2152 = vunpack.c.l.b16 %v2112
        %v2153 = vunpack.c.l.b16 %v2113
        %v2154 = vunpack.c.l.b16 %v2114
        %v2155 = vunpack.c.l.b16 %v2115
        %v2156 = vunpack.c.l.b16 %v2116
        %v2157 = vunpack.c.l.b16 %v2117
        %v2158 = vunpack.c.l.b16 %v2118
        %v2159 = vunpack.c.l.b16 %v2119
        %v2160 = vpack.c.b16 %v2145, %v2144
        %v2161 = vpack.c.b16 %v2147, %v2146
        %v2162 = vpack.c.b16 %v2149, %v2148
        %v2163 = vpack.c.b16 %v2151, %v2150
        %v2164 = vpack.c.b16 %v2153, %v2152
        %v2165 = vpack.c.b16 %v2155, %v2154
        %v2166 = vpack.c.b16 %v2157, %v2156
        %v2167 = vpack.c.b16 %v2159, %v2158
        %2176 = vmatprep.subr.bf16.mxu0 0
        %2177 = vmatpush1.bf16.msra.mxu0 %v2160
        %2178 = vmatprep.subr.bf16.mxu0 0
        %2179 = vmatpush1.bf16.msra.mxu0 %v2161
        %2180 = vmatprep.subr.bf16.mxu0 0
        %2181 = vmatpush1.bf16.msra.mxu0 %v2162
        %2182 = vmatprep.subr.bf16.mxu0 0
        %2183 = vmatpush1.bf16.msra.mxu0 %v2163
        %2184 = vmatprep.subr.bf16.mxu0 0
        %2185 = vmatpush1.bf16.msra.mxu0 %v2164
        %2186 = vmatprep.subr.bf16.mxu0 0
        %2187 = vmatpush1.bf16.msra.mxu0 %v2165
        %2188 = vmatprep.subr.bf16.mxu0 0
        %2189 = vmatpush1.bf16.msra.mxu0 %v2166
        %2190 = vmatprep.subr.bf16.mxu0 0
        %2191 = vmatpush1.bf16.msra.mxu0 %v2167
        %2192 = vmatprep.subr.bf16.mxu0 0
        %2193 = vmatpush1.bf16.msra.mxu0 0
        %2194 = vmatprep.subr.bf16.mxu0 0
        %2195 = vmatpush1.bf16.msra.mxu0 0
        %2196 = vmatprep.subr.bf16.mxu0 0
        %2197 = vmatpush1.bf16.msra.mxu0 0
        %2198 = vmatprep.subr.bf16.mxu0 0
        %2199 = vmatpush1.bf16.msra.mxu0 0
        %2200 = vmatprep.subr.bf16.mxu0 0
        %2201 = vmatpush1.bf16.msra.mxu0 0
        %2202 = vmatprep.subr.bf16.mxu0 0
        %2203 = vmatpush1.bf16.msra.mxu0 0
        %2204 = vmatprep.subr.bf16.mxu0 0
        %2205 = vmatpush1.bf16.msra.mxu0 0
        %2206 = vmatprep.subr.bf16.mxu0 0
        %2207 = vmatpush1.bf16.msra.mxu0 0
        %2208 = vmatprep.mubr.bf16.mxu0 0
        %2209 = vmatmul.mubr.bf16.gmra.mrb[0].mxu0 %v2102
        %v2210 = vpop.f32.mrb[0].mxu0
        %v2211 = vadd.f32 %v2126, %v2210
        %v2212 = vpop.f32.mrb[0].mxu0
        %v2213 = vpop.f32.mrb[0].mxu0
        %v2214 = vpop.f32.mrb[0].mxu0
        %2215 = vdwg.mxu0
        %v2216 = vxor.u32 %v2211, 2147483648
        %v2217 = vmul.f32 %v2216, 1.442695
        %v2218 = vpow.pop %v2217
        %v2219 = vadd.f32 %v2218, 1.0
        %v2220 = vrcp.pop %v2219
        %v2221 = vmul.f32 1.0, %v2220
        %s2222 = sld [smem:[#allocation5 + %s555]]
        %p2223 = scmp.gt.s32.totalorder %s558, 0
        %s2224 = scalar_select %p2223, 1, 0
        %s2225 = scvt.s32.f32 %s2224
        %s2226 = sshra.s32 %s2222, 3
        %s2227 = sand.u32 %s2222, 7
        %s2228 = sshra.s32 %s2222, 3
        %s2229 = sand.u32 %s2222, 7
        %s2230 = smul.u32 %s2226, 2
        %s2231 = smul.u32 %s2230, 8
        %s2232 = sadd.s32 %s2231, %s2229
        %s2233 = scalar_lea.vmem %s8, %s2232
        %v2234 = vld [vmem:[%s2233] ss:$8 sm:$0x3]
        %v2235 = vstv %s2225
        %v2236 = vmul.f32 %v2235, %v2234
        %s2237 = sld [smem:[#allocation5 + %s557]]
        %p2238 = scmp.gt.s32.totalorder %s558, 1
        %s2239 = scalar_select %p2238, 1, 0
        %s2240 = scvt.s32.f32 %s2239
        %s2241 = sshra.s32 %s2237, 3
        %s2242 = sand.u32 %s2237, 7
        %s2243 = sshra.s32 %s2237, 3
        %s2244 = sand.u32 %s2237, 7
        %s2245 = smul.u32 %s2241, 2
        %s2246 = smul.u32 %s2245, 8
        %s2247 = sadd.s32 %s2246, %s2244
        %s2248 = scalar_lea.vmem %s8, %s2247
        %v2249 = vld [vmem:[%s2248] ss:$8 sm:$0x3]
        %v2250 = vstv %s2240
        %v2251 = vmul.f32 %v2250, %v2249
        %s2252 = sld [smem:[#allocation5 + %s578]]
        %p2253 = scmp.gt.s32.totalorder %s558, 2
        %s2254 = scalar_select %p2253, 1, 0
        %s2255 = scvt.s32.f32 %s2254
        %s2256 = sshra.s32 %s2252, 3
        %s2257 = sand.u32 %s2252, 7
        %s2258 = sshra.s32 %s2252, 3
        %s2259 = sand.u32 %s2252, 7
        %s2260 = smul.u32 %s2256, 2
        %s2261 = smul.u32 %s2260, 8
        %s2262 = sadd.s32 %s2261, %s2259
        %s2263 = scalar_lea.vmem %s8, %s2262
        %v2264 = vld [vmem:[%s2263] ss:$8 sm:$0x3]
        %v2265 = vstv %s2255
        %v2266 = vmul.f32 %v2265, %v2264
        %s2267 = sld [smem:[#allocation5 + %s588]]
        %p2268 = scmp.gt.s32.totalorder %s558, 3
        %s2269 = scalar_select %p2268, 1, 0
        %s2270 = scvt.s32.f32 %s2269
        %s2271 = sshra.s32 %s2267, 3
        %s2272 = sand.u32 %s2267, 7
        %s2273 = sshra.s32 %s2267, 3
        %s2274 = sand.u32 %s2267, 7
        %s2275 = smul.u32 %s2271, 2
        %s2276 = smul.u32 %s2275, 8
        %s2277 = sadd.s32 %s2276, %s2274
        %s2278 = scalar_lea.vmem %s8, %s2277
        %v2279 = vld [vmem:[%s2278] ss:$8 sm:$0x3]
        %v2280 = vstv %s2270
        %v2281 = vmul.f32 %v2280, %v2279
        %s2282 = sld [smem:[#allocation5 + %s607]]
        %p2283 = scmp.gt.s32.totalorder %s558, 4
        %s2284 = scalar_select %p2283, 1, 0
        %s2285 = scvt.s32.f32 %s2284
        %s2286 = sshra.s32 %s2282, 3
        %s2287 = sand.u32 %s2282, 7
        %s2288 = sshra.s32 %s2282, 3
        %s2289 = sand.u32 %s2282, 7
        %s2290 = smul.u32 %s2286, 2
        %s2291 = smul.u32 %s2290, 8
        %s2292 = sadd.s32 %s2291, %s2289
        %s2293 = scalar_lea.vmem %s8, %s2292
        %v2294 = vld [vmem:[%s2293] ss:$8 sm:$0x3]
        %v2295 = vstv %s2285
        %v2296 = vmul.f32 %v2295, %v2294
        %s2297 = sld [smem:[#allocation5 + %s617]]
        %p2298 = scmp.gt.s32.totalorder %s558, 5
        %s2299 = scalar_select %p2298, 1, 0
        %s2300 = scvt.s32.f32 %s2299
        %s2301 = sshra.s32 %s2297, 3
        %s2302 = sand.u32 %s2297, 7
        %s2303 = sshra.s32 %s2297, 3
        %s2304 = sand.u32 %s2297, 7
        %s2305 = smul.u32 %s2301, 2
        %s2306 = smul.u32 %s2305, 8
        %s2307 = sadd.s32 %s2306, %s2304
        %s2308 = scalar_lea.vmem %s8, %s2307
        %v2309 = vld [vmem:[%s2308] ss:$8 sm:$0x3]
        %v2310 = vstv %s2300
        %v2311 = vmul.f32 %v2310, %v2309
        %s2312 = sld [smem:[#allocation5 + %s627]]
        %p2313 = scmp.gt.s32.totalorder %s558, 6
        %s2314 = scalar_select %p2313, 1, 0
        %s2315 = scvt.s32.f32 %s2314
        %s2316 = sshra.s32 %s2312, 3
        %s2317 = sand.u32 %s2312, 7
        %s2318 = sshra.s32 %s2312, 3
        %s2319 = sand.u32 %s2312, 7
        %s2320 = smul.u32 %s2316, 2
        %s2321 = smul.u32 %s2320, 8
        %s2322 = sadd.s32 %s2321, %s2319
        %s2323 = scalar_lea.vmem %s8, %s2322
        %v2324 = vld [vmem:[%s2323] ss:$8 sm:$0x3]
        %v2325 = vstv %s2315
        %v2326 = vmul.f32 %v2325, %v2324
        %s2327 = sld [smem:[#allocation5 + %s637]]
        %p2328 = scmp.gt.s32.totalorder %s558, 7
        %s2329 = scalar_select %p2328, 1, 0
        %s2330 = scvt.s32.f32 %s2329
        %s2331 = sshra.s32 %s2327, 3
        %s2332 = sand.u32 %s2327, 7
        %s2333 = sshra.s32 %s2327, 3
        %s2334 = sand.u32 %s2327, 7
        %s2335 = smul.u32 %s2331, 2
        %s2336 = smul.u32 %s2335, 8
        %s2337 = sadd.s32 %s2336, %s2334
        %s2338 = scalar_lea.vmem %s8, %s2337
        %v2339 = vld [vmem:[%s2338] ss:$8 sm:$0x3]
        %v2340 = vstv %s2330
        %v2341 = vmul.f32 %v2340, %v2339
        %v2343 = vlaneseq
        %v2344 = vshrl.u32 %v2343, 7
        %v2345 = vsub.s32 0, %v2344
        %v2346 = vrot.slane %v2236, %v2345
        %v2347 = vlaneseq
        %v2348 = vshrl.u32 %v2347, 7
        %v2349 = vsub.s32 1, %v2348
        %v2350 = vrot.slane %v2236, %v2349
        %v2354 = vlaneseq
        %v2355 = vshrl.u32 %v2354, 7
        %v2356 = vsub.s32 0, %v2355
        %v2357 = vrot.slane %v2251, %v2356
        %v2358 = vlaneseq
        %v2359 = vshrl.u32 %v2358, 7
        %v2360 = vsub.s32 1, %v2359
        %v2361 = vrot.slane %v2251, %v2360
        %v2365 = vlaneseq
        %v2366 = vshrl.u32 %v2365, 7
        %v2367 = vsub.s32 0, %v2366
        %v2368 = vrot.slane %v2266, %v2367
        %v2369 = vlaneseq
        %v2370 = vshrl.u32 %v2369, 7
        %v2371 = vsub.s32 1, %v2370
        %v2372 = vrot.slane %v2266, %v2371
        %v2376 = vlaneseq
        %v2377 = vshrl.u32 %v2376, 7
        %v2378 = vsub.s32 0, %v2377
        %v2379 = vrot.slane %v2281, %v2378
        %v2380 = vlaneseq
        %v2381 = vshrl.u32 %v2380, 7
        %v2382 = vsub.s32 1, %v2381
        %v2383 = vrot.slane %v2281, %v2382
        %v2387 = vlaneseq
        %v2388 = vshrl.u32 %v2387, 7
        %v2389 = vsub.s32 0, %v2388
        %v2390 = vrot.slane %v2296, %v2389
        %v2391 = vlaneseq
        %v2392 = vshrl.u32 %v2391, 7
        %v2393 = vsub.s32 1, %v2392
        %v2394 = vrot.slane %v2296, %v2393
        %v2398 = vlaneseq
        %v2399 = vshrl.u32 %v2398, 7
        %v2400 = vsub.s32 0, %v2399
        %v2401 = vrot.slane %v2311, %v2400
        %v2402 = vlaneseq
        %v2403 = vshrl.u32 %v2402, 7
        %v2404 = vsub.s32 1, %v2403
        %v2405 = vrot.slane %v2311, %v2404
        %v2409 = vlaneseq
        %v2410 = vshrl.u32 %v2409, 7
        %v2411 = vsub.s32 0, %v2410
        %v2412 = vrot.slane %v2326, %v2411
        %v2413 = vlaneseq
        %v2414 = vshrl.u32 %v2413, 7
        %v2415 = vsub.s32 1, %v2414
        %v2416 = vrot.slane %v2326, %v2415
        %v2420 = vlaneseq
        %v2421 = vshrl.u32 %v2420, 7
        %v2422 = vsub.s32 0, %v2421
        %v2423 = vrot.slane %v2341, %v2422
        %v2424 = vlaneseq
        %v2425 = vshrl.u32 %v2424, 7
        %v2426 = vsub.s32 1, %v2425
        %v2427 = vrot.slane %v2341, %v2426
        %v2430 = vsel %vm970, %v2346, %v2357
        %v2431 = vsel %vm970, %v2350, %v2361
        %v2432 = vsel %vm972, %v2430, %v2368
        %v2433 = vsel %vm972, %v2431, %v2372
        %v2434 = vsel %vm974, %v2432, %v2379
        %v2435 = vsel %vm974, %v2433, %v2383
        %v2436 = vsel %vm976, %v2434, %v2390
        %v2437 = vsel %vm976, %v2435, %v2394
        %v2438 = vsel %vm978, %v2436, %v2401
        %v2439 = vsel %vm978, %v2437, %v2405
        %v2440 = vsel %vm980, %v2438, %v2412
        %v2441 = vsel %vm980, %v2439, %v2416
        %v2442 = vsel %vm982, %v2440, %v2423
        %v2443 = vsel %vm982, %v2441, %v2427
        %v2444 = vpack.c.bf16 %v1440, %v1440
        %v2445 = vpack.c.bf16 %v2221, %v2221
        %v2446 = vpack.c.bf16 %v2442, %v2442
        %v2447 = vpack.c.bf16 %v2443, %v2443
        %2448 = vmatprep.subr.bf16.mxu0 %v2447
        %2449 = vmatpush1.bf16.xpose.msra.mxu0 %v2446
        %2450 = vmatprep.subr.bf16.mxu0 0
        %2451 = vmatpush1.bf16.xpose.msra.mxu0 0
        %2452 = vmatprep.subr.bf16.mxu0 0
        %2453 = vmatpush1.bf16.xpose.msra.mxu0 0
        %2454 = vmatprep.subr.bf16.mxu0 0
        %2455 = vmatpush1.bf16.xpose.msra.mxu0 0
        %2456 = vmatprep.subr.bf16.mxu0 0
        %2457 = vmatpush1.bf16.xpose.msra.mxu0 0
        %2458 = vmatprep.subr.bf16.mxu0 0
        %2459 = vmatpush1.bf16.xpose.msra.mxu0 0
        %2460 = vmatprep.subr.bf16.mxu0 0
        %2461 = vmatpush1.bf16.xpose.msra.mxu0 0
        %2462 = vmatprep.subr.bf16.mxu0 0
        %2463 = vmatpush1.bf16.xpose.msra.mxu0 0
        %2464 = vmatprep.subr.bf16.mxu0 0
        %2465 = vmatpush1.bf16.xpose.msra.mxu0 0
        %2466 = vmatprep.subr.bf16.mxu0 0
        %2467 = vmatpush1.bf16.xpose.msra.mxu0 0
        %2468 = vmatprep.subr.bf16.mxu0 0
        %2469 = vmatpush1.bf16.xpose.msra.mxu0 0
        %2470 = vmatprep.subr.bf16.mxu0 0
        %2471 = vmatpush1.bf16.xpose.msra.mxu0 0
        %2472 = vmatprep.subr.bf16.mxu0 0
        %2473 = vmatpush1.bf16.xpose.msra.mxu0 0
        %2474 = vmatprep.subr.bf16.mxu0 0
        %2475 = vmatpush1.bf16.xpose.msra.mxu0 0
        %2476 = vmatprep.subr.bf16.mxu0 0
        %2477 = vmatpush1.bf16.xpose.msra.mxu0 0
        %2478 = vmatprep.subr.bf16.mxu0 0
        %2479 = vmatpush1.bf16.xpose.msra.mxu0 0
        %2480 = vmatprep.mubr.bf16.mxu0 %v2445
        %2481 = vmatmul.mubr.bf16.gmra.mrb[0].mxu0 %v2444
        %v2482 = vpop.f32.mrb[0].mxu0
        %v2483 = vadd.f32 0.0, %v2482
        %v2484 = vpop.f32.mrb[0].mxu0
        %v2485 = vpop.f32.mrb[0].mxu0
        %v2486 = vpop.f32.mrb[0].mxu0
        %2487 = vdwg.mxu0
        %v2488 = vlaneseq
        %v2489 = vand.u32 %v2488, 127
        %v2490 = vlaneseq
        %v2491 = vshrl.u32 %v2490, 7
        %v2492 = vstv %s558
        %vm2493 = vcmp.lt.s32.totalorder %v2489, %v2492
        %v2494 = vsel %vm2493, %v2483, -1e+30
        %vm2495 = vcmask 64512
        %v2496 = vsel %vm2495, %v2494, -inf
        %2497 = vmax.xlane.f32.xlu0 %v2496
        %v2498 = vpop.xlane.xlu0 %2497
        %v2499 = vsub.f32 %v2494, %v2498
        %v2500 = vmul.f32 %v2499, 1.442695
        %v2501 = vpow.pop %v2500
        %v2502 = vsel %vm2495, %v2501, 0.0
        %2503 = vadd.xlane.f32.xlu0 %v2502
        %v2504 = vpop.xlane.xlu0 %2503
        %v2505 = vlog2.pop %v2504
        %v2506 = vmul.f32 %v2505, 0.6931472
        %v2507 = vsub.f32 %v2499, %v2506
        %2508 = vst.msk [vmem:[%s548] sm:$0xff] %vm2495, %v2507
        %v2509 = vstv %s556
        %vm2510 = vcmp.lt.s32.totalorder %v2491, %v2509
        %vm2511 = vmand %vm2510, %vm2493
        %v2512 = vsel %vm2511, %v2507, 0.0
        %v2513 = vpack.c.bf16 %v2512, %v2512
        %2514 = vxpose.xlu0.c.b16.start [1/8] %v2513, 128
        %2515 = vxpose.xlu0.c.b16.cont [2/8] 0, 128
        %2516 = vxpose.xlu0.c.b16.cont [3/8] 0, 128
        %2517 = vxpose.xlu0.c.b16.cont [4/8] 0, 128
        %2518 = vxpose.xlu0.c.b16.cont [5/8] 0, 128
        %2519 = vxpose.xlu0.c.b16.cont [6/8] 0, 128
        %2520 = vxpose.xlu0.c.b16.cont [7/8] 0, 128
        %2521 = vxpose.xlu0.c.b16.end [8/8] 0, 128
        %v2522 = vpop.trf.xlu0
        %v2523 = vpop.trf.xlu0
        %v2524 = vpop.trf.xlu0
        %v2525 = vpop.trf.xlu0
        %v2526 = vpop.trf.xlu0
        %v2527 = vpop.trf.xlu0
        %v2528 = vpop.trf.xlu0
        %v2529 = vpop.trf.xlu0
        %v2531 = vsel %vm2495, %v2522, 0
        %v2534 = vsel %vm976, %v2444, 0
        %v2537 = vsel %vm976, %v2445, 0
        %2539 = vmatprep.subr.bf16.mxu0 %v2537
        %2540 = vmatpush1.bf16.msra.mxu0 %v2534
        %2541 = vmatprep.subr.bf16.mxu0 0
        %2542 = vmatpush1.bf16.msra.mxu0 0
        %2543 = vmatprep.subr.bf16.mxu0 0
        %2544 = vmatpush1.bf16.msra.mxu0 0
        %2545 = vmatprep.subr.bf16.mxu0 0
        %2546 = vmatpush1.bf16.msra.mxu0 0
        %2547 = vmatprep.subr.bf16.mxu0 0
        %2548 = vmatpush1.bf16.msra.mxu0 0
        %2549 = vmatprep.subr.bf16.mxu0 0
        %2550 = vmatpush1.bf16.msra.mxu0 0
        %2551 = vmatprep.subr.bf16.mxu0 0
        %2552 = vmatpush1.bf16.msra.mxu0 0
        %2553 = vmatprep.subr.bf16.mxu0 0
        %2554 = vmatpush1.bf16.msra.mxu0 0
        %2555 = vmatprep.subr.bf16.mxu0 0
        %2556 = vmatpush1.bf16.msra.mxu0 0
        %2557 = vmatprep.subr.bf16.mxu0 0
        %2558 = vmatpush1.bf16.msra.mxu0 0
        %2559 = vmatprep.subr.bf16.mxu0 0
        %2560 = vmatpush1.bf16.msra.mxu0 0
        %2561 = vmatprep.subr.bf16.mxu0 0
        %2562 = vmatpush1.bf16.msra.mxu0 0
        %2563 = vmatprep.subr.bf16.mxu0 0
        %2564 = vmatpush1.bf16.msra.mxu0 0
        %2565 = vmatprep.subr.bf16.mxu0 0
        %2566 = vmatpush1.bf16.msra.mxu0 0
        %2567 = vmatprep.subr.bf16.mxu0 0
        %2568 = vmatpush1.bf16.msra.mxu0 0
        %2569 = vmatprep.subr.bf16.mxu0 0
        %2570 = vmatpush1.bf16.msra.mxu0 0
        %2571 = vmatprep.mubr.bf16.mxu0 0
        %2572 = vmatmul.mubr.bf16.gmra.mrb[0].mxu0 %v2531
        %v2573 = vpop.f32.mrb[0].mxu0
        %v2574 = vadd.f32 %v2442, %v2573
        %v2575 = vpop.f32.mrb[0].mxu0
        %v2576 = vadd.f32 %v2443, %v2575
        %v2577 = vpop.f32.mrb[0].mxu0
        %v2578 = vpop.f32.mrb[0].mxu0
        %2579 = vdwg.mxu0
        %2580 = vst [vmem:[%s553] sm:$0xff] %v2574
        %2581 = vst [vmem:[%s553 + $0x8] sm:$0xff] %v2576
        %p2582 = scmp.lt.s32.totalorder %s61, 2
        %s2583 = scalar_select %p2582, %s61, 2
        %s2584 = smul.addr %s2583, 8
        %s2585 = scalar_lea.vmem %s17, %s2584
        %p2586 = scmp.lt.s32.totalorder %s61, 2
        %s2587 = scalar_select %p2586, %s61, 2
        %s2588 = smul.addr %s2587, 2
        %s2589 = smul.addr %s2588, 8
        %s2590 = scalar_lea.vmem %s18, %s2589
        // Predicated region
        $region97: #{health_status_update_batch.1} parent=63 // pred_check
          %p2591 = pneg %p310
        $region98: #{health_status_update_batch.1} parent=63 // pred_check_branch
          %2593 = sbr.rel (%p2591) target = $region100
        $region99: #{health_status_update_batch.1} parent=63 // pred_region
          _
        $region100: #{health_status_update_batch.1} parent=63 // pred_fallthru
          _
        // Predicated region
        $region101: #{health_status_update_batch.1} parent=63 // pred_check
          %p2594 = pneg %p336
        $region102: #{health_status_update_batch.1} parent=63 // pred_check_branch
          %2596 = sbr.rel (%p2594) target = $region104
        $region103: #{health_status_update_batch.1} parent=63 // pred_region
          _
        $region104: #{health_status_update_batch.1} parent=63 // pred_fallthru
          _
      $region64: #{health_status_update_batch.1} parent=5 // pred_fallthru
        _
      %p2597 = scmp.le.s32.totalorder 2, %s56
      // Predicated region
      $region105: #{health_status_update_batch.1} parent=5 // pred_check
        %p2598 = pneg %p2597
      $region106: #{health_status_update_batch.1} parent=5 // pred_check_branch
        %2600 = sbr.rel (%p2598) target = $region108
      $region107: #{health_status_update_batch.1} parent=5 // pred_region
        %s2601 = ssub.s32 %s56, 2
        // Predicated region
        $region109: #{health_status_update_batch.1} parent=107 // pred_check
          %p2602 = pneg %p316
        $region110: #{health_status_update_batch.1} parent=107 // pred_check_branch
          %2604 = sbr.rel (%p2602) target = $region112
        $region111: #{health_status_update_batch.1} parent=107 // pred_region
          %p2605 = scmp.lt.s32.totalorder %s62, 2
          %s2606 = scalar_select %p2605, %s62, 2
          %s2607 = smul.addr %s2606, 8
          %s2608 = scalar_lea.vmem %s17, %s2607
        $region112: #{health_status_update_batch.1} parent=107 // pred_fallthru
          _
        // Predicated region
        $region113: #{health_status_update_batch.1} parent=107 // pred_check
          %p2609 = pneg %p342
        $region114: #{health_status_update_batch.1} parent=107 // pred_check_branch
          %2611 = sbr.rel (%p2609) target = $region116
        $region115: #{health_status_update_batch.1} parent=107 // pred_region
          %p2612 = scmp.lt.s32.totalorder %s62, 2
          %s2613 = scalar_select %p2612, %s62, 2
          %s2614 = smul.addr %s2613, 2
          %s2615 = smul.addr %s2614, 8
          %s2616 = scalar_lea.vmem %s18, %s2615
        $region116: #{health_status_update_batch.1} parent=107 // pred_fallthru
          _
      $region108: #{health_status_update_batch.1} parent=5 // pred_fallthru
        _
    $region6: #{health_status_update_batch.1} parent=1 // loop_footer
      %s60 = sadd.s32 1, %s56
    $region7: #{health_status_update_batch.1} parent=1 // loop_footer_branch
      %55 = sbr.rel target = $region3
    $region8: #{health_status_update_batch.1} parent=1 // loop_exit
      _
    %2617 = vsyncpa [#allocation10], 1
    %s2618 = scalar_lea.sflag [#allocation10], 1
    %2619 = vsyncpa %s2618, 1
    %2620 = vsyncpa [#allocation12], 1
    %2621 = vsyncpa [#allocation15], 1
    %2622 = vsyncpa [#allocation18], 1
    %2623 = vsyncpa [#allocation21], 1

</llo_original>
